<compile_context>
chip_gen: v5e
topology: v5e:2x2
jax: 0.10.0
libtpu: 0.0.40
codegen_flags: <defaults>
</compile_context>

<pallas_src>
import jax
import jax.numpy as jnp
from jax.experimental import pallas as pl
from jax.experimental.pallas import tpu as pltpu


# ---------------------------------------------------------------------------
# Pallas kernels
# ---------------------------------------------------------------------------
def _conv_relu_pool_kernel(p_ref, w_ref, b_ref, o_ref):
    """Fused conv GEMM + bias + ReLU + 2x2/2 max-pool for B_tile images.

    p_ref: (2, Mblk, K)    bf16  im2col patches; dim 0 = conv-row parity (dy).
                                 Each row packs the 3x6xCin window feeding the
                                 four conv columns dx = 0..3 (two pool windows)
                                 of B_tile images (batch folded into M).
    w_ref: (K, 4*Cout)     bf16  conv weights block-replicated for dx = 0..3.
    b_ref: (1, 4*Cout)     f32   bias, replicated for dx = 0..3.
    o_ref: (Mblk, 2*Cout)  bf16  pooled output; lanes = (pool-col parity, c).
    """
    cout = o_ref.shape[-1] // 2
    w = w_ref[...]
    bias = b_ref[...]
    # Two MXU GEMMs: conv output rows 2*ph (dy=0) and 2*ph+1 (dy=1).
    y0 = jnp.dot(p_ref[0], w, preferred_element_type=jnp.float32) + bias
    y1 = jnp.dot(p_ref[1], w, preferred_element_type=jnp.float32) + bias
    # ReLU commutes with max -> single ReLU fused with the vertical pool.
    v = jnp.maximum(jnp.maximum(y0, y1), 0.0)                   # (Mblk, 4*Cout)
    # Horizontal pool: dx=(0,1) -> pooled column 2*pq, dx=(2,3) -> 2*pq+1.
    o0 = jnp.maximum(v[:, 0 * cout:1 * cout], v[:, 1 * cout:2 * cout])
    o1 = jnp.maximum(v[:, 2 * cout:3 * cout], v[:, 3 * cout:4 * cout])
    # Single lane-dense store (128 / 64 lanes).
    o_ref[...] = jnp.concatenate([o0, o1], axis=-1).astype(o_ref.dtype)


def _conv3_mlp_kernel(p_ref, w3_ref, b3_ref, w4_ref, b4_ref, w5_ref, b5_ref,
                      w6_ref, b6_ref, o_ref):
    """Fused hidden_layer3 (conv+ReLU+pool) + hidden_layer4/5 + output_layer.

    p_ref : (Bt, 2, 25, 384) bf16  stage-3 im2col patches (dx = 0/1 in lanes).
    w3_ref: (384, 2*16) bf16, b3_ref: (1, 2*16) f32
    w4_ref: (25, 16, 64) bf16  Linear(400,64) weights regrouped so row block p
                               corresponds to pooled position (h,w)=divmod(p,5)
                               (NCHW flatten permutation folded in).
    o_ref : (Bt, 1, 10) f32    logits.
    """
    cout = b3_ref.shape[-1] // 2        # 16
    npos = w4_ref.shape[0]              # 25
    w3 = w3_ref[...]
    b3 = b3_ref[...]
    for b in range(p_ref.shape[0]):
        y0 = jnp.dot(p_ref[b, 0], w3, preferred_element_type=jnp.float32) + b3
        y1 = jnp.dot(p_ref[b, 1], w3, preferred_element_type=jnp.float32) + b3
        v = jnp.maximum(jnp.maximum(y0, y1), 0.0)               # (25, 2*16)
        v = jnp.maximum(v[:, :cout], v[:, cout:]).astype(jnp.bfloat16)  # (25,16)
        # Linear(16*5*5, 64): flatten folded into 25 accumulating small dots.
        h = b4_ref[...]
        for pos in range(npos):
            h = h + jnp.dot(v[pos:pos + 1, :], w4_ref[pos],
                            preferred_element_type=jnp.float32)
        h = jnp.maximum(h, 0.0).astype(jnp.bfloat16)
        h = jnp.dot(h, w5_ref[...], preferred_element_type=jnp.float32)
        h = jnp.maximum(h + b5_ref[...], 0.0).astype(jnp.bfloat16)
        h = jnp.dot(h, w6_ref[...], preferred_element_type=jnp.float32)
        o_ref[b] = (h + b6_ref[...]).astype(o_ref.dtype)


# ---------------------------------------------------------------------------
# Host-side glue (im2col packing) + wrappers
# ---------------------------------------------------------------------------
def _im2col(x, hp, wq, dx_pack):
    """Strided im2col packing `dx_pack` adjacent conv columns per patch row.

    x: (N, H, W, C).  Patch row (dy, b, ph, pq) holds the window
      x[b, 2*ph+dy : 2*ph+dy+3, dx_pack*pq : dx_pack*pq+dx_pack+2, :]
    flattened in (i, j, c) order.  Returns (2, N, hp, wq, 3*(dx_pack+2)*C).
    """
    kw = dx_pack + 2
    outs = []
    for dy in (0, 1):
        feats = [
            x[:, i + dy: i + dy + 2 * (hp - 1) + 1: 2,
                 j: j + dx_pack * (wq - 1) + 1: dx_pack, :]
            for i in range(3) for j in range(kw)
        ]
        outs.append(jnp.concatenate(feats, axis=-1))
    return jnp.stack(outs, axis=0)


def conv_relu_pool(x, wc, bc, b_tile):
    """hidden_layer1/2: 3x3 VALID conv + ReLU + 2x2/2 max-pool, one Pallas call.

    x:  (N, H, W, Cin)         NHWC activations.
    wc: (18*Cin, 4*Cout) bf16  packed conv weights (see _pack_conv_weight).
    bc: (1, 4*Cout) f32        packed bias.
    Returns (N, Hp, Wp, Cout) bf16 pooled activations.
    """
    n, h, w, cin = x.shape
    hp, wp = (h - 2) // 2, (w - 2) // 2
    assert wp % 2 == 0, "4-column packing needs an even pooled width"
    wq = wp // 2                       # two pool windows per patch row
    m4 = hp * wq
    m4p = -(-m4 // 8) * 8              # pad per-image rows to sublane multiple
    k = 18 * cin
    cout = wc.shape[1] // 4
    mblk = b_tile * m4p

    p = _im2col(x, hp, wq, dx_pack=4).reshape(2, n, m4, k)
    if m4p != m4:
        p = jnp.pad(p, ((0, 0), (0, 0), (0, m4p - m4), (0, 0)))
    p = p.reshape(2, n * m4p, k).astype(jnp.bfloat16)

    flops = 2 * 2 * n * m4p * k * 4 * cout
    bytes_accessed = (p.size + wc.size + n * m4p * 2 * cout) * 2 + bc.size * 4

    out = pl.pallas_call(
        _conv_relu_pool_kernel,
        out_shape=jax.ShapeDtypeStruct((n * m4p, 2 * cout), jnp.bfloat16),
        grid_spec=pltpu.PrefetchScalarGridSpec(
            num_scalar_prefetch=0,
            grid=(n // b_tile,),
            in_specs=[
                pl.BlockSpec((2, mblk, k), lambda g: (0, g, 0)),
                pl.BlockSpec((k, 4 * cout), lambda g: (0, 0)),
                pl.BlockSpec((1, 4 * cout), lambda g: (0, 0)),
            ],
            out_specs=pl.BlockSpec((mblk, 2 * cout), lambda g: (g, 0)),
        ),
        compiler_params=pltpu.CompilerParams(
            dimension_semantics=("parallel",)),
        cost_estimate=pl.CostEstimate(
            flops=flops, transcendentals=0, bytes_accessed=bytes_accessed),
    )(p, wc, bc)

    out = out.reshape(n, m4p, 2 * cout)[:, :m4, :]
    return out.reshape(n, hp, wq, 2, cout).reshape(n, hp, wp, cout)


def conv3_mlp_head(x, pp, b_tile):
    """hidden_layer3 + flatten + hidden_layer4/5 + output_layer, one call."""
    n, h, w, cin = x.shape
    hp, wp = (h - 2) // 2, (w - 2) // 2              # 5, 5
    m4, k = hp * wp, 12 * cin                        # 25, 384
    p = _im2col(x, hp, wp, dx_pack=2).reshape(2, n, m4, k)
    p = jnp.transpose(p, (1, 0, 2, 3)).astype(jnp.bfloat16)   # (N, 2, 25, 384)

    out = pl.pallas_call(
        _conv3_mlp_kernel,
        out_shape=jax.ShapeDtypeStruct((n, 1, 10), jnp.float32),
        grid_spec=pltpu.PrefetchScalarGridSpec(
            num_scalar_prefetch=0,
            grid=(n // b_tile,),
            in_specs=[
                pl.BlockSpec((b_tile, 2, m4, k), lambda g: (g, 0, 0, 0)),
                pl.BlockSpec(pp["cw3"].shape, lambda g: (0, 0)),
                pl.BlockSpec(pp["cb3"].shape, lambda g: (0, 0)),
                pl.BlockSpec(pp["w4r"].shape, lambda g: (0, 0, 0)),
                pl.BlockSpec(pp["b4"].shape, lambda g: (0, 0)),
                pl.BlockSpec(pp["w5"].shape, lambda g: (0, 0)),
                pl.BlockSpec(pp["b5"].shape, lambda g: (0, 0)),
                pl.BlockSpec(pp["w6"].shape, lambda g: (0, 0)),
                pl.BlockSpec(pp["b6"].shape, lambda g: (0, 0)),
            ],
            out_specs=pl.BlockSpec((b_tile, 1, 10), lambda g: (g, 0, 0)),
        ),
        compiler_params=pltpu.CompilerParams(
            dimension_semantics=("parallel",)),
    )(p, pp["cw3"], pp["cb3"], pp["w4r"], pp["b4"], pp["w5"], pp["b5"],
      pp["w6"], pp["b6"])
    return out.reshape(n, 10)


# ---------------------------------------------------------------------------
# Parameters (PyTorch semantics) + one-time preprocessing for the kernels
# ---------------------------------------------------------------------------
def init_params(key, num_features):
    """Conv weights HWIO, linear weights (in, out); w4 rows in NCHW order."""
    ks = jax.random.split(key, 12)
    s = 0.05
    return {
        "w1": jax.random.normal(ks[0], (3, 3, num_features, 64), jnp.float32) * s,
        "b1": jax.random.normal(ks[1], (64,), jnp.float32) * s,
        "w2": jax.random.normal(ks[2], (3, 3, 64, 32), jnp.float32) * s,
        "b2": jax.random.normal(ks[3], (32,), jnp.float32) * s,
        "w3": jax.random.normal(ks[4], (3, 3, 32, 16), jnp.float32) * s,
        "b3": jax.random.normal(ks[5], (16,), jnp.float32) * s,
        "w4": jax.random.normal(ks[6], (16 * 5 * 5, 64), jnp.float32) * s,
        "b4": jax.random.normal(ks[7], (64,), jnp.float32) * s,
        "w5": jax.random.normal(ks[8], (64, 32), jnp.float32) * s,
        "b5": jax.random.normal(ks[9], (32,), jnp.float32) * s,
        "w6": jax.random.normal(ks[10], (32, 10), jnp.float32) * s,
        "b6": jax.random.normal(ks[11], (10,), jnp.float32) * s,
    }


def _pack_conv_weight(w_hwio, b, dx_pack):
    """(3,3,Cin,Cout) HWIO -> (3*(dx_pack+2)*Cin, dx_pack*Cout) bf16: the
    dx_pack adjacent conv output columns of one patch row are packed into the
    GEMM N dimension (column block d reads window columns d..d+2)."""
    kh, _, cin, cout = w_hwio.shape
    kwp = dx_pack + 2
    wpk = jnp.zeros((kh, kwp, cin, dx_pack * cout), w_hwio.dtype)
    for d in range(dx_pack):
        wpk = wpk.at[:, d:d + 3, :, d * cout:(d + 1) * cout].set(w_hwio)
    wc = wpk.reshape(kh * kwp * cin, dx_pack * cout).astype(jnp.bfloat16)
    bc = jnp.tile(b, dx_pack).reshape(1, dx_pack * cout).astype(jnp.float32)
    return wc, bc


def prepare_params(p):
    """One-time weight preprocessing (zero cost at inference time)."""
    cw1, cb1 = _pack_conv_weight(p["w1"], p["b1"], dx_pack=4)
    cw2, cb2 = _pack_conv_weight(p["w2"], p["b2"], dx_pack=4)
    cw3, cb3 = _pack_conv_weight(p["w3"], p["b3"], dx_pack=2)
    # Fold the NCHW flatten permutation into w4 and group rows by pooled
    # position p = h*5 + w:  rows (c*25 + h*5 + w) -> blocks (p, c).
    w4r = (p["w4"].reshape(16, 5, 5, 64).transpose(1, 2, 0, 3)
           .reshape(25, 16, 64).astype(jnp.bfloat16))
    return {
        "cw1": cw1, "cb1": cb1, "cw2": cw2, "cb2": cb2,
        "cw3": cw3, "cb3": cb3,
        "w4r": w4r,
        "b4": p["b4"].reshape(1, -1).astype(jnp.float32),
        "w5": p["w5"].astype(jnp.bfloat16),
        "b5": p["b5"].reshape(1, -1).astype(jnp.float32),
        "w6": p["w6"].astype(jnp.bfloat16),
        "b6": p["b6"].reshape(1, -1).astype(jnp.float32),
    }


# ---------------------------------------------------------------------------
# CNN forward
# ---------------------------------------------------------------------------
def _pick_btile(n):
    """Images per grid step: amortize per-step overhead, keep >= 2 grid steps
    (both v7x TensorCores busy), cap at 8 for v5e's 16 MiB scoped VMEM."""
    for bt in (8, 4, 2):
        if n % bt == 0 and n // bt >= 2:
            return bt
    return 1


@jax.jit
def cnn_forward(x_nchw, pp):
    n = x_nchw.shape[0]
    bt = _pick_btile(n)
    x = jnp.transpose(x_nchw, (0, 2, 3, 1))                  # NCHW -> NHWC
    # hidden_layer1/2: conv+ReLU+maxpool fused; dropout = identity (eval).
    x = conv_relu_pool(x, pp["cw1"], pp["cb1"], bt)
    x = conv_relu_pool(x, pp["cw2"], pp["cb2"], bt)
    # hidden_layer3 + flatten + hidden_layer4/5 + output_layer, single call.
    return conv3_mlp_head(x, pp, bt)


# Pure-JAX f32 reference (PyTorch semantics, raw params) for a sanity check.
def reference_forward(x_nchw, p):
    x = jnp.transpose(x_nchw, (0, 2, 3, 1))

    def conv(x, w, b):
        y = jax.lax.conv_general_dilated(
            x, w, (1, 1), "VALID",
            dimension_numbers=("NHWC", "HWIO", "NHWC"))
        return jax.nn.relu(y + b)

    def pool(x):
        return jax.lax.reduce_window(
            x, -jnp.inf, jax.lax.max, (1, 2, 2, 1), (1, 2, 2, 1), "VALID")

    x = pool(conv(x, p["w1"], p["b1"]))
    x = pool(conv(x, p["w2"], p["b2"]))
    x = pool(conv(x, p["w3"], p["b3"]))
    n = x.shape[0]
    x = jnp.transpose(x, (0, 3, 1, 2)).reshape(n, -1)        # NCHW flatten
    x = jax.nn.relu(x @ p["w4"] + p["b4"])
    x = jax.nn.relu(x @ p["w5"] + p["b5"])
    return x @ p["w6"] + p["b6"]


if __name__ == "__main__":
    # Input spatial size 54x54 so that after 3x(conv3x3 + pool2) the feature
    # map is 16 x 5 x 5, matching nn.Linear(16*5*5, 64) in the module.
    batch, num_features, hw = 2, 3, 54
    key = jax.random.PRNGKey(0)
    k_x, k_p = jax.random.split(key)
    x = jax.random.normal(k_x, (batch, num_features, hw, hw), jnp.float32)
    raw_params = init_params(k_p, num_features)
    prep_params = prepare_params(raw_params)

    out = jax.block_until_ready(cnn_forward(x, prep_params))
    assert out.shape == (batch, 10), out.shape

    ref = jax.block_until_ready(reference_forward(x, raw_params))
    max_err = float(jnp.max(jnp.abs(out - ref)))
    assert jnp.allclose(out, ref, atol=2e-2, rtol=2e-2), max_err

    print("KERNEL_OK")
</pallas_src>

<mosaic_0001>
module attributes {stable_mosaic.version = 11 : i64} {
  func.func @_conv_relu_pool_kernel(%arg0: i32, %arg1: memref<2x344x54xbf16, #tpu.memory_space<vmem>>, %arg2: memref<54x256xbf16, #tpu.memory_space<vmem>>, %arg3: memref<1x256xf32, #tpu.memory_space<vmem>>, %arg4: memref<344x128xbf16, #tpu.memory_space<vmem>>) attributes {dimension_semantics = [#tpu.dimension_semantics<parallel>], iteration_bounds = array<i64: 2>, scalar_prefetch = 0 : i64, scratch_operands = 0 : i64, tpu.core_type = #tpu.core_type<tc>, window_params = [{transform_indices = @transform_0, window_bounds = array<i64: 2, 344, 54>}, {pipeline_mode = #tpu.pipeline_mode<synchronous>, transform_indices = @transform_1, window_bounds = array<i64: 54, 256>}, {pipeline_mode = #tpu.pipeline_mode<synchronous>, transform_indices = @transform_2, window_bounds = array<i64: 1, 256>}, {transform_indices = @transform_3, window_bounds = array<i64: 344, 128>}]} {
    %c0 = arith.constant 0 : index
    %c0_0 = arith.constant 0 : index
    %0 = vector.load %arg2[%c0, %c0_0] : memref<54x256xbf16, #tpu.memory_space<vmem>>, vector<54x256xbf16>
    %c0_1 = arith.constant 0 : index
    %c0_2 = arith.constant 0 : index
    %1 = vector.load %arg3[%c0_1, %c0_2] : memref<1x256xf32, #tpu.memory_space<vmem>>, vector<1x256xf32>
    %c0_3 = arith.constant 0 : index
    %c0_4 = arith.constant 0 : index
    %c0_5 = arith.constant 0 : index
    %2 = vector.load %arg1[%c0_3, %c0_4, %c0_5] : memref<2x344x54xbf16, #tpu.memory_space<vmem>>, vector<1x344x54xbf16>
    %3 = vector.shape_cast %2 : vector<1x344x54xbf16> to vector<344x54xbf16>
    %cst = arith.constant dense<0.000000e+00> : vector<344x256xf32>
    %4 = tpu.matmul %3, %0, %cst {dimension_numbers = #tpu.dot_dimension_numbers<[1], [0], [0], [1], [0, 0, 1, 1], [], []>} : vector<344x54xbf16>, vector<54x256xbf16>, vector<344x256xf32> -> vector<344x256xf32>
    %5 = vector.broadcast %1 : vector<1x256xf32> to vector<344x256xf32>
    %6 = arith.addf %4, %5 : vector<344x256xf32>
    %c1 = arith.constant 1 : index
    %c0_6 = arith.constant 0 : index
    %c0_7 = arith.constant 0 : index
    %7 = vector.load %arg1[%c1, %c0_6, %c0_7] : memref<2x344x54xbf16, #tpu.memory_space<vmem>>, vector<1x344x54xbf16>
    %8 = vector.shape_cast %7 : vector<1x344x54xbf16> to vector<344x54xbf16>
    %cst_8 = arith.constant dense<0.000000e+00> : vector<344x256xf32>
    %9 = tpu.matmul %8, %0, %cst_8 {dimension_numbers = #tpu.dot_dimension_numbers<[1], [0], [0], [1], [0, 0, 1, 1], [], []>} : vector<344x54xbf16>, vector<54x256xbf16>, vector<344x256xf32> -> vector<344x256xf32>
    %10 = vector.broadcast %1 : vector<1x256xf32> to vector<344x256xf32>
    %11 = arith.addf %9, %10 : vector<344x256xf32>
    %12 = arith.maximumf %6, %11 : vector<344x256xf32>
    %cst_9 = arith.constant 0.000000e+00 : f32
    %13 = vector.broadcast %cst_9 : f32 to vector<344x256xf32>
    %14 = arith.maximumf %12, %13 : vector<344x256xf32>
    %15 = vector.extract_strided_slice %14 {offsets = [0, 0], sizes = [344, 64], strides = [1, 1]} : vector<344x256xf32> to vector<344x64xf32>
    %16 = vector.extract_strided_slice %14 {offsets = [0, 64], sizes = [344, 64], strides = [1, 1]} : vector<344x256xf32> to vector<344x64xf32>
    %17 = arith.maximumf %15, %16 : vector<344x64xf32>
    %18 = vector.extract_strided_slice %14 {offsets = [0, 128], sizes = [344, 64], strides = [1, 1]} : vector<344x256xf32> to vector<344x64xf32>
    %19 = vector.extract_strided_slice %14 {offsets = [0, 192], sizes = [344, 64], strides = [1, 1]} : vector<344x256xf32> to vector<344x64xf32>
    %20 = arith.maximumf %18, %19 : vector<344x64xf32>
    %21 = tpu.concatenate %17, %20 in 1 : vector<344x64xf32>, vector<344x64xf32> -> vector<344x128xf32>
    %22 = arith.truncf %21 : vector<344x128xf32> to vector<344x128xbf16>
    %c0_10 = arith.constant 0 : index
    %c0_11 = arith.constant 0 : index
    %23 = vector.load %arg4[%c0_10, %c0_11] : memref<344x128xbf16, #tpu.memory_space<vmem>>, vector<344x128xbf16>
    tpu.vector_store %arg4[%c0_10, %c0_11], %22 {strides = array<i32>} : memref<344x128xbf16, #tpu.memory_space<vmem>>, vector<344x128xbf16>,
    return
  }
  func.func @transform_0(%arg0: i32) -> (i32, i32, i32) {
    %c0_i32 = arith.constant 0 : i32
    %c0_i32_0 = arith.constant 0 : i32
    %c0_i32_1 = arith.constant 0 : i32
    return %c0_i32, %arg0, %c0_i32_0 : i32, i32, i32
  }
  func.func @transform_1(%arg0: i32) -> (i32, i32) {
    %c0_i32 = arith.constant 0 : i32
    %c0_i32_0 = arith.constant 0 : i32
    %c0_i32_1 = arith.constant 0 : i32
    return %c0_i32, %c0_i32_0 : i32, i32
  }
  func.func @transform_2(%arg0: i32) -> (i32, i32) {
    %c0_i32 = arith.constant 0 : i32
    %c0_i32_0 = arith.constant 0 : i32
    %c0_i32_1 = arith.constant 0 : i32
    return %c0_i32, %c0_i32_0 : i32, i32
  }
  func.func @transform_3(%arg0: i32) -> (i32, i32) {
    %c0_i32 = arith.constant 0 : i32
    %c0_i32_0 = arith.constant 0 : i32
    return %arg0, %c0_i32 : i32, i32
  }
}

module attributes {stable_mosaic.version = 11 : i64} {
  func.func @_conv_relu_pool_kernel(%arg0: i32, %arg1: memref<2x72x1152xbf16, #tpu.memory_space<vmem>>, %arg2: memref<1152x128xbf16, #tpu.memory_space<vmem>>, %arg3: memref<1x128xf32, #tpu.memory_space<vmem>>, %arg4: memref<72x64xbf16, #tpu.memory_space<vmem>>) attributes {dimension_semantics = [#tpu.dimension_semantics<parallel>], iteration_bounds = array<i64: 2>, scalar_prefetch = 0 : i64, scratch_operands = 0 : i64, tpu.core_type = #tpu.core_type<tc>, window_params = [{transform_indices = @transform_0, window_bounds = array<i64: 2, 72, 1152>}, {pipeline_mode = #tpu.pipeline_mode<synchronous>, transform_indices = @transform_1, window_bounds = array<i64: 1152, 128>}, {pipeline_mode = #tpu.pipeline_mode<synchronous>, transform_indices = @transform_2, window_bounds = array<i64: 1, 128>}, {transform_indices = @transform_3, window_bounds = array<i64: 72, 64>}]} {
    %c0 = arith.constant 0 : index
    %c0_0 = arith.constant 0 : index
    %0 = vector.load %arg2[%c0, %c0_0] : memref<1152x128xbf16, #tpu.memory_space<vmem>>, vector<1152x128xbf16>
    %c0_1 = arith.constant 0 : index
    %c0_2 = arith.constant 0 : index
    %1 = vector.load %arg3[%c0_1, %c0_2] : memref<1x128xf32, #tpu.memory_space<vmem>>, vector<1x128xf32>
    %c0_3 = arith.constant 0 : index
    %c0_4 = arith.constant 0 : index
    %c0_5 = arith.constant 0 : index
    %2 = vector.load %arg1[%c0_3, %c0_4, %c0_5] : memref<2x72x1152xbf16, #tpu.memory_space<vmem>>, vector<1x72x1152xbf16>
    %3 = vector.shape_cast %2 : vector<1x72x1152xbf16> to vector<72x1152xbf16>
    %cst = arith.constant dense<0.000000e+00> : vector<72x128xf32>
    %4 = tpu.matmul %3, %0, %cst {dimension_numbers = #tpu.dot_dimension_numbers<[1], [0], [0], [1], [0, 0, 1, 1], [], []>} : vector<72x1152xbf16>, vector<1152x128xbf16>, vector<72x128xf32> -> vector<72x128xf32>
    %5 = vector.broadcast %1 : vector<1x128xf32> to vector<72x128xf32>
    %6 = arith.addf %4, %5 : vector<72x128xf32>
    %c1 = arith.constant 1 : index
    %c0_6 = arith.constant 0 : index
    %c0_7 = arith.constant 0 : index
    %7 = vector.load %arg1[%c1, %c0_6, %c0_7] : memref<2x72x1152xbf16, #tpu.memory_space<vmem>>, vector<1x72x1152xbf16>
    %8 = vector.shape_cast %7 : vector<1x72x1152xbf16> to vector<72x1152xbf16>
    %cst_8 = arith.constant dense<0.000000e+00> : vector<72x128xf32>
    %9 = tpu.matmul %8, %0, %cst_8 {dimension_numbers = #tpu.dot_dimension_numbers<[1], [0], [0], [1], [0, 0, 1, 1], [], []>} : vector<72x1152xbf16>, vector<1152x128xbf16>, vector<72x128xf32> -> vector<72x128xf32>
    %10 = vector.broadcast %1 : vector<1x128xf32> to vector<72x128xf32>
    %11 = arith.addf %9, %10 : vector<72x128xf32>
    %12 = arith.maximumf %6, %11 : vector<72x128xf32>
    %cst_9 = arith.constant 0.000000e+00 : f32
    %13 = vector.broadcast %cst_9 : f32 to vector<72x128xf32>
    %14 = arith.maximumf %12, %13 : vector<72x128xf32>
    %15 = vector.extract_strided_slice %14 {offsets = [0, 0], sizes = [72, 32], strides = [1, 1]} : vector<72x128xf32> to vector<72x32xf32>
    %16 = vector.extract_strided_slice %14 {offsets = [0, 32], sizes = [72, 32], strides = [1, 1]} : vector<72x128xf32> to vector<72x32xf32>
    %17 = arith.maximumf %15, %16 : vector<72x32xf32>
    %18 = vector.extract_strided_slice %14 {offsets = [0, 64], sizes = [72, 32], strides = [1, 1]} : vector<72x128xf32> to vector<72x32xf32>
    %19 = vector.extract_strided_slice %14 {offsets = [0, 96], sizes = [72, 32], strides = [1, 1]} : vector<72x128xf32> to vector<72x32xf32>
    %20 = arith.maximumf %18, %19 : vector<72x32xf32>
    %21 = tpu.concatenate %17, %20 in 1 : vector<72x32xf32>, vector<72x32xf32> -> vector<72x64xf32>
    %22 = arith.truncf %21 : vector<72x64xf32> to vector<72x64xbf16>
    %c0_10 = arith.constant 0 : index
    %c0_11 = arith.constant 0 : index
    %23 = vector.load %arg4[%c0_10, %c0_11] : memref<72x64xbf16, #tpu.memory_space<vmem>>, vector<72x64xbf16>
    tpu.vector_store %arg4[%c0_10, %c0_11], %22 {strides = array<i32>} : memref<72x64xbf16, #tpu.memory_space<vmem>>, vector<72x64xbf16>,
    return
  }
  func.func @transform_0(%arg0: i32) -> (i32, i32, i32) {
    %c0_i32 = arith.constant 0 : i32
    %c0_i32_0 = arith.constant 0 : i32
    %c0_i32_1 = arith.constant 0 : i32
    return %c0_i32, %arg0, %c0_i32_0 : i32, i32, i32
  }
  func.func @transform_1(%arg0: i32) -> (i32, i32) {
    %c0_i32 = arith.constant 0 : i32
    %c0_i32_0 = arith.constant 0 : i32
    %c0_i32_1 = arith.constant 0 : i32
    return %c0_i32, %c0_i32_0 : i32, i32
  }
  func.func @transform_2(%arg0: i32) -> (i32, i32) {
    %c0_i32 = arith.constant 0 : i32
    %c0_i32_0 = arith.constant 0 : i32
    %c0_i32_1 = arith.constant 0 : i32
    return %c0_i32, %c0_i32_0 : i32, i32
  }
  func.func @transform_3(%arg0: i32) -> (i32, i32) {
    %c0_i32 = arith.constant 0 : i32
    %c0_i32_0 = arith.constant 0 : i32
    return %arg0, %c0_i32 : i32, i32
  }
}

module attributes {stable_mosaic.version = 11 : i64} {
  func.func @_conv3_mlp_kernel(%arg0: i32, %arg1: memref<1x2x25x384xbf16, #tpu.memory_space<vmem>>, %arg2: memref<384x32xbf16, #tpu.memory_space<vmem>>, %arg3: memref<1x32xf32, #tpu.memory_space<vmem>>, %arg4: memref<25x16x64xbf16, #tpu.memory_space<vmem>>, %arg5: memref<1x64xf32, #tpu.memory_space<vmem>>, %arg6: memref<64x32xbf16, #tpu.memory_space<vmem>>, %arg7: memref<1x32xf32, #tpu.memory_space<vmem>>, %arg8: memref<32x10xbf16, #tpu.memory_space<vmem>>, %arg9: memref<1x10xf32, #tpu.memory_space<vmem>>, %arg10: memref<1x1x10xf32, #tpu.memory_space<vmem>>) attributes {dimension_semantics = [#tpu.dimension_semantics<parallel>], iteration_bounds = array<i64: 2>, scalar_prefetch = 0 : i64, scratch_operands = 0 : i64, tpu.core_type = #tpu.core_type<tc>, window_params = [{transform_indices = @transform_0, window_bounds = array<i64: 1, 2, 25, 384>}, {pipeline_mode = #tpu.pipeline_mode<synchronous>, transform_indices = @transform_1, window_bounds = array<i64: 384, 32>}, {pipeline_mode = #tpu.pipeline_mode<synchronous>, transform_indices = @transform_2, window_bounds = array<i64: 1, 32>}, {pipeline_mode = #tpu.pipeline_mode<synchronous>, transform_indices = @transform_3, window_bounds = array<i64: 25, 16, 64>}, {pipeline_mode = #tpu.pipeline_mode<synchronous>, transform_indices = @transform_4, window_bounds = array<i64: 1, 64>}, {pipeline_mode = #tpu.pipeline_mode<synchronous>, transform_indices = @transform_5, window_bounds = array<i64: 64, 32>}, {pipeline_mode = #tpu.pipeline_mode<synchronous>, transform_indices = @transform_6, window_bounds = array<i64: 1, 32>}, {pipeline_mode = #tpu.pipeline_mode<synchronous>, transform_indices = @transform_7, window_bounds = array<i64: 32, 10>}, {pipeline_mode = #tpu.pipeline_mode<synchronous>, transform_indices = @transform_8, window_bounds = array<i64: 1, 10>}, {transform_indices = @transform_9, window_bounds = array<i64: 1, 1, 10>}]} {
    %c0 = arith.constant 0 : index
    %c0_0 = arith.constant 0 : index
    %0 = vector.load %arg2[%c0, %c0_0] : memref<384x32xbf16, #tpu.memory_space<vmem>>, vector<384x32xbf16>
    %c0_1 = arith.constant 0 : index
    %c0_2 = arith.constant 0 : index
    %1 = vector.load %arg3[%c0_1, %c0_2] : memref<1x32xf32, #tpu.memory_space<vmem>>, vector<1x32xf32>
    %c0_3 = arith.constant 0 : index
    %c0_4 = arith.constant 0 : index
    %c0_5 = arith.constant 0 : index
    %c0_6 = arith.constant 0 : index
    %2 = vector.load %arg1[%c0_3, %c0_4, %c0_5, %c0_6] : memref<1x2x25x384xbf16, #tpu.memory_space<vmem>>, vector<1x1x25x384xbf16>
    %3 = vector.shape_cast %2 : vector<1x1x25x384xbf16> to vector<25x384xbf16>
    %cst = arith.constant dense<0.000000e+00> : vector<25x32xf32>
    %4 = tpu.matmul %3, %0, %cst {dimension_numbers = #tpu.dot_dimension_numbers<[1], [0], [0], [1], [0, 0, 1, 1], [], []>} : vector<25x384xbf16>, vector<384x32xbf16>, vector<25x32xf32> -> vector<25x32xf32>
    %5 = vector.broadcast %1 : vector<1x32xf32> to vector<25x32xf32>
    %6 = arith.addf %4, %5 : vector<25x32xf32>
    %c0_7 = arith.constant 0 : index
    %c1 = arith.constant 1 : index
    %c0_8 = arith.constant 0 : index
    %c0_9 = arith.constant 0 : index
    %7 = vector.load %arg1[%c0_7, %c1, %c0_8, %c0_9] : memref<1x2x25x384xbf16, #tpu.memory_space<vmem>>, vector<1x1x25x384xbf16>
    %8 = vector.shape_cast %7 : vector<1x1x25x384xbf16> to vector<25x384xbf16>
    %cst_10 = arith.constant dense<0.000000e+00> : vector<25x32xf32>
    %9 = tpu.matmul %8, %0, %cst_10 {dimension_numbers = #tpu.dot_dimension_numbers<[1], [0], [0], [1], [0, 0, 1, 1], [], []>} : vector<25x384xbf16>, vector<384x32xbf16>, vector<25x32xf32> -> vector<25x32xf32>
    %10 = vector.broadcast %1 : vector<1x32xf32> to vector<25x32xf32>
    %11 = arith.addf %9, %10 : vector<25x32xf32>
    %12 = arith.maximumf %6, %11 : vector<25x32xf32>
    %cst_11 = arith.constant 0.000000e+00 : f32
    %13 = vector.broadcast %cst_11 : f32 to vector<25x32xf32>
    %14 = arith.maximumf %12, %13 : vector<25x32xf32>
    %15 = vector.extract_strided_slice %14 {offsets = [0, 0], sizes = [25, 16], strides = [1, 1]} : vector<25x32xf32> to vector<25x16xf32>
    %16 = vector.extract_strided_slice %14 {offsets = [0, 16], sizes = [25, 16], strides = [1, 1]} : vector<25x32xf32> to vector<25x16xf32>
    %17 = arith.maximumf %15, %16 : vector<25x16xf32>
    %18 = arith.truncf %17 : vector<25x16xf32> to vector<25x16xbf16>
    %c0_12 = arith.constant 0 : index
    %c0_13 = arith.constant 0 : index
    %19 = vector.load %arg5[%c0_12, %c0_13] : memref<1x64xf32, #tpu.memory_space<vmem>>, vector<1x64xf32>
    %20 = vector.extract_strided_slice %18 {offsets = [0, 0], sizes = [1, 16], strides = [1, 1]} : vector<25x16xbf16> to vector<1x16xbf16>
    %c0_14 = arith.constant 0 : index
    %c0_15 = arith.constant 0 : index
    %c0_16 = arith.constant 0 : index
    %21 = vector.load %arg4[%c0_14, %c0_15, %c0_16] : memref<25x16x64xbf16, #tpu.memory_space<vmem>>, vector<1x16x64xbf16>
    %22 = vector.shape_cast %21 : vector<1x16x64xbf16> to vector<16x64xbf16>
    %cst_17 = arith.constant dense<0.000000e+00> : vector<1x64xf32>
    %23 = tpu.matmul %20, %22, %cst_17 {dimension_numbers = #tpu.dot_dimension_numbers<[1], [0], [0], [1], [0, 0, 1, 1], [], []>} : vector<1x16xbf16>, vector<16x64xbf16>, vector<1x64xf32> -> vector<1x64xf32>
    %24 = arith.addf %19, %23 : vector<1x64xf32>
    %25 = vector.extract_strided_slice %18 {offsets = [1, 0], sizes = [1, 16], strides = [1, 1]} : vector<25x16xbf16> to vector<1x16xbf16>
    %c1_18 = arith.constant 1 : index
    %c0_19 = arith.constant 0 : index
    %c0_20 = arith.constant 0 : index
    %26 = vector.load %arg4[%c1_18, %c0_19, %c0_20] : memref<25x16x64xbf16, #tpu.memory_space<vmem>>, vector<1x16x64xbf16>
    %27 = vector.shape_cast %26 : vector<1x16x64xbf16> to vector<16x64xbf16>
    %cst_21 = arith.constant dense<0.000000e+00> : vector<1x64xf32>
    %28 = tpu.matmul %25, %27, %cst_21 {dimension_numbers = #tpu.dot_dimension_numbers<[1], [0], [0], [1], [0, 0, 1, 1], [], []>} : vector<1x16xbf16>, vector<16x64xbf16>, vector<1x64xf32> -> vector<1x64xf32>
    %29 = arith.addf %24, %28 : vector<1x64xf32>
    %30 = vector.extract_strided_slice %18 {offsets = [2, 0], sizes = [1, 16], strides = [1, 1]} : vector<25x16xbf16> to vector<1x16xbf16>
    %c2 = arith.constant 2 : index
    %c0_22 = arith.constant 0 : index
    %c0_23 = arith.constant 0 : index
    %31 = vector.load %arg4[%c2, %c0_22, %c0_23] : memref<25x16x64xbf16, #tpu.memory_space<vmem>>, vector<1x16x64xbf16>
    %32 = vector.shape_cast %31 : vector<1x16x64xbf16> to vector<16x64xbf16>
    %cst_24 = arith.constant dense<0.000000e+00> : vector<1x64xf32>
    %33 = tpu.matmul %30, %32, %cst_24 {dimension_numbers = #tpu.dot_dimension_numbers<[1], [0], [0], [1], [0, 0, 1, 1], [], []>} : vector<1x16xbf16>, vector<16x64xbf16>, vector<1x64xf32> -> vector<1x64xf32>
    %34 = arith.addf %29, %33 : vector<1x64xf32>
    %35 = vector.extract_strided_slice %18 {offsets = [3, 0], sizes = [1, 16], strides = [1, 1]} : vector<25x16xbf16> to vector<1x16xbf16>
    %c3 = arith.constant 3 : index
    %c0_25 = arith.constant 0 : index
    %c0_26 = arith.constant 0 : index
    %36 = vector.load %arg4[%c3, %c0_25, %c0_26] : memref<25x16x64xbf16, #tpu.memory_space<vmem>>, vector<1x16x64xbf16>
    %37 = vector.shape_cast %36 : vector<1x16x64xbf16> to vector<16x64xbf16>
    %cst_27 = arith.constant dense<0.000000e+00> : vector<1x64xf32>
    %38 = tpu.matmul %35, %37, %cst_27 {dimension_numbers = #tpu.dot_dimension_numbers<[1], [0], [0], [1], [0, 0, 1, 1], [], []>} : vector<1x16xbf16>, vector<16x64xbf16>, vector<1x64xf32> -> vector<1x64xf32>
    %39 = arith.addf %34, %38 : vector<1x64xf32>
    %40 = vector.extract_strided_slice %18 {offsets = [4, 0], sizes = [1, 16], strides = [1, 1]} : vector<25x16xbf16> to vector<1x16xbf16>
    %c4 = arith.constant 4 : index
    %c0_28 = arith.constant 0 : index
    %c0_29 = arith.constant 0 : index
    %41 = vector.load %arg4[%c4, %c0_28, %c0_29] : memref<25x16x64xbf16, #tpu.memory_space<vmem>>, vector<1x16x64xbf16>
    %42 = vector.shape_cast %41 : vector<1x16x64xbf16> to vector<16x64xbf16>
    %cst_30 = arith.constant dense<0.000000e+00> : vector<1x64xf32>
    %43 = tpu.matmul %40, %42, %cst_30 {dimension_numbers = #tpu.dot_dimension_numbers<[1], [0], [0], [1], [0, 0, 1, 1], [], []>} : vector<1x16xbf16>, vector<16x64xbf16>, vector<1x64xf32> -> vector<1x64xf32>
    %44 = arith.addf %39, %43 : vector<1x64xf32>
    %45 = vector.extract_strided_slice %18 {offsets = [5, 0], sizes = [1, 16], strides = [1, 1]} : vector<25x16xbf16> to vector<1x16xbf16>
    %c5 = arith.constant 5 : index
    %c0_31 = arith.constant 0 : index
    %c0_32 = arith.constant 0 : index
    %46 = vector.load %arg4[%c5, %c0_31, %c0_32] : memref<25x16x64xbf16, #tpu.memory_space<vmem>>, vector<1x16x64xbf16>
    %47 = vector.shape_cast %46 : vector<1x16x64xbf16> to vector<16x64xbf16>
    %cst_33 = arith.constant dense<0.000000e+00> : vector<1x64xf32>
    %48 = tpu.matmul %45, %47, %cst_33 {dimension_numbers = #tpu.dot_dimension_numbers<[1], [0], [0], [1], [0, 0, 1, 1], [], []>} : vector<1x16xbf16>, vector<16x64xbf16>, vector<1x64xf32> -> vector<1x64xf32>
    %49 = arith.addf %44, %48 : vector<1x64xf32>
    %50 = vector.extract_strided_slice %18 {offsets = [6, 0], sizes = [1, 16], strides = [1, 1]} : vector<25x16xbf16> to vector<1x16xbf16>
    %c6 = arith.constant 6 : index
    %c0_34 = arith.constant 0 : index
    %c0_35 = arith.constant 0 : index
    %51 = vector.load %arg4[%c6, %c0_34, %c0_35] : memref<25x16x64xbf16, #tpu.memory_space<vmem>>, vector<1x16x64xbf16>
    %52 = vector.shape_cast %51 : vector<1x16x64xbf16> to vector<16x64xbf16>
    %cst_36 = arith.constant dense<0.000000e+00> : vector<1x64xf32>
    %53 = tpu.matmul %50, %52, %cst_36 {dimension_numbers = #tpu.dot_dimension_numbers<[1], [0], [0], [1], [0, 0, 1, 1], [], []>} : vector<1x16xbf16>, vector<16x64xbf16>, vector<1x64xf32> -> vector<1x64xf32>
    %54 = arith.addf %49, %53 : vector<1x64xf32>
    %55 = vector.extract_strided_slice %18 {offsets = [7, 0], sizes = [1, 16], strides = [1, 1]} : vector<25x16xbf16> to vector<1x16xbf16>
    %c7 = arith.constant 7 : index
    %c0_37 = arith.constant 0 : index
    %c0_38 = arith.constant 0 : index
    %56 = vector.load %arg4[%c7, %c0_37, %c0_38] : memref<25x16x64xbf16, #tpu.memory_space<vmem>>, vector<1x16x64xbf16>
    %57 = vector.shape_cast %56 : vector<1x16x64xbf16> to vector<16x64xbf16>
    %cst_39 = arith.constant dense<0.000000e+00> : vector<1x64xf32>
    %58 = tpu.matmul %55, %57, %cst_39 {dimension_numbers = #tpu.dot_dimension_numbers<[1], [0], [0], [1], [0, 0, 1, 1], [], []>} : vector<1x16xbf16>, vector<16x64xbf16>, vector<1x64xf32> -> vector<1x64xf32>
    %59 = arith.addf %54, %58 : vector<1x64xf32>
    %60 = vector.extract_strided_slice %18 {offsets = [8, 0], sizes = [1, 16], strides = [1, 1]} : vector<25x16xbf16> to vector<1x16xbf16>
    %c8 = arith.constant 8 : index
    %c0_40 = arith.constant 0 : index
    %c0_41 = arith.constant 0 : index
    %61 = vector.load %arg4[%c8, %c0_40, %c0_41] : memref<25x16x64xbf16, #tpu.memory_space<vmem>>, vector<1x16x64xbf16>
    %62 = vector.shape_cast %61 : vector<1x16x64xbf16> to vector<16x64xbf16>
    %cst_42 = arith.constant dense<0.000000e+00> : vector<1x64xf32>
    %63 = tpu.matmul %60, %62, %cst_42 {dimension_numbers = #tpu.dot_dimension_numbers<[1], [0], [0], [1], [0, 0, 1, 1], [], []>} : vector<1x16xbf16>, vector<16x64xbf16>, vector<1x64xf32> -> vector<1x64xf32>
    %64 = arith.addf %59, %63 : vector<1x64xf32>
    %65 = vector.extract_strided_slice %18 {offsets = [9, 0], sizes = [1, 16], strides = [1, 1]} : vector<25x16xbf16> to vector<1x16xbf16>
    %c9 = arith.constant 9 : index
    %c0_43 = arith.constant 0 : index
    %c0_44 = arith.constant 0 : index
    %66 = vector.load %arg4[%c9, %c0_43, %c0_44] : memref<25x16x64xbf16, #tpu.memory_space<vmem>>, vector<1x16x64xbf16>
    %67 = vector.shape_cast %66 : vector<1x16x64xbf16> to vector<16x64xbf16>
    %cst_45 = arith.constant dense<0.000000e+00> : vector<1x64xf32>
    %68 = tpu.matmul %65, %67, %cst_45 {dimension_numbers = #tpu.dot_dimension_numbers<[1], [0], [0], [1], [0, 0, 1, 1], [], []>} : vector<1x16xbf16>, vector<16x64xbf16>, vector<1x64xf32> -> vector<1x64xf32>
    %69 = arith.addf %64, %68 : vector<1x64xf32>
    %70 = vector.extract_strided_slice %18 {offsets = [10, 0], sizes = [1, 16], strides = [1, 1]} : vector<25x16xbf16> to vector<1x16xbf16>
    %c10 = arith.constant 10 : index
    %c0_46 = arith.constant 0 : index
    %c0_47 = arith.constant 0 : index
    %71 = vector.load %arg4[%c10, %c0_46, %c0_47] : memref<25x16x64xbf16, #tpu.memory_space<vmem>>, vector<1x16x64xbf16>
    %72 = vector.shape_cast %71 : vector<1x16x64xbf16> to vector<16x64xbf16>
    %cst_48 = arith.constant dense<0.000000e+00> : vector<1x64xf32>
    %73 = tpu.matmul %70, %72, %cst_48 {dimension_numbers = #tpu.dot_dimension_numbers<[1], [0], [0], [1], [0, 0, 1, 1], [], []>} : vector<1x16xbf16>, vector<16x64xbf16>, vector<1x64xf32> -> vector<1x64xf32>
    %74 = arith.addf %69, %73 : vector<1x64xf32>
    %75 = vector.extract_strided_slice %18 {offsets = [11, 0], sizes = [1, 16], strides = [1, 1]} : vector<25x16xbf16> to vector<1x16xbf16>
    %c11 = arith.constant 11 : index
    %c0_49 = arith.constant 0 : index
    %c0_50 = arith.constant 0 : index
    %76 = vector.load %arg4[%c11, %c0_49, %c0_50] : memref<25x16x64xbf16, #tpu.memory_space<vmem>>, vector<1x16x64xbf16>
    %77 = vector.shape_cast %76 : vector<1x16x64xbf16> to vector<16x64xbf16>
    %cst_51 = arith.constant dense<0.000000e+00> : vector<1x64xf32>
    %78 = tpu.matmul %75, %77, %cst_51 {dimension_numbers = #tpu.dot_dimension_numbers<[1], [0], [0], [1], [0, 0, 1, 1], [], []>} : vector<1x16xbf16>, vector<16x64xbf16>, vector<1x64xf32> -> vector<1x64xf32>
    %79 = arith.addf %74, %78 : vector<1x64xf32>
    %80 = vector.extract_strided_slice %18 {offsets = [12, 0], sizes = [1, 16], strides = [1, 1]} : vector<25x16xbf16> to vector<1x16xbf16>
    %c12 = arith.constant 12 : index
    %c0_52 = arith.constant 0 : index
    %c0_53 = arith.constant 0 : index
    %81 = vector.load %arg4[%c12, %c0_52, %c0_53] : memref<25x16x64xbf16, #tpu.memory_space<vmem>>, vector<1x16x64xbf16>
    %82 = vector.shape_cast %81 : vector<1x16x64xbf16> to vector<16x64xbf16>
    %cst_54 = arith.constant dense<0.000000e+00> : vector<1x64xf32>
    %83 = tpu.matmul %80, %82, %cst_54 {dimension_numbers = #tpu.dot_dimension_numbers<[1], [0], [0], [1], [0, 0, 1, 1], [], []>} : vector<1x16xbf16>, vector<16x64xbf16>, vector<1x64xf32> -> vector<1x64xf32>
    %84 = arith.addf %79, %83 : vector<1x64xf32>
    %85 = vector.extract_strided_slice %18 {offsets = [13, 0], sizes = [1, 16], strides = [1, 1]} : vector<25x16xbf16> to vector<1x16xbf16>
    %c13 = arith.constant 13 : index
    %c0_55 = arith.constant 0 : index
    %c0_56 = arith.constant 0 : index
    %86 = vector.load %arg4[%c13, %c0_55, %c0_56] : memref<25x16x64xbf16, #tpu.memory_space<vmem>>, vector<1x16x64xbf16>
    %87 = vector.shape_cast %86 : vector<1x16x64xbf16> to vector<16x64xbf16>
    %cst_57 = arith.constant dense<0.000000e+00> : vector<1x64xf32>
    %88 = tpu.matmul %85, %87, %cst_57 {dimension_numbers = #tpu.dot_dimension_numbers<[1], [0], [0], [1], [0, 0, 1, 1], [], []>} : vector<1x16xbf16>, vector<16x64xbf16>, vector<1x64xf32> -> vector<1x64xf32>
    %89 = arith.addf %84, %88 : vector<1x64xf32>
    %90 = vector.extract_strided_slice %18 {offsets = [14, 0], sizes = [1, 16], strides = [1, 1]} : vector<25x16xbf16> to vector<1x16xbf16>
    %c14 = arith.constant 14 : index
    %c0_58 = arith.constant 0 : index
    %c0_59 = arith.constant 0 : index
    %91 = vector.load %arg4[%c14, %c0_58, %c0_59] : memref<25x16x64xbf16, #tpu.memory_space<vmem>>, vector<1x16x64xbf16>
    %92 = vector.shape_cast %91 : vector<1x16x64xbf16> to vector<16x64xbf16>
    %cst_60 = arith.constant dense<0.000000e+00> : vector<1x64xf32>
    %93 = tpu.matmul %90, %92, %cst_60 {dimension_numbers = #tpu.dot_dimension_numbers<[1], [0], [0], [1], [0, 0, 1, 1], [], []>} : vector<1x16xbf16>, vector<16x64xbf16>, vector<1x64xf32> -> vector<1x64xf32>
    %94 = arith.addf %89, %93 : vector<1x64xf32>
    %95 = vector.extract_strided_slice %18 {offsets = [15, 0], sizes = [1, 16], strides = [1, 1]} : vector<25x16xbf16> to vector<1x16xbf16>
    %c15 = arith.constant 15 : index
    %c0_61 = arith.constant 0 : index
    %c0_62 = arith.constant 0 : index
    %96 = vector.load %arg4[%c15, %c0_61, %c0_62] : memref<25x16x64xbf16, #tpu.memory_space<vmem>>, vector<1x16x64xbf16>
    %97 = vector.shape_cast %96 : vector<1x16x64xbf16> to vector<16x64xbf16>
    %cst_63 = arith.constant dense<0.000000e+00> : vector<1x64xf32>
    %98 = tpu.matmul %95, %97, %cst_63 {dimension_numbers = #tpu.dot_dimension_numbers<[1], [0], [0], [1], [0, 0, 1, 1], [], []>} : vector<1x16xbf16>, vector<16x64xbf16>, vector<1x64xf32> -> vector<1x64xf32>
    %99 = arith.addf %94, %98 : vector<1x64xf32>
    %100 = vector.extract_strided_slice %18 {offsets = [16, 0], sizes = [1, 16], strides = [1, 1]} : vector<25x16xbf16> to vector<1x16xbf16>
    %c16 = arith.constant 16 : index
    %c0_64 = arith.constant 0 : index
    %c0_65 = arith.constant 0 : index
    %101 = vector.load %arg4[%c16, %c0_64, %c0_65] : memref<25x16x64xbf16, #tpu.memory_space<vmem>>, vector<1x16x64xbf16>
    %102 = vector.shape_cast %101 : vector<1x16x64xbf16> to vector<16x64xbf16>
    %cst_66 = arith.constant dense<0.000000e+00> : vector<1x64xf32>
    %103 = tpu.matmul %100, %102, %cst_66 {dimension_numbers = #tpu.dot_dimension_numbers<[1], [0], [0], [1], [0, 0, 1, 1], [], []>} : vector<1x16xbf16>, vector<16x64xbf16>, vector<1x64xf32> -> vector<1x64xf32>
    %104 = arith.addf %99, %103 : vector<1x64xf32>
    %105 = vector.extract_strided_slice %18 {offsets = [17, 0], sizes = [1, 16], strides = [1, 1]} : vector<25x16xbf16> to vector<1x16xbf16>
    %c17 = arith.constant 17 : index
    %c0_67 = arith.constant 0 : index
    %c0_68 = arith.constant 0 : index
    %106 = vector.load %arg4[%c17, %c0_67, %c0_68] : memref<25x16x64xbf16, #tpu.memory_space<vmem>>, vector<1x16x64xbf16>
    %107 = vector.shape_cast %106 : vector<1x16x64xbf16> to vector<16x64xbf16>
    %cst_69 = arith.constant dense<0.000000e+00> : vector<1x64xf32>
    %108 = tpu.matmul %105, %107, %cst_69 {dimension_numbers = #tpu.dot_dimension_numbers<[1], [0], [0], [1], [0, 0, 1, 1], [], []>} : vector<1x16xbf16>, vector<16x64xbf16>, vector<1x64xf32> -> vector<1x64xf32>
    %109 = arith.addf %104, %108 : vector<1x64xf32>
    %110 = vector.extract_strided_slice %18 {offsets = [18, 0], sizes = [1, 16], strides = [1, 1]} : vector<25x16xbf16> to vector<1x16xbf16>
    %c18 = arith.constant 18 : index
    %c0_70 = arith.constant 0 : index
    %c0_71 = arith.constant 0 : index
    %111 = vector.load %arg4[%c18, %c0_70, %c0_71] : memref<25x16x64xbf16, #tpu.memory_space<vmem>>, vector<1x16x64xbf16>
    %112 = vector.shape_cast %111 : vector<1x16x64xbf16> to vector<16x64xbf16>
    %cst_72 = arith.constant dense<0.000000e+00> : vector<1x64xf32>
    %113 = tpu.matmul %110, %112, %cst_72 {dimension_numbers = #tpu.dot_dimension_numbers<[1], [0], [0], [1], [0, 0, 1, 1], [], []>} : vector<1x16xbf16>, vector<16x64xbf16>, vector<1x64xf32> -> vector<1x64xf32>
    %114 = arith.addf %109, %113 : vector<1x64xf32>
    %115 = vector.extract_strided_slice %18 {offsets = [19, 0], sizes = [1, 16], strides = [1, 1]} : vector<25x16xbf16> to vector<1x16xbf16>
    %c19 = arith.constant 19 : index
    %c0_73 = arith.constant 0 : index
    %c0_74 = arith.constant 0 : index
    %116 = vector.load %arg4[%c19, %c0_73, %c0_74] : memref<25x16x64xbf16, #tpu.memory_space<vmem>>, vector<1x16x64xbf16>
    %117 = vector.shape_cast %116 : vector<1x16x64xbf16> to vector<16x64xbf16>
    %cst_75 = arith.constant dense<0.000000e+00> : vector<1x64xf32>
    %118 = tpu.matmul %115, %117, %cst_75 {dimension_numbers = #tpu.dot_dimension_numbers<[1], [0], [0], [1], [0, 0, 1, 1], [], []>} : vector<1x16xbf16>, vector<16x64xbf16>, vector<1x64xf32> -> vector<1x64xf32>
    %119 = arith.addf %114, %118 : vector<1x64xf32>
    %120 = vector.extract_strided_slice %18 {offsets = [20, 0], sizes = [1, 16], strides = [1, 1]} : vector<25x16xbf16> to vector<1x16xbf16>
    %c20 = arith.constant 20 : index
    %c0_76 = arith.constant 0 : index
    %c0_77 = arith.constant 0 : index
    %121 = vector.load %arg4[%c20, %c0_76, %c0_77] : memref<25x16x64xbf16, #tpu.memory_space<vmem>>, vector<1x16x64xbf16>
    %122 = vector.shape_cast %121 : vector<1x16x64xbf16> to vector<16x64xbf16>
    %cst_78 = arith.constant dense<0.000000e+00> : vector<1x64xf32>
    %123 = tpu.matmul %120, %122, %cst_78 {dimension_numbers = #tpu.dot_dimension_numbers<[1], [0], [0], [1], [0, 0, 1, 1], [], []>} : vector<1x16xbf16>, vector<16x64xbf16>, vector<1x64xf32> -> vector<1x64xf32>
    %124 = arith.addf %119, %123 : vector<1x64xf32>
    %125 = vector.extract_strided_slice %18 {offsets = [21, 0], sizes = [1, 16], strides = [1, 1]} : vector<25x16xbf16> to vector<1x16xbf16>
    %c21 = arith.constant 21 : index
    %c0_79 = arith.constant 0 : index
    %c0_80 = arith.constant 0 : index
    %126 = vector.load %arg4[%c21, %c0_79, %c0_80] : memref<25x16x64xbf16, #tpu.memory_space<vmem>>, vector<1x16x64xbf16>
    %127 = vector.shape_cast %126 : vector<1x16x64xbf16> to vector<16x64xbf16>
    %cst_81 = arith.constant dense<0.000000e+00> : vector<1x64xf32>
    %128 = tpu.matmul %125, %127, %cst_81 {dimension_numbers = #tpu.dot_dimension_numbers<[1], [0], [0], [1], [0, 0, 1, 1], [], []>} : vector<1x16xbf16>, vector<16x64xbf16>, vector<1x64xf32> -> vector<1x64xf32>
    %129 = arith.addf %124, %128 : vector<1x64xf32>
    %130 = vector.extract_strided_slice %18 {offsets = [22, 0], sizes = [1, 16], strides = [1, 1]} : vector<25x16xbf16> to vector<1x16xbf16>
    %c22 = arith.constant 22 : index
    %c0_82 = arith.constant 0 : index
    %c0_83 = arith.constant 0 : index
    %131 = vector.load %arg4[%c22, %c0_82, %c0_83] : memref<25x16x64xbf16, #tpu.memory_space<vmem>>, vector<1x16x64xbf16>
    %132 = vector.shape_cast %131 : vector<1x16x64xbf16> to vector<16x64xbf16>
    %cst_84 = arith.constant dense<0.000000e+00> : vector<1x64xf32>
    %133 = tpu.matmul %130, %132, %cst_84 {dimension_numbers = #tpu.dot_dimension_numbers<[1], [0], [0], [1], [0, 0, 1, 1], [], []>} : vector<1x16xbf16>, vector<16x64xbf16>, vector<1x64xf32> -> vector<1x64xf32>
    %134 = arith.addf %129, %133 : vector<1x64xf32>
    %135 = vector.extract_strided_slice %18 {offsets = [23, 0], sizes = [1, 16], strides = [1, 1]} : vector<25x16xbf16> to vector<1x16xbf16>
    %c23 = arith.constant 23 : index
    %c0_85 = arith.constant 0 : index
    %c0_86 = arith.constant 0 : index
    %136 = vector.load %arg4[%c23, %c0_85, %c0_86] : memref<25x16x64xbf16, #tpu.memory_space<vmem>>, vector<1x16x64xbf16>
    %137 = vector.shape_cast %136 : vector<1x16x64xbf16> to vector<16x64xbf16>
    %cst_87 = arith.constant dense<0.000000e+00> : vector<1x64xf32>
    %138 = tpu.matmul %135, %137, %cst_87 {dimension_numbers = #tpu.dot_dimension_numbers<[1], [0], [0], [1], [0, 0, 1, 1], [], []>} : vector<1x16xbf16>, vector<16x64xbf16>, vector<1x64xf32> -> vector<1x64xf32>
    %139 = arith.addf %134, %138 : vector<1x64xf32>
    %140 = vector.extract_strided_slice %18 {offsets = [24, 0], sizes = [1, 16], strides = [1, 1]} : vector<25x16xbf16> to vector<1x16xbf16>
    %c24 = arith.constant 24 : index
    %c0_88 = arith.constant 0 : index
    %c0_89 = arith.constant 0 : index
    %141 = vector.load %arg4[%c24, %c0_88, %c0_89] : memref<25x16x64xbf16, #tpu.memory_space<vmem>>, vector<1x16x64xbf16>
    %142 = vector.shape_cast %141 : vector<1x16x64xbf16> to vector<16x64xbf16>
    %cst_90 = arith.constant dense<0.000000e+00> : vector<1x64xf32>
    %143 = tpu.matmul %140, %142, %cst_90 {dimension_numbers = #tpu.dot_dimension_numbers<[1], [0], [0], [1], [0, 0, 1, 1], [], []>} : vector<1x16xbf16>, vector<16x64xbf16>, vector<1x64xf32> -> vector<1x64xf32>
    %144 = arith.addf %139, %143 : vector<1x64xf32>
    %cst_91 = arith.constant 0.000000e+00 : f32
    %145 = vector.broadcast %cst_91 : f32 to vector<1x64xf32>
    %146 = arith.maximumf %144, %145 : vector<1x64xf32>
    %147 = arith.truncf %146 : vector<1x64xf32> to vector<1x64xbf16>
    %c0_92 = arith.constant 0 : index
    %c0_93 = arith.constant 0 : index
    %148 = vector.load %arg6[%c0_92, %c0_93] : memref<64x32xbf16, #tpu.memory_space<vmem>>, vector<64x32xbf16>
    %cst_94 = arith.constant dense<0.000000e+00> : vector<1x32xf32>
    %149 = tpu.matmul %147, %148, %cst_94 {dimension_numbers = #tpu.dot_dimension_numbers<[1], [0], [0], [1], [0, 0, 1, 1], [], []>} : vector<1x64xbf16>, vector<64x32xbf16>, vector<1x32xf32> -> vector<1x32xf32>
    %c0_95 = arith.constant 0 : index
    %c0_96 = arith.constant 0 : index
    %150 = vector.load %arg7[%c0_95, %c0_96] : memref<1x32xf32, #tpu.memory_space<vmem>>, vector<1x32xf32>
    %151 = arith.addf %149, %150 : vector<1x32xf32>
    %cst_97 = arith.constant 0.000000e+00 : f32
    %152 = vector.broadcast %cst_97 : f32 to vector<1x32xf32>
    %153 = arith.maximumf %151, %152 : vector<1x32xf32>
    %154 = arith.truncf %153 : vector<1x32xf32> to vector<1x32xbf16>
    %c0_98 = arith.constant 0 : index
    %c0_99 = arith.constant 0 : index
    %155 = vector.load %arg8[%c0_98, %c0_99] : memref<32x10xbf16, #tpu.memory_space<vmem>>, vector<32x10xbf16>
    %cst_100 = arith.constant dense<0.000000e+00> : vector<1x10xf32>
    %156 = tpu.matmul %154, %155, %cst_100 {dimension_numbers = #tpu.dot_dimension_numbers<[1], [0], [0], [1], [0, 0, 1, 1], [], []>} : vector<1x32xbf16>, vector<32x10xbf16>, vector<1x10xf32> -> vector<1x10xf32>
    %c0_101 = arith.constant 0 : index
    %c0_102 = arith.constant 0 : index
    %157 = vector.load %arg9[%c0_101, %c0_102] : memref<1x10xf32, #tpu.memory_space<vmem>>, vector<1x10xf32>
    %158 = arith.addf %156, %157 : vector<1x10xf32>
    %c0_103 = arith.constant 0 : index
    %c0_104 = arith.constant 0 : index
    %c0_105 = arith.constant 0 : index
    %159 = vector.load %arg10[%c0_103, %c0_104, %c0_105] : memref<1x1x10xf32, #tpu.memory_space<vmem>>, vector<1x1x10xf32>
    %160 = vector.shape_cast %159 : vector<1x1x10xf32> to vector<1x10xf32>
    %161 = vector.shape_cast %158 : vector<1x10xf32> to vector<1x1x10xf32>
    tpu.vector_store %arg10[%c0_103, %c0_104, %c0_105], %161 {strides = array<i32>} : memref<1x1x10xf32, #tpu.memory_space<vmem>>, vector<1x1x10xf32>,
    return
  }
  func.func @transform_0(%arg0: i32) -> (i32, i32, i32, i32) {
    %c0_i32 = arith.constant 0 : i32
    %c0_i32_0 = arith.constant 0 : i32
    %c0_i32_1 = arith.constant 0 : i32
    %c0_i32_2 = arith.constant 0 : i32
    return %arg0, %c0_i32, %c0_i32_0, %c0_i32_1 : i32, i32, i32, i32
  }
  func.func @transform_1(%arg0: i32) -> (i32, i32) {
    %c0_i32 = arith.constant 0 : i32
    %c0_i32_0 = arith.constant 0 : i32
    %c0_i32_1 = arith.constant 0 : i32
    return %c0_i32, %c0_i32_0 : i32, i32
  }
  func.func @transform_2(%arg0: i32) -> (i32, i32) {
    %c0_i32 = arith.constant 0 : i32
    %c0_i32_0 = arith.constant 0 : i32
    %c0_i32_1 = arith.constant 0 : i32
    return %c0_i32, %c0_i32_0 : i32, i32
  }
  func.func @transform_3(%arg0: i32) -> (i32, i32, i32) {
    %c0_i32 = arith.constant 0 : i32
    %c0_i32_0 = arith.constant 0 : i32
    %c0_i32_1 = arith.constant 0 : i32
    %c0_i32_2 = arith.constant 0 : i32
    return %c0_i32, %c0_i32_0, %c0_i32_1 : i32, i32, i32
  }
  func.func @transform_4(%arg0: i32) -> (i32, i32) {
    %c0_i32 = arith.constant 0 : i32
    %c0_i32_0 = arith.constant 0 : i32
    %c0_i32_1 = arith.constant 0 : i32
    return %c0_i32, %c0_i32_0 : i32, i32
  }
  func.func @transform_5(%arg0: i32) -> (i32, i32) {
    %c0_i32 = arith.constant 0 : i32
    %c0_i32_0 = arith.constant 0 : i32
    %c0_i32_1 = arith.constant 0 : i32
    return %c0_i32, %c0_i32_0 : i32, i32
  }
  func.func @transform_6(%arg0: i32) -> (i32, i32) {
    %c0_i32 = arith.constant 0 : i32
    %c0_i32_0 = arith.constant 0 : i32
    %c0_i32_1 = arith.constant 0 : i32
    return %c0_i32, %c0_i32_0 : i32, i32
  }
  func.func @transform_7(%arg0: i32) -> (i32, i32) {
    %c0_i32 = arith.constant 0 : i32
    %c0_i32_0 = arith.constant 0 : i32
    %c0_i32_1 = arith.constant 0 : i32
    return %c0_i32, %c0_i32_0 : i32, i32
  }
  func.func @transform_8(%arg0: i32) -> (i32, i32) {
    %c0_i32 = arith.constant 0 : i32
    %c0_i32_0 = arith.constant 0 : i32
    %c0_i32_1 = arith.constant 0 : i32
    return %c0_i32, %c0_i32_0 : i32, i32
  }
  func.func @transform_9(%arg0: i32) -> (i32, i32, i32) {
    %c0_i32 = arith.constant 0 : i32
    %c0_i32_0 = arith.constant 0 : i32
    %c0_i32_1 = arith.constant 0 : i32
    return %arg0, %c0_i32, %c0_i32_0 : i32, i32, i32
  }
}

</mosaic_0001>

<llo_original>
// kernel: cnn_forward.3
$region0: #{cnn_forward.3}
  #allocation0 [shape = 'u32[]', space=smem, size = 0x4, offset = 0x4, fixed_abs, tag = 'smem constant byte address 0x4 - core index']
  #allocation1 [shape = 'u32[72,128]{1,0:T(1,128)}', space=vmem, size = 0x9000, scoped, tag = 'internal scratch']
  %s0 = inlined_call_operand.vmem [shape: bf16[2,688,54], index: 0, kind: input, shape index: {}]
  %s1 = inlined_call_operand.vmem [shape: bf16[54,256], index: 1, kind: input, shape index: {}]
  %s2 = inlined_call_operand.vmem [shape: f32[1,256], index: 2, kind: input, shape index: {}]
  %s3 = inlined_call_operand.vmem [shape: bf16[688,128], index: 3, kind: output, shape index: {}]
  %s4 = sld [smem:[#allocation0]]
  $region86: #{cnn_forward.3} parent=0
    _
  %s6 = ssub.s32 1, %s4
  %s7 = scalar_select 0, %s6, %s4
  $region1: #{cnn_forward.3} parent=0
    #allocation2 [shape = 'u8[352256]{0}', space=vmem, size = 0x56000, scoped, tag = 'input window, operand 0']
    loop: start=0, step=1, limit=4
    $region2: #{cnn_forward.3} parent=1 // loop_pre_header
      _
    $region3: #{cnn_forward.3} parent=1 // loop_header
      %s9 = sphi 0, %s13
      %p10 = scmp.ge.s32.totalorder %s9, 4
      %s19 = sphi 0, %s21
      %s22 = sphi 0, %s19
      %s23 = sphi 0, %s22
      %s39 = sphi 0, %s23
      %s43 = sphi 0, %s43
      %s45 = sphi 0, %s43
      %s46 = sphi 0, %s45
      %s60 = sphi 0, %s46
      %s64 = sphi 0, %s64
      %s66 = sphi 0, %s64
      %s67 = sphi 0, %s66
      %s81 = sphi 0, %s67
      %s87 = sphi 0, %s89
      %s90 = sphi 0, %s87
      %s91 = sphi 0, %s90
      %s107 = sphi 0, %s91
    $region4: #{cnn_forward.3} parent=1 // loop_header_branch
      %12 = sbr.rel (%p10) target = $region8
    $region5: #{cnn_forward.3} parent=1 // loop_body
      %s14 = ssub.s32 %s9, 1
      %s15 = ssub.s32 %s9, 2
      %s16 = sadd.s32 %s9, 1
      %s17 = ssub.s32 %s9, %s16
      %p18 = scmp.eq.s32.totalorder %s17, 0
      %s20 = sadd.s32 %s19, 1
      %s21 = scalar_select %p18, %s19, %s20
      %p24 = pneg %p18
      %p25 = scmp.eq.s32.totalorder %s9, 1
      %p26 = por %p24, %p25
      %p27 = scmp.ne.s32.totalorder %s19, %s22
      %p28 = scmp.eq.s32.totalorder %s9, 0
      %p29 = por %p27, %p28
      %p30 = scmp.ne.s32.totalorder %s19, %s22
      %p31 = scmp.eq.s32.totalorder %s14, 1
      %p32 = por %p30, %p31
      %p33 = scmp.ne.s32.totalorder %s22, %s23
      %p34 = scmp.eq.s32.totalorder %s14, 0
      %p35 = por %p33, %p34
      %p36 = scmp.ne.s32.totalorder %s22, %s23
      %p37 = scmp.eq.s32.totalorder %s15, 1
      %p38 = por %p36, %p37
      %p40 = scmp.ne.s32.totalorder %s23, %s39
      %p41 = scmp.eq.s32.totalorder %s15, 0
      %p42 = por %p40, %p41
      %s44 = sadd.s32 %s43, 1
      %p47 = scmp.eq.s32.totalorder %s9, 1
      %p48 = scmp.ne.s32.totalorder %s43, %s45
      %p49 = scmp.eq.s32.totalorder %s9, 0
      %p50 = por %p48, %p49
      %p51 = scmp.ne.s32.totalorder %s43, %s45
      %p52 = scmp.eq.s32.totalorder %s14, 1
      %p53 = por %p51, %p52
      %p54 = scmp.ne.s32.totalorder %s45, %s46
      %p55 = scmp.eq.s32.totalorder %s14, 0
      %p56 = por %p54, %p55
      %p57 = scmp.ne.s32.totalorder %s45, %s46
      %p58 = scmp.eq.s32.totalorder %s15, 1
      %p59 = por %p57, %p58
      %p61 = scmp.ne.s32.totalorder %s46, %s60
      %p62 = scmp.eq.s32.totalorder %s15, 0
      %p63 = por %p61, %p62
      %s65 = sadd.s32 %s64, 1
      %p68 = scmp.eq.s32.totalorder %s9, 1
      %p69 = scmp.ne.s32.totalorder %s64, %s66
      %p70 = scmp.eq.s32.totalorder %s9, 0
      %p71 = por %p69, %p70
      %p72 = scmp.ne.s32.totalorder %s64, %s66
      %p73 = scmp.eq.s32.totalorder %s14, 1
      %p74 = por %p72, %p73
      %p75 = scmp.ne.s32.totalorder %s66, %s67
      %p76 = scmp.eq.s32.totalorder %s14, 0
      %p77 = por %p75, %p76
      %p78 = scmp.ne.s32.totalorder %s66, %s67
      %p79 = scmp.eq.s32.totalorder %s15, 1
      %p80 = por %p78, %p79
      %p82 = scmp.ne.s32.totalorder %s67, %s81
      %p83 = scmp.eq.s32.totalorder %s15, 0
      %p84 = por %p82, %p83
      %s85 = ssub.s32 %s9, %s16
      %p86 = scmp.eq.s32.totalorder %s85, 0
      %s88 = sadd.s32 %s87, 1
      %s89 = scalar_select %p86, %s87, %s88
      %p92 = pneg %p86
      %p93 = scmp.eq.s32.totalorder %s9, 1
      %p94 = por %p92, %p93
      %p95 = scmp.ne.s32.totalorder %s87, %s90
      %p96 = scmp.eq.s32.totalorder %s9, 0
      %p97 = por %p95, %p96
      %p98 = scmp.ne.s32.totalorder %s87, %s90
      %p99 = scmp.eq.s32.totalorder %s14, 1
      %p100 = por %p98, %p99
      %p101 = scmp.ne.s32.totalorder %s90, %s91
      %p102 = scmp.eq.s32.totalorder %s14, 0
      %p103 = por %p101, %p102
      %p104 = scmp.ne.s32.totalorder %s90, %s91
      %p105 = scmp.eq.s32.totalorder %s15, 1
      %p106 = por %p104, %p105
      %p108 = scmp.ne.s32.totalorder %s91, %s107
      %p109 = scmp.eq.s32.totalorder %s15, 0
      %p110 = por %p108, %p109
      %p111 = scmp.le.s32.totalorder 1, %s9
      %p112 = scmp.lt.s32.totalorder %s9, 3
      %p113 = pnand %p111, %p112
      %p114 = pneg %p113
      // Predicated region
      $region9: #{cnn_forward.3} parent=5 // pred_check
        _
      $region10: #{cnn_forward.3} parent=5 // pred_check_branch
        %116 = sbr.rel (%p113) target = $region12
      $region11: #{cnn_forward.3} parent=5 // pred_region
        %s117 = ssub.s32 %s9, 1
        // Predicated region
        $region13: #{cnn_forward.3} parent=11 // pred_check
          %p118 = pneg %p56
        $region14: #{cnn_forward.3} parent=11 // pred_check_branch
          %120 = sbr.rel (%p118) target = $region16
        $region15: #{cnn_forward.3} parent=11 // pred_region
          _
        $region16: #{cnn_forward.3} parent=11 // pred_fallthru
          _
        // Predicated region
        $region17: #{cnn_forward.3} parent=11 // pred_check
          %p121 = pneg %p77
        $region18: #{cnn_forward.3} parent=11 // pred_check_branch
          %123 = sbr.rel (%p121) target = $region20
        $region19: #{cnn_forward.3} parent=11 // pred_region
          _
        $region20: #{cnn_forward.3} parent=11 // pred_fallthru
          _
      $region12: #{cnn_forward.3} parent=5 // pred_fallthru
        _
      %p124 = scmp.lt.s32.totalorder %s9, 2
      // Predicated region
      $region21: #{cnn_forward.3} parent=5 // pred_check
        %p125 = pneg %p124
      $region22: #{cnn_forward.3} parent=5 // pred_check_branch
        %127 = sbr.rel (%p125) target = $region24
      $region23: #{cnn_forward.3} parent=5 // pred_region
        // Predicated region
        $region25: #{cnn_forward.3} parent=23 // pred_check
          %p128 = pneg %p29
        $region26: #{cnn_forward.3} parent=23 // pred_check_branch
          %130 = sbr.rel (%p128) target = $region28
        $region27: #{cnn_forward.3} parent=23 // pred_region
          %s131 = sand.u32 %s19, 1
          %s132 = sand.u32 %s19, 1
          %s133 = smul.addr %s132, 344
          %s134 = scalar_lea.vmem [#allocation2], %s133
          %s135 = smul.u32 43, %s9
          %s136 = smul.addr %s135, 4
          %s137 = scalar_lea.vmem %s0, %s136
          // Predicated region
          $region29: #{cnn_forward.3} parent=27 // pred_check
            _
          $region30: #{cnn_forward.3} parent=27 // pred_check_branch
            %139 = sbr.rel (0) target = $region32
          $region31: #{cnn_forward.3} parent=27 // pred_region
            // Predicated region
            $region33: #{cnn_forward.3} parent=31 // pred_check
              _
            $region34: #{cnn_forward.3} parent=31 // pred_check_branch
              %141 = sbr.rel target = $region36
            $region35: #{cnn_forward.3} parent=31 // pred_region
              // Predicated region
              $region48: #{cnn_forward.3} parent=35 // pred_check
                _
              $region49: #{cnn_forward.3} parent=35 // pred_check_branch
                %327 = sbr.rel (0) target = $region51
              $region50: #{cnn_forward.3} parent=35 // pred_region
                loop: start=0, step=1, limit=1
                $region52: #{cnn_forward.3} parent=50 // loop_pre_header
                  _
                $region53: #{cnn_forward.3} parent=50 // loop_header
                  %s329 = sphi 0, %s333
                  %p330 = scmp.ge.s32.totalorder %s329, 1
                  %s334 = sphi %s137, %s137
                  %s335 = sphi %s134, %s134
                $region54: #{cnn_forward.3} parent=50 // loop_header_branch
                  %332 = sbr.rel (%p330) target = $region58
                $region55: #{cnn_forward.3} parent=50 // loop_body
                  _
                $region56: #{cnn_forward.3} parent=50 // loop_footer
                  %s333 = sadd.s32 1, %s329
                $region57: #{cnn_forward.3} parent=50 // loop_footer_branch
                  %328 = sbr.rel target = $region53
                $region58: #{cnn_forward.3} parent=50 // loop_exit
                  _
                %s337 = ssub.s32 16, 1
                loop: start=0, step=1, limit=1
                $region59: #{cnn_forward.3} parent=50 // loop_pre_header
                  _
                $region60: #{cnn_forward.3} parent=50 // loop_header
                  %s339 = sphi 0, %s343
                  %p340 = scmp.ge.s32.totalorder %s339, 1
                  %s344 = sphi %s137, %s137
                  %s345 = sphi %s134, %s134
                $region61: #{cnn_forward.3} parent=50 // loop_header_branch
                  %342 = sbr.rel (%p340) target = $region65
                $region62: #{cnn_forward.3} parent=50 // loop_body
                  %v346 = vld [vmem:[%s344] sm:%s337]
                  %347 = vst [vmem:[%s345] sm:%s337] %v346
                  %v348 = vld [vmem:[%s344 + $0x4] sm:%s337]
                  %349 = vst [vmem:[%s345 + $0x4] sm:%s337] %v348
                  %v350 = vld [vmem:[%s344 + $0x8] sm:%s337]
                  %351 = vst [vmem:[%s345 + $0x8] sm:%s337] %v350
                  %v352 = vld [vmem:[%s344 + $0xc] sm:%s337]
                  %353 = vst [vmem:[%s345 + $0xc] sm:%s337] %v352
                  %v354 = vld [vmem:[%s344 + $0x10] sm:%s337]
                  %355 = vst [vmem:[%s345 + $0x10] sm:%s337] %v354
                  %v356 = vld [vmem:[%s344 + $0x14] sm:%s337]
                  %357 = vst [vmem:[%s345 + $0x14] sm:%s337] %v356
                  %v358 = vld [vmem:[%s344 + $0x18] sm:%s337]
                  %359 = vst [vmem:[%s345 + $0x18] sm:%s337] %v358
                  %v360 = vld [vmem:[%s344 + $0x1c] sm:%s337]
                  %361 = vst [vmem:[%s345 + $0x1c] sm:%s337] %v360
                  %v362 = vld [vmem:[%s344 + $0x20] sm:%s337]
                  %363 = vst [vmem:[%s345 + $0x20] sm:%s337] %v362
                  %v364 = vld [vmem:[%s344 + $0x24] sm:%s337]
                  %365 = vst [vmem:[%s345 + $0x24] sm:%s337] %v364
                  %v366 = vld [vmem:[%s344 + $0x28] sm:%s337]
                  %367 = vst [vmem:[%s345 + $0x28] sm:%s337] %v366
                  %v368 = vld [vmem:[%s344 + $0x2c] sm:%s337]
                  %369 = vst [vmem:[%s345 + $0x2c] sm:%s337] %v368
                  %v370 = vld [vmem:[%s344 + $0x30] sm:%s337]
                  %371 = vst [vmem:[%s345 + $0x30] sm:%s337] %v370
                  %v372 = vld [vmem:[%s344 + $0x34] sm:%s337]
                  %373 = vst [vmem:[%s345 + $0x34] sm:%s337] %v372
                  %v374 = vld [vmem:[%s344 + $0x38] sm:%s337]
                  %375 = vst [vmem:[%s345 + $0x38] sm:%s337] %v374
                  %v376 = vld [vmem:[%s344 + $0x3c] sm:%s337]
                  %377 = vst [vmem:[%s345 + $0x3c] sm:%s337] %v376
                  %v378 = vld [vmem:[%s344 + $0x40] sm:%s337]
                  %379 = vst [vmem:[%s345 + $0x40] sm:%s337] %v378
                  %v380 = vld [vmem:[%s344 + $0x44] sm:%s337]
                  %381 = vst [vmem:[%s345 + $0x44] sm:%s337] %v380
                  %v382 = vld [vmem:[%s344 + $0x48] sm:%s337]
                  %383 = vst [vmem:[%s345 + $0x48] sm:%s337] %v382
                  %v384 = vld [vmem:[%s344 + $0x4c] sm:%s337]
                  %385 = vst [vmem:[%s345 + $0x4c] sm:%s337] %v384
                  %v386 = vld [vmem:[%s344 + $0x50] sm:%s337]
                  %387 = vst [vmem:[%s345 + $0x50] sm:%s337] %v386
                  %v388 = vld [vmem:[%s344 + $0x54] sm:%s337]
                  %389 = vst [vmem:[%s345 + $0x54] sm:%s337] %v388
                  %v390 = vld [vmem:[%s344 + $0x58] sm:%s337]
                  %391 = vst [vmem:[%s345 + $0x58] sm:%s337] %v390
                  %v392 = vld [vmem:[%s344 + $0x5c] sm:%s337]
                  %393 = vst [vmem:[%s345 + $0x5c] sm:%s337] %v392
                  %v394 = vld [vmem:[%s344 + $0x60] sm:%s337]
                  %395 = vst [vmem:[%s345 + $0x60] sm:%s337] %v394
                  %v396 = vld [vmem:[%s344 + $0x64] sm:%s337]
                  %397 = vst [vmem:[%s345 + $0x64] sm:%s337] %v396
                  %v398 = vld [vmem:[%s344 + $0x68] sm:%s337]
                  %399 = vst [vmem:[%s345 + $0x68] sm:%s337] %v398
                  %v400 = vld [vmem:[%s344 + $0x6c] sm:%s337]
                  %401 = vst [vmem:[%s345 + $0x6c] sm:%s337] %v400
                  %v402 = vld [vmem:[%s344 + $0x70] sm:%s337]
                  %403 = vst [vmem:[%s345 + $0x70] sm:%s337] %v402
                  %v404 = vld [vmem:[%s344 + $0x74] sm:%s337]
                  %405 = vst [vmem:[%s345 + $0x74] sm:%s337] %v404
                  %v406 = vld [vmem:[%s344 + $0x78] sm:%s337]
                  %407 = vst [vmem:[%s345 + $0x78] sm:%s337] %v406
                  %v408 = vld [vmem:[%s344 + $0x7c] sm:%s337]
                  %409 = vst [vmem:[%s345 + $0x7c] sm:%s337] %v408
                  %v410 = vld [vmem:[%s344 + $0x80] sm:%s337]
                  %411 = vst [vmem:[%s345 + $0x80] sm:%s337] %v410
                  %v412 = vld [vmem:[%s344 + $0x84] sm:%s337]
                  %413 = vst [vmem:[%s345 + $0x84] sm:%s337] %v412
                  %v414 = vld [vmem:[%s344 + $0x88] sm:%s337]
                  %415 = vst [vmem:[%s345 + $0x88] sm:%s337] %v414
                  %v416 = vld [vmem:[%s344 + $0x8c] sm:%s337]
                  %417 = vst [vmem:[%s345 + $0x8c] sm:%s337] %v416
                  %v418 = vld [vmem:[%s344 + $0x90] sm:%s337]
                  %419 = vst [vmem:[%s345 + $0x90] sm:%s337] %v418
                  %v420 = vld [vmem:[%s344 + $0x94] sm:%s337]
                  %421 = vst [vmem:[%s345 + $0x94] sm:%s337] %v420
                  %v422 = vld [vmem:[%s344 + $0x98] sm:%s337]
                  %423 = vst [vmem:[%s345 + $0x98] sm:%s337] %v422
                  %v424 = vld [vmem:[%s344 + $0x9c] sm:%s337]
                  %425 = vst [vmem:[%s345 + $0x9c] sm:%s337] %v424
                  %v426 = vld [vmem:[%s344 + $0xa0] sm:%s337]
                  %427 = vst [vmem:[%s345 + $0xa0] sm:%s337] %v426
                  %v428 = vld [vmem:[%s344 + $0xa4] sm:%s337]
                  %429 = vst [vmem:[%s345 + $0xa4] sm:%s337] %v428
                  %v430 = vld [vmem:[%s344 + $0xa8] sm:%s337]
                  %431 = vst [vmem:[%s345 + $0xa8] sm:%s337] %v430
                  %v432 = vld [vmem:[%s344 + $0x158] sm:%s337]
                  %433 = vst [vmem:[%s345 + $0xac] sm:%s337] %v432
                  %v434 = vld [vmem:[%s344 + $0x15c] sm:%s337]
                  %435 = vst [vmem:[%s345 + $0xb0] sm:%s337] %v434
                  %v436 = vld [vmem:[%s344 + $0x160] sm:%s337]
                  %437 = vst [vmem:[%s345 + $0xb4] sm:%s337] %v436
                  %v438 = vld [vmem:[%s344 + $0x164] sm:%s337]
                  %439 = vst [vmem:[%s345 + $0xb8] sm:%s337] %v438
                  %v440 = vld [vmem:[%s344 + $0x168] sm:%s337]
                  %441 = vst [vmem:[%s345 + $0xbc] sm:%s337] %v440
                  %v442 = vld [vmem:[%s344 + $0x16c] sm:%s337]
                  %443 = vst [vmem:[%s345 + $0xc0] sm:%s337] %v442
                  %v444 = vld [vmem:[%s344 + $0x170] sm:%s337]
                  %445 = vst [vmem:[%s345 + $0xc4] sm:%s337] %v444
                  %v446 = vld [vmem:[%s344 + $0x174] sm:%s337]
                  %447 = vst [vmem:[%s345 + $0xc8] sm:%s337] %v446
                  %v448 = vld [vmem:[%s344 + $0x178] sm:%s337]
                  %449 = vst [vmem:[%s345 + $0xcc] sm:%s337] %v448
                  %v450 = vld [vmem:[%s344 + $0x17c] sm:%s337]
                  %451 = vst [vmem:[%s345 + $0xd0] sm:%s337] %v450
                  %v452 = vld [vmem:[%s344 + $0x180] sm:%s337]
                  %453 = vst [vmem:[%s345 + $0xd4] sm:%s337] %v452
                  %v454 = vld [vmem:[%s344 + $0x184] sm:%s337]
                  %455 = vst [vmem:[%s345 + $0xd8] sm:%s337] %v454
                  %v456 = vld [vmem:[%s344 + $0x188] sm:%s337]
                  %457 = vst [vmem:[%s345 + $0xdc] sm:%s337] %v456
                  %v458 = vld [vmem:[%s344 + $0x18c] sm:%s337]
                  %459 = vst [vmem:[%s345 + $0xe0] sm:%s337] %v458
                  %v460 = vld [vmem:[%s344 + $0x190] sm:%s337]
                  %461 = vst [vmem:[%s345 + $0xe4] sm:%s337] %v460
                  %v462 = vld [vmem:[%s344 + $0x194] sm:%s337]
                  %463 = vst [vmem:[%s345 + $0xe8] sm:%s337] %v462
                  %v464 = vld [vmem:[%s344 + $0x198] sm:%s337]
                  %465 = vst [vmem:[%s345 + $0xec] sm:%s337] %v464
                  %v466 = vld [vmem:[%s344 + $0x19c] sm:%s337]
                  %467 = vst [vmem:[%s345 + $0xf0] sm:%s337] %v466
                  %v468 = vld [vmem:[%s344 + $0x1a0] sm:%s337]
                  %469 = vst [vmem:[%s345 + $0xf4] sm:%s337] %v468
                  %v470 = vld [vmem:[%s344 + $0x1a4] sm:%s337]
                  %471 = vst [vmem:[%s345 + $0xf8] sm:%s337] %v470
                  %v472 = vld [vmem:[%s344 + $0x1a8] sm:%s337]
                  %473 = vst [vmem:[%s345 + $0xfc] sm:%s337] %v472
                  %v474 = vld [vmem:[%s344 + $0x1ac] sm:%s337]
                  %475 = vst [vmem:[%s345 + $0x100] sm:%s337] %v474
                  %v476 = vld [vmem:[%s344 + $0x1b0] sm:%s337]
                  %477 = vst [vmem:[%s345 + $0x104] sm:%s337] %v476
                  %v478 = vld [vmem:[%s344 + $0x1b4] sm:%s337]
                  %479 = vst [vmem:[%s345 + $0x108] sm:%s337] %v478
                  %v480 = vld [vmem:[%s344 + $0x1b8] sm:%s337]
                  %481 = vst [vmem:[%s345 + $0x10c] sm:%s337] %v480
                  %v482 = vld [vmem:[%s344 + $0x1bc] sm:%s337]
                  %483 = vst [vmem:[%s345 + $0x110] sm:%s337] %v482
                  %v484 = vld [vmem:[%s344 + $0x1c0] sm:%s337]
                  %485 = vst [vmem:[%s345 + $0x114] sm:%s337] %v484
                  %v486 = vld [vmem:[%s344 + $0x1c4] sm:%s337]
                  %487 = vst [vmem:[%s345 + $0x118] sm:%s337] %v486
                  %v488 = vld [vmem:[%s344 + $0x1c8] sm:%s337]
                  %489 = vst [vmem:[%s345 + $0x11c] sm:%s337] %v488
                  %v490 = vld [vmem:[%s344 + $0x1cc] sm:%s337]
                  %491 = vst [vmem:[%s345 + $0x120] sm:%s337] %v490
                  %v492 = vld [vmem:[%s344 + $0x1d0] sm:%s337]
                  %493 = vst [vmem:[%s345 + $0x124] sm:%s337] %v492
                  %v494 = vld [vmem:[%s344 + $0x1d4] sm:%s337]
                  %495 = vst [vmem:[%s345 + $0x128] sm:%s337] %v494
                  %v496 = vld [vmem:[%s344 + $0x1d8] sm:%s337]
                  %497 = vst [vmem:[%s345 + $0x12c] sm:%s337] %v496
                  %v498 = vld [vmem:[%s344 + $0x1dc] sm:%s337]
                  %499 = vst [vmem:[%s345 + $0x130] sm:%s337] %v498
                  %v500 = vld [vmem:[%s344 + $0x1e0] sm:%s337]
                  %501 = vst [vmem:[%s345 + $0x134] sm:%s337] %v500
                  %v502 = vld [vmem:[%s344 + $0x1e4] sm:%s337]
                  %503 = vst [vmem:[%s345 + $0x138] sm:%s337] %v502
                  %v504 = vld [vmem:[%s344 + $0x1e8] sm:%s337]
                  %505 = vst [vmem:[%s345 + $0x13c] sm:%s337] %v504
                  %v506 = vld [vmem:[%s344 + $0x1ec] sm:%s337]
                  %507 = vst [vmem:[%s345 + $0x140] sm:%s337] %v506
                  %v508 = vld [vmem:[%s344 + $0x1f0] sm:%s337]
                  %509 = vst [vmem:[%s345 + $0x144] sm:%s337] %v508
                  %v510 = vld [vmem:[%s344 + $0x1f4] sm:%s337]
                  %511 = vst [vmem:[%s345 + $0x148] sm:%s337] %v510
                  %v512 = vld [vmem:[%s344 + $0x1f8] sm:%s337]
                  %513 = vst [vmem:[%s345 + $0x14c] sm:%s337] %v512
                  %v514 = vld [vmem:[%s344 + $0x1fc] sm:%s337]
                  %515 = vst [vmem:[%s345 + $0x150] sm:%s337] %v514
                  %v516 = vld [vmem:[%s344 + $0x200] sm:%s337]
                  %517 = vst [vmem:[%s345 + $0x154] sm:%s337] %v516
                $region63: #{cnn_forward.3} parent=50 // loop_footer
                  %s343 = sadd.s32 1, %s339
                $region64: #{cnn_forward.3} parent=50 // loop_footer_branch
                  %338 = sbr.rel target = $region60
                $region65: #{cnn_forward.3} parent=50 // loop_exit
                  _
              $region51: #{cnn_forward.3} parent=35 // pred_fallthru
                _
            $region36: #{cnn_forward.3} parent=31 // pred_fallthru
              _
            // Predicated region
            $region37: #{cnn_forward.3} parent=31 // pred_check
              _
            $region38: #{cnn_forward.3} parent=31 // pred_check_branch
              %143 = sbr.rel (0) target = $region40
            $region39: #{cnn_forward.3} parent=31 // pred_region
              %s145 = ssub.s32 16, 1
              loop: start=0, step=1, limit=1
              $region41: #{cnn_forward.3} parent=39 // loop_pre_header
                _
              $region42: #{cnn_forward.3} parent=39 // loop_header
                %s147 = sphi 0, %s151
                %p148 = scmp.ge.s32.totalorder %s147, 1
                %s152 = sphi %s137, %s137
                %s153 = sphi %s134, %s134
              $region43: #{cnn_forward.3} parent=39 // loop_header_branch
                %150 = sbr.rel (%p148) target = $region47
              $region44: #{cnn_forward.3} parent=39 // loop_body
                %v154 = vld [vmem:[%s152] sm:%s145]
                %155 = vst [vmem:[%s153] sm:%s145] %v154
                %v156 = vld [vmem:[%s152 + $0x4] sm:%s145]
                %157 = vst [vmem:[%s153 + $0x4] sm:%s145] %v156
                %v158 = vld [vmem:[%s152 + $0x8] sm:%s145]
                %159 = vst [vmem:[%s153 + $0x8] sm:%s145] %v158
                %v160 = vld [vmem:[%s152 + $0xc] sm:%s145]
                %161 = vst [vmem:[%s153 + $0xc] sm:%s145] %v160
                %v162 = vld [vmem:[%s152 + $0x10] sm:%s145]
                %163 = vst [vmem:[%s153 + $0x10] sm:%s145] %v162
                %v164 = vld [vmem:[%s152 + $0x14] sm:%s145]
                %165 = vst [vmem:[%s153 + $0x14] sm:%s145] %v164
                %v166 = vld [vmem:[%s152 + $0x18] sm:%s145]
                %167 = vst [vmem:[%s153 + $0x18] sm:%s145] %v166
                %v168 = vld [vmem:[%s152 + $0x1c] sm:%s145]
                %169 = vst [vmem:[%s153 + $0x1c] sm:%s145] %v168
                %v170 = vld [vmem:[%s152 + $0x20] sm:%s145]
                %171 = vst [vmem:[%s153 + $0x20] sm:%s145] %v170
                %v172 = vld [vmem:[%s152 + $0x24] sm:%s145]
                %173 = vst [vmem:[%s153 + $0x24] sm:%s145] %v172
                %v174 = vld [vmem:[%s152 + $0x28] sm:%s145]
                %175 = vst [vmem:[%s153 + $0x28] sm:%s145] %v174
                %v176 = vld [vmem:[%s152 + $0x2c] sm:%s145]
                %177 = vst [vmem:[%s153 + $0x2c] sm:%s145] %v176
                %v178 = vld [vmem:[%s152 + $0x30] sm:%s145]
                %179 = vst [vmem:[%s153 + $0x30] sm:%s145] %v178
                %v180 = vld [vmem:[%s152 + $0x34] sm:%s145]
                %181 = vst [vmem:[%s153 + $0x34] sm:%s145] %v180
                %v182 = vld [vmem:[%s152 + $0x38] sm:%s145]
                %183 = vst [vmem:[%s153 + $0x38] sm:%s145] %v182
                %v184 = vld [vmem:[%s152 + $0x3c] sm:%s145]
                %185 = vst [vmem:[%s153 + $0x3c] sm:%s145] %v184
                %v186 = vld [vmem:[%s152 + $0x40] sm:%s145]
                %187 = vst [vmem:[%s153 + $0x40] sm:%s145] %v186
                %v188 = vld [vmem:[%s152 + $0x44] sm:%s145]
                %189 = vst [vmem:[%s153 + $0x44] sm:%s145] %v188
                %v190 = vld [vmem:[%s152 + $0x48] sm:%s145]
                %191 = vst [vmem:[%s153 + $0x48] sm:%s145] %v190
                %v192 = vld [vmem:[%s152 + $0x4c] sm:%s145]
                %193 = vst [vmem:[%s153 + $0x4c] sm:%s145] %v192
                %v194 = vld [vmem:[%s152 + $0x50] sm:%s145]
                %195 = vst [vmem:[%s153 + $0x50] sm:%s145] %v194
                %v196 = vld [vmem:[%s152 + $0x54] sm:%s145]
                %197 = vst [vmem:[%s153 + $0x54] sm:%s145] %v196
                %v198 = vld [vmem:[%s152 + $0x58] sm:%s145]
                %199 = vst [vmem:[%s153 + $0x58] sm:%s145] %v198
                %v200 = vld [vmem:[%s152 + $0x5c] sm:%s145]
                %201 = vst [vmem:[%s153 + $0x5c] sm:%s145] %v200
                %v202 = vld [vmem:[%s152 + $0x60] sm:%s145]
                %203 = vst [vmem:[%s153 + $0x60] sm:%s145] %v202
                %v204 = vld [vmem:[%s152 + $0x64] sm:%s145]
                %205 = vst [vmem:[%s153 + $0x64] sm:%s145] %v204
                %v206 = vld [vmem:[%s152 + $0x68] sm:%s145]
                %207 = vst [vmem:[%s153 + $0x68] sm:%s145] %v206
                %v208 = vld [vmem:[%s152 + $0x6c] sm:%s145]
                %209 = vst [vmem:[%s153 + $0x6c] sm:%s145] %v208
                %v210 = vld [vmem:[%s152 + $0x70] sm:%s145]
                %211 = vst [vmem:[%s153 + $0x70] sm:%s145] %v210
                %v212 = vld [vmem:[%s152 + $0x74] sm:%s145]
                %213 = vst [vmem:[%s153 + $0x74] sm:%s145] %v212
                %v214 = vld [vmem:[%s152 + $0x78] sm:%s145]
                %215 = vst [vmem:[%s153 + $0x78] sm:%s145] %v214
                %v216 = vld [vmem:[%s152 + $0x7c] sm:%s145]
                %217 = vst [vmem:[%s153 + $0x7c] sm:%s145] %v216
                %v218 = vld [vmem:[%s152 + $0x80] sm:%s145]
                %219 = vst [vmem:[%s153 + $0x80] sm:%s145] %v218
                %v220 = vld [vmem:[%s152 + $0x84] sm:%s145]
                %221 = vst [vmem:[%s153 + $0x84] sm:%s145] %v220
                %v222 = vld [vmem:[%s152 + $0x88] sm:%s145]
                %223 = vst [vmem:[%s153 + $0x88] sm:%s145] %v222
                %v224 = vld [vmem:[%s152 + $0x8c] sm:%s145]
                %225 = vst [vmem:[%s153 + $0x8c] sm:%s145] %v224
                %v226 = vld [vmem:[%s152 + $0x90] sm:%s145]
                %227 = vst [vmem:[%s153 + $0x90] sm:%s145] %v226
                %v228 = vld [vmem:[%s152 + $0x94] sm:%s145]
                %229 = vst [vmem:[%s153 + $0x94] sm:%s145] %v228
                %v230 = vld [vmem:[%s152 + $0x98] sm:%s145]
                %231 = vst [vmem:[%s153 + $0x98] sm:%s145] %v230
                %v232 = vld [vmem:[%s152 + $0x9c] sm:%s145]
                %233 = vst [vmem:[%s153 + $0x9c] sm:%s145] %v232
                %v234 = vld [vmem:[%s152 + $0xa0] sm:%s145]
                %235 = vst [vmem:[%s153 + $0xa0] sm:%s145] %v234
                %v236 = vld [vmem:[%s152 + $0xa4] sm:%s145]
                %237 = vst [vmem:[%s153 + $0xa4] sm:%s145] %v236
                %v238 = vld [vmem:[%s152 + $0xa8] sm:%s145]
                %239 = vst [vmem:[%s153 + $0xa8] sm:%s145] %v238
                %v240 = vld [vmem:[%s152 + $0x158] sm:%s145]
                %241 = vst [vmem:[%s153 + $0xac] sm:%s145] %v240
                %v242 = vld [vmem:[%s152 + $0x15c] sm:%s145]
                %243 = vst [vmem:[%s153 + $0xb0] sm:%s145] %v242
                %v244 = vld [vmem:[%s152 + $0x160] sm:%s145]
                %245 = vst [vmem:[%s153 + $0xb4] sm:%s145] %v244
                %v246 = vld [vmem:[%s152 + $0x164] sm:%s145]
                %247 = vst [vmem:[%s153 + $0xb8] sm:%s145] %v246
                %v248 = vld [vmem:[%s152 + $0x168] sm:%s145]
                %249 = vst [vmem:[%s153 + $0xbc] sm:%s145] %v248
                %v250 = vld [vmem:[%s152 + $0x16c] sm:%s145]
                %251 = vst [vmem:[%s153 + $0xc0] sm:%s145] %v250
                %v252 = vld [vmem:[%s152 + $0x170] sm:%s145]
                %253 = vst [vmem:[%s153 + $0xc4] sm:%s145] %v252
                %v254 = vld [vmem:[%s152 + $0x174] sm:%s145]
                %255 = vst [vmem:[%s153 + $0xc8] sm:%s145] %v254
                %v256 = vld [vmem:[%s152 + $0x178] sm:%s145]
                %257 = vst [vmem:[%s153 + $0xcc] sm:%s145] %v256
                %v258 = vld [vmem:[%s152 + $0x17c] sm:%s145]
                %259 = vst [vmem:[%s153 + $0xd0] sm:%s145] %v258
                %v260 = vld [vmem:[%s152 + $0x180] sm:%s145]
                %261 = vst [vmem:[%s153 + $0xd4] sm:%s145] %v260
                %v262 = vld [vmem:[%s152 + $0x184] sm:%s145]
                %263 = vst [vmem:[%s153 + $0xd8] sm:%s145] %v262
                %v264 = vld [vmem:[%s152 + $0x188] sm:%s145]
                %265 = vst [vmem:[%s153 + $0xdc] sm:%s145] %v264
                %v266 = vld [vmem:[%s152 + $0x18c] sm:%s145]
                %267 = vst [vmem:[%s153 + $0xe0] sm:%s145] %v266
                %v268 = vld [vmem:[%s152 + $0x190] sm:%s145]
                %269 = vst [vmem:[%s153 + $0xe4] sm:%s145] %v268
                %v270 = vld [vmem:[%s152 + $0x194] sm:%s145]
                %271 = vst [vmem:[%s153 + $0xe8] sm:%s145] %v270
                %v272 = vld [vmem:[%s152 + $0x198] sm:%s145]
                %273 = vst [vmem:[%s153 + $0xec] sm:%s145] %v272
                %v274 = vld [vmem:[%s152 + $0x19c] sm:%s145]
                %275 = vst [vmem:[%s153 + $0xf0] sm:%s145] %v274
                %v276 = vld [vmem:[%s152 + $0x1a0] sm:%s145]
                %277 = vst [vmem:[%s153 + $0xf4] sm:%s145] %v276
                %v278 = vld [vmem:[%s152 + $0x1a4] sm:%s145]
                %279 = vst [vmem:[%s153 + $0xf8] sm:%s145] %v278
                %v280 = vld [vmem:[%s152 + $0x1a8] sm:%s145]
                %281 = vst [vmem:[%s153 + $0xfc] sm:%s145] %v280
                %v282 = vld [vmem:[%s152 + $0x1ac] sm:%s145]
                %283 = vst [vmem:[%s153 + $0x100] sm:%s145] %v282
                %v284 = vld [vmem:[%s152 + $0x1b0] sm:%s145]
                %285 = vst [vmem:[%s153 + $0x104] sm:%s145] %v284
                %v286 = vld [vmem:[%s152 + $0x1b4] sm:%s145]
                %287 = vst [vmem:[%s153 + $0x108] sm:%s145] %v286
                %v288 = vld [vmem:[%s152 + $0x1b8] sm:%s145]
                %289 = vst [vmem:[%s153 + $0x10c] sm:%s145] %v288
                %v290 = vld [vmem:[%s152 + $0x1bc] sm:%s145]
                %291 = vst [vmem:[%s153 + $0x110] sm:%s145] %v290
                %v292 = vld [vmem:[%s152 + $0x1c0] sm:%s145]
                %293 = vst [vmem:[%s153 + $0x114] sm:%s145] %v292
                %v294 = vld [vmem:[%s152 + $0x1c4] sm:%s145]
                %295 = vst [vmem:[%s153 + $0x118] sm:%s145] %v294
                %v296 = vld [vmem:[%s152 + $0x1c8] sm:%s145]
                %297 = vst [vmem:[%s153 + $0x11c] sm:%s145] %v296
                %v298 = vld [vmem:[%s152 + $0x1cc] sm:%s145]
                %299 = vst [vmem:[%s153 + $0x120] sm:%s145] %v298
                %v300 = vld [vmem:[%s152 + $0x1d0] sm:%s145]
                %301 = vst [vmem:[%s153 + $0x124] sm:%s145] %v300
                %v302 = vld [vmem:[%s152 + $0x1d4] sm:%s145]
                %303 = vst [vmem:[%s153 + $0x128] sm:%s145] %v302
                %v304 = vld [vmem:[%s152 + $0x1d8] sm:%s145]
                %305 = vst [vmem:[%s153 + $0x12c] sm:%s145] %v304
                %v306 = vld [vmem:[%s152 + $0x1dc] sm:%s145]
                %307 = vst [vmem:[%s153 + $0x130] sm:%s145] %v306
                %v308 = vld [vmem:[%s152 + $0x1e0] sm:%s145]
                %309 = vst [vmem:[%s153 + $0x134] sm:%s145] %v308
                %v310 = vld [vmem:[%s152 + $0x1e4] sm:%s145]
                %311 = vst [vmem:[%s153 + $0x138] sm:%s145] %v310
                %v312 = vld [vmem:[%s152 + $0x1e8] sm:%s145]
                %313 = vst [vmem:[%s153 + $0x13c] sm:%s145] %v312
                %v314 = vld [vmem:[%s152 + $0x1ec] sm:%s145]
                %315 = vst [vmem:[%s153 + $0x140] sm:%s145] %v314
                %v316 = vld [vmem:[%s152 + $0x1f0] sm:%s145]
                %317 = vst [vmem:[%s153 + $0x144] sm:%s145] %v316
                %v318 = vld [vmem:[%s152 + $0x1f4] sm:%s145]
                %319 = vst [vmem:[%s153 + $0x148] sm:%s145] %v318
                %v320 = vld [vmem:[%s152 + $0x1f8] sm:%s145]
                %321 = vst [vmem:[%s153 + $0x14c] sm:%s145] %v320
                %v322 = vld [vmem:[%s152 + $0x1fc] sm:%s145]
                %323 = vst [vmem:[%s153 + $0x150] sm:%s145] %v322
                %v324 = vld [vmem:[%s152 + $0x200] sm:%s145]
                %325 = vst [vmem:[%s153 + $0x154] sm:%s145] %v324
              $region45: #{cnn_forward.3} parent=39 // loop_footer
                %s151 = sadd.s32 1, %s147
              $region46: #{cnn_forward.3} parent=39 // loop_footer_branch
                %146 = sbr.rel target = $region42
              $region47: #{cnn_forward.3} parent=39 // loop_exit
                _
            $region40: #{cnn_forward.3} parent=31 // pred_fallthru
              _
          $region32: #{cnn_forward.3} parent=27 // pred_fallthru
            _
          %518 = vnop
        $region28: #{cnn_forward.3} parent=23 // pred_fallthru
          _
      $region24: #{cnn_forward.3} parent=5 // pred_fallthru
        _
      %p519 = scmp.le.s32.totalorder 1, %s9
      %p520 = scmp.lt.s32.totalorder %s9, 3
      %p521 = pnand %p519, %p520
      %p522 = pneg %p521
      // Predicated region
      $region66: #{cnn_forward.3} parent=5 // pred_check
        _
      $region67: #{cnn_forward.3} parent=5 // pred_check_branch
        %524 = sbr.rel (%p521) target = $region69
      $region68: #{cnn_forward.3} parent=5 // pred_region
        %s525 = ssub.s32 %s9, 1
        %s526 = sand.u32 %s22, 1
        %s527 = sand.u32 %s22, 1
        %s528 = smul.addr %s527, 344
        %s529 = scalar_lea.vmem [#allocation2], %s528
        // Predicated region
        $region70: #{cnn_forward.3} parent=68 // pred_check
          %p530 = pneg %p35
        $region71: #{cnn_forward.3} parent=68 // pred_check_branch
          %532 = sbr.rel (%p530) target = $region73
        $region72: #{cnn_forward.3} parent=68 // pred_region
          _
        $region73: #{cnn_forward.3} parent=68 // pred_fallthru
          _
        %s533 = sand.u32 %s22, 1
        %s534 = sand.u32 %s22, 1
        %s535 = smul.addr %s534, 344
        %s536 = scalar_lea.vmem [#allocation2], %s535
        %p537 = pneg %p35
        %p538 = pneg %p32
        %p539 = pneg %p56
        %p540 = pneg %p53
        %p541 = pneg %p77
        %p542 = pneg %p74
        %p543 = pneg %p103
        %p544 = pneg %p100
        %s545 = smul.u32 43, %s14
        %p546 = scmp.lt.s32.totalorder %s545, 85
        %s547 = scalar_select %p546, %s545, 85
        %s548 = smul.addr %s547, 4
        %s549 = scalar_lea.vmem %s3, %s548
        %s550 = smul.u32 43, %s14
        %s551 = smul.u32 43, %s14
        %p552 = scmp.lt.s32.totalorder %s551, 85
        %s553 = scalar_select %p552, %s551, 85
        %s554 = smul.addr %s553, 4
        %s555 = scalar_lea.vmem %s3, %s554
        %s556 = smul.u32 43, %s14
        %v558 = vld [vmem:[%s1] sm:$0xff]
        %v559 = vld [vmem:[%s1 + $0x8] sm:$0xff]
        %v560 = vld [vmem:[%s1 + $0x10] sm:$0xff]
        %v561 = vld [vmem:[%s1 + $0x18] sm:$0xff]
        %v562 = vld [vmem:[%s1 + $0x20] sm:$0xff]
        %v563 = vld [vmem:[%s1 + $0x28] sm:$0xff]
        %v564 = vld [vmem:[%s1 + $0x30] sm:$0x77]
        %v565 = vld [vmem:[%s2] sm:$0x3]
        %v566 = vld [vmem:[%s529] sm:$0xf]
        %v567 = vld [vmem:[%s529 + $0x4] sm:$0xf]
        %v568 = vld [vmem:[%s529 + $0x8] sm:$0xf]
        %v569 = vld [vmem:[%s529 + $0xc] sm:$0xf]
        %v570 = vld [vmem:[%s529 + $0x10] sm:$0xf]
        %v571 = vld [vmem:[%s529 + $0x14] sm:$0xf]
        %v572 = vld [vmem:[%s529 + $0x18] sm:$0xf]
        %v573 = vld [vmem:[%s529 + $0x1c] sm:$0xf]
        %v574 = vld [vmem:[%s529 + $0x20] sm:$0xf]
        %v575 = vld [vmem:[%s529 + $0x24] sm:$0xf]
        %v576 = vld [vmem:[%s529 + $0x28] sm:$0xf]
        %v577 = vld [vmem:[%s529 + $0x2c] sm:$0xf]
        %v578 = vld [vmem:[%s529 + $0x30] sm:$0xf]
        %v579 = vld [vmem:[%s529 + $0x34] sm:$0xf]
        %v580 = vld [vmem:[%s529 + $0x38] sm:$0xf]
        %v581 = vld [vmem:[%s529 + $0x3c] sm:$0xf]
        %v582 = vld [vmem:[%s529 + $0x40] sm:$0xf]
        %v583 = vld [vmem:[%s529 + $0x44] sm:$0xf]
        %v584 = vld [vmem:[%s529 + $0x48] sm:$0xf]
        %v585 = vld [vmem:[%s529 + $0x4c] sm:$0xf]
        %v586 = vld [vmem:[%s529 + $0x50] sm:$0xf]
        %v587 = vld [vmem:[%s529 + $0x54] sm:$0xf]
        %v588 = vld [vmem:[%s529 + $0x58] sm:$0xf]
        %v589 = vld [vmem:[%s529 + $0x5c] sm:$0xf]
        %v590 = vld [vmem:[%s529 + $0x60] sm:$0xf]
        %v591 = vld [vmem:[%s529 + $0x64] sm:$0xf]
        %v592 = vld [vmem:[%s529 + $0x68] sm:$0xf]
        %v593 = vld [vmem:[%s529 + $0x6c] sm:$0xf]
        %v594 = vld [vmem:[%s529 + $0x70] sm:$0xf]
        %v595 = vld [vmem:[%s529 + $0x74] sm:$0xf]
        %v596 = vld [vmem:[%s529 + $0x78] sm:$0xf]
        %v597 = vld [vmem:[%s529 + $0x7c] sm:$0xf]
        %v598 = vld [vmem:[%s529 + $0x80] sm:$0xf]
        %v599 = vld [vmem:[%s529 + $0x84] sm:$0xf]
        %v600 = vld [vmem:[%s529 + $0x88] sm:$0xf]
        %v601 = vld [vmem:[%s529 + $0x8c] sm:$0xf]
        %v602 = vld [vmem:[%s529 + $0x90] sm:$0xf]
        %v603 = vld [vmem:[%s529 + $0x94] sm:$0xf]
        %v604 = vld [vmem:[%s529 + $0x98] sm:$0xf]
        %v605 = vld [vmem:[%s529 + $0x9c] sm:$0xf]
        %v606 = vld [vmem:[%s529 + $0xa0] sm:$0xf]
        %v607 = vld [vmem:[%s529 + $0xa4] sm:$0xf]
        %v608 = vld [vmem:[%s529 + $0xa8] sm:$0xf]
        %v610 = vperm.slane %v565, 0
        %v611 = vperm.slane %v565, 1
        %v657 = vunpack.c.l.b16 %v566
        %v658 = vunpack.c.l.b16 %v567
        %v659 = vunpack.c.l.b16 %v568
        %v660 = vunpack.c.l.b16 %v569
        %v661 = vunpack.c.l.b16 %v570
        %v662 = vunpack.c.l.b16 %v571
        %v663 = vunpack.c.l.b16 %v572
        %v664 = vunpack.c.l.b16 %v573
        %v665 = vunpack.c.l.b16 %v574
        %v666 = vunpack.c.l.b16 %v575
        %v667 = vunpack.c.l.b16 %v576
        %v668 = vunpack.c.l.b16 %v577
        %v669 = vunpack.c.l.b16 %v578
        %v670 = vunpack.c.l.b16 %v579
        %v671 = vunpack.c.l.b16 %v580
        %v672 = vunpack.c.l.b16 %v581
        %v673 = vunpack.c.l.b16 %v582
        %v674 = vunpack.c.l.b16 %v583
        %v675 = vunpack.c.l.b16 %v584
        %v676 = vunpack.c.l.b16 %v585
        %v677 = vunpack.c.l.b16 %v586
        %v678 = vunpack.c.l.b16 %v587
        %v679 = vunpack.c.l.b16 %v588
        %v680 = vunpack.c.l.b16 %v589
        %v681 = vunpack.c.l.b16 %v590
        %v682 = vunpack.c.l.b16 %v591
        %v683 = vunpack.c.l.b16 %v592
        %v684 = vunpack.c.l.b16 %v593
        %v685 = vunpack.c.l.b16 %v594
        %v686 = vunpack.c.l.b16 %v595
        %v687 = vunpack.c.l.b16 %v596
        %v688 = vunpack.c.l.b16 %v597
        %v689 = vunpack.c.l.b16 %v598
        %v690 = vunpack.c.l.b16 %v599
        %v691 = vunpack.c.l.b16 %v600
        %v692 = vunpack.c.l.b16 %v601
        %v693 = vunpack.c.l.b16 %v602
        %v694 = vunpack.c.l.b16 %v603
        %v695 = vunpack.c.l.b16 %v604
        %v696 = vunpack.c.l.b16 %v605
        %v697 = vunpack.c.l.b16 %v606
        %v698 = vunpack.c.l.b16 %v607
        %v699 = vunpack.c.l.b16 %v608
        %v700 = vpack.c.b16 %v658, %v657
        %v701 = vpack.c.b16 %v660, %v659
        %v702 = vpack.c.b16 %v662, %v661
        %v703 = vpack.c.b16 %v664, %v663
        %v704 = vpack.c.b16 %v666, %v665
        %v705 = vpack.c.b16 %v668, %v667
        %v706 = vpack.c.b16 %v670, %v669
        %v707 = vpack.c.b16 %v672, %v671
        %v708 = vpack.c.b16 %v674, %v673
        %v709 = vpack.c.b16 %v676, %v675
        %v710 = vpack.c.b16 %v678, %v677
        %v711 = vpack.c.b16 %v680, %v679
        %v712 = vpack.c.b16 %v682, %v681
        %v713 = vpack.c.b16 %v684, %v683
        %v714 = vpack.c.b16 %v686, %v685
        %v715 = vpack.c.b16 %v688, %v687
        %v716 = vpack.c.b16 %v690, %v689
        %v717 = vpack.c.b16 %v692, %v691
        %v718 = vpack.c.b16 %v694, %v693
        %v719 = vpack.c.b16 %v696, %v695
        %v720 = vpack.c.b16 %v698, %v697
        %v721 = vpack.c.b16 %v699, %v699
        %v729 = vunpack.c.l.b16 %v558
        %v730 = vunpack.c.h.b16 %v558
        %v731 = vunpack.c.l.b16 %v559
        %v732 = vunpack.c.h.b16 %v559
        %v733 = vunpack.c.l.b16 %v560
        %v734 = vunpack.c.h.b16 %v560
        %v735 = vunpack.c.l.b16 %v561
        %v736 = vunpack.c.h.b16 %v561
        %v737 = vunpack.c.l.b16 %v562
        %v738 = vunpack.c.h.b16 %v562
        %v739 = vunpack.c.l.b16 %v563
        %v740 = vunpack.c.h.b16 %v563
        %v741 = vunpack.c.l.b16 %v564
        %v742 = vunpack.c.h.b16 %v564
        %v743 = vpack.c.b16 %v731, %v729
        %v744 = vpack.c.b16 %v732, %v730
        %v745 = vpack.c.b16 %v735, %v733
        %v746 = vpack.c.b16 %v736, %v734
        %v747 = vpack.c.b16 %v739, %v737
        %v748 = vpack.c.b16 %v740, %v738
        %v749 = vpack.c.b16 %v741, %v741
        %v750 = vpack.c.b16 %v742, %v742
        %vm757 = vcmask 441344
        %v759 = vsel %vm757, %v700, 0
        %v762 = vsel %vm757, %v701, 0
        %v765 = vsel %vm757, %v702, 0
        %v768 = vsel %vm757, %v703, 0
        %v771 = vsel %vm757, %v704, 0
        %v774 = vsel %vm757, %v705, 0
        %v777 = vsel %vm757, %v706, 0
        %v780 = vsel %vm757, %v707, 0
        %v783 = vsel %vm757, %v708, 0
        %v786 = vsel %vm757, %v709, 0
        %v789 = vsel %vm757, %v710, 0
        %v792 = vsel %vm757, %v711, 0
        %v795 = vsel %vm757, %v712, 0
        %v798 = vsel %vm757, %v713, 0
        %v801 = vsel %vm757, %v714, 0
        %v804 = vsel %vm757, %v715, 0
        %v807 = vsel %vm757, %v716, 0
        %v810 = vsel %vm757, %v717, 0
        %v813 = vsel %vm757, %v718, 0
        %v816 = vsel %vm757, %v719, 0
        %v819 = vsel %vm757, %v720, 0
        %v822 = vsel %vm757, %v721, 0
        %vm824 = vcmask 1042432
        %v826 = vsel %vm824, %v749, 0
        %v829 = vsel %vm824, %v750, 0
        %831 = vmatpush.bf16.msra.mxu0 0
        %832 = vmatpush.bf16.msra.mxu0 0
        %833 = vmatpush.bf16.msra.mxu0 0
        %834 = vmatpush.bf16.msra.mxu0 0
        %835 = vmatpush.bf16.msra.mxu0 %v826
        %836 = vmatpush.bf16.msra.mxu0 %v747
        %837 = vmatpush.bf16.msra.mxu0 %v745
        %838 = vmatpush.bf16.msra.mxu0 %v743
        %839 = vmatmul.bf16.gmra.mxu0 %v759
        %v840 = vpop.f32.mrf.mxu0
        %v841 = vadd.f32 %v610, %v840
        %v842 = vpop.f32.mrf.mxu0
        %v843 = vadd.f32 %v610, %v842
        %844 = vmatmul.bf16.gmra.mxu0 %v762
        %v845 = vpop.f32.mrf.mxu0
        %v846 = vadd.f32 %v610, %v845
        %v847 = vpop.f32.mrf.mxu0
        %v848 = vadd.f32 %v610, %v847
        %849 = vmatmul.bf16.gmra.mxu0 %v765
        %v850 = vpop.f32.mrf.mxu0
        %v851 = vadd.f32 %v610, %v850
        %v852 = vpop.f32.mrf.mxu0
        %v853 = vadd.f32 %v610, %v852
        %854 = vmatmul.bf16.gmra.mxu0 %v768
        %v855 = vpop.f32.mrf.mxu0
        %v856 = vadd.f32 %v610, %v855
        %v857 = vpop.f32.mrf.mxu0
        %v858 = vadd.f32 %v610, %v857
        %859 = vmatmul.bf16.gmra.mxu0 %v771
        %v860 = vpop.f32.mrf.mxu0
        %v861 = vadd.f32 %v610, %v860
        %v862 = vpop.f32.mrf.mxu0
        %v863 = vadd.f32 %v610, %v862
        %864 = vmatmul.bf16.gmra.mxu0 %v774
        %v865 = vpop.f32.mrf.mxu0
        %v866 = vadd.f32 %v610, %v865
        %v867 = vpop.f32.mrf.mxu0
        %v868 = vadd.f32 %v610, %v867
        %869 = vmatmul.bf16.gmra.mxu0 %v777
        %v870 = vpop.f32.mrf.mxu0
        %v871 = vadd.f32 %v610, %v870
        %v872 = vpop.f32.mrf.mxu0
        %v873 = vadd.f32 %v610, %v872
        %874 = vmatmul.bf16.gmra.mxu0 %v780
        %v875 = vpop.f32.mrf.mxu0
        %v876 = vadd.f32 %v610, %v875
        %v877 = vpop.f32.mrf.mxu0
        %v878 = vadd.f32 %v610, %v877
        %879 = vmatmul.bf16.gmra.mxu0 %v783
        %v880 = vpop.f32.mrf.mxu0
        %v881 = vadd.f32 %v610, %v880
        %v882 = vpop.f32.mrf.mxu0
        %v883 = vadd.f32 %v610, %v882
        %884 = vmatmul.bf16.gmra.mxu0 %v786
        %v885 = vpop.f32.mrf.mxu0
        %v886 = vadd.f32 %v610, %v885
        %v887 = vpop.f32.mrf.mxu0
        %v888 = vadd.f32 %v610, %v887
        %889 = vmatmul.bf16.gmra.mxu0 %v789
        %v890 = vpop.f32.mrf.mxu0
        %v891 = vadd.f32 %v610, %v890
        %v892 = vpop.f32.mrf.mxu0
        %v893 = vadd.f32 %v610, %v892
        %894 = vmatmul.bf16.gmra.mxu0 %v792
        %v895 = vpop.f32.mrf.mxu0
        %v896 = vadd.f32 %v610, %v895
        %v897 = vpop.f32.mrf.mxu0
        %v898 = vadd.f32 %v610, %v897
        %899 = vmatmul.bf16.gmra.mxu0 %v795
        %v900 = vpop.f32.mrf.mxu0
        %v901 = vadd.f32 %v610, %v900
        %v902 = vpop.f32.mrf.mxu0
        %v903 = vadd.f32 %v610, %v902
        %904 = vmatmul.bf16.gmra.mxu0 %v798
        %v905 = vpop.f32.mrf.mxu0
        %v906 = vadd.f32 %v610, %v905
        %v907 = vpop.f32.mrf.mxu0
        %v908 = vadd.f32 %v610, %v907
        %909 = vmatmul.bf16.gmra.mxu0 %v801
        %v910 = vpop.f32.mrf.mxu0
        %v911 = vadd.f32 %v610, %v910
        %v912 = vpop.f32.mrf.mxu0
        %v913 = vadd.f32 %v610, %v912
        %914 = vmatmul.bf16.gmra.mxu0 %v804
        %v915 = vpop.f32.mrf.mxu0
        %v916 = vadd.f32 %v610, %v915
        %v917 = vpop.f32.mrf.mxu0
        %v918 = vadd.f32 %v610, %v917
        %919 = vmatmul.bf16.gmra.mxu0 %v807
        %v920 = vpop.f32.mrf.mxu0
        %v921 = vadd.f32 %v610, %v920
        %v922 = vpop.f32.mrf.mxu0
        %v923 = vadd.f32 %v610, %v922
        %924 = vmatmul.bf16.gmra.mxu0 %v810
        %v925 = vpop.f32.mrf.mxu0
        %v926 = vadd.f32 %v610, %v925
        %v927 = vpop.f32.mrf.mxu0
        %v928 = vadd.f32 %v610, %v927
        %929 = vmatmul.bf16.gmra.mxu0 %v813
        %v930 = vpop.f32.mrf.mxu0
        %v931 = vadd.f32 %v610, %v930
        %v932 = vpop.f32.mrf.mxu0
        %v933 = vadd.f32 %v610, %v932
        %934 = vmatmul.bf16.gmra.mxu0 %v816
        %v935 = vpop.f32.mrf.mxu0
        %v936 = vadd.f32 %v610, %v935
        %v937 = vpop.f32.mrf.mxu0
        %v938 = vadd.f32 %v610, %v937
        %939 = vmatmul.bf16.gmra.mxu0 %v819
        %v940 = vpop.f32.mrf.mxu0
        %v941 = vadd.f32 %v610, %v940
        %v942 = vpop.f32.mrf.mxu0
        %v943 = vadd.f32 %v610, %v942
        %944 = vmatmul.bf16.gmra.mxu0 %v822
        %v945 = vpop.f32.mrf.mxu0
        %v946 = vadd.f32 %v610, %v945
        %v947 = vpop.f32.mrf.mxu0
        %948 = vdwg.mxu0
        %949 = vmatpush.bf16.msra.mxu0 0
        %950 = vmatpush.bf16.msra.mxu0 0
        %951 = vmatpush.bf16.msra.mxu0 0
        %952 = vmatpush.bf16.msra.mxu0 0
        %953 = vmatpush.bf16.msra.mxu0 %v829
        %954 = vmatpush.bf16.msra.mxu0 %v748
        %955 = vmatpush.bf16.msra.mxu0 %v746
        %956 = vmatpush.bf16.msra.mxu0 %v744
        %957 = vmatmul.bf16.gmra.mxu0 %v759
        %v958 = vpop.f32.mrf.mxu0
        %v959 = vadd.f32 %v611, %v958
        %v960 = vpop.f32.mrf.mxu0
        %v961 = vadd.f32 %v611, %v960
        %962 = vmatmul.bf16.gmra.mxu0 %v762
        %v963 = vpop.f32.mrf.mxu0
        %v964 = vadd.f32 %v611, %v963
        %v965 = vpop.f32.mrf.mxu0
        %v966 = vadd.f32 %v611, %v965
        %967 = vmatmul.bf16.gmra.mxu0 %v765
        %v968 = vpop.f32.mrf.mxu0
        %v969 = vadd.f32 %v611, %v968
        %v970 = vpop.f32.mrf.mxu0
        %v971 = vadd.f32 %v611, %v970
        %972 = vmatmul.bf16.gmra.mxu0 %v768
        %v973 = vpop.f32.mrf.mxu0
        %v974 = vadd.f32 %v611, %v973
        %v975 = vpop.f32.mrf.mxu0
        %v976 = vadd.f32 %v611, %v975
        %977 = vmatmul.bf16.gmra.mxu0 %v771
        %v978 = vpop.f32.mrf.mxu0
        %v979 = vadd.f32 %v611, %v978
        %v980 = vpop.f32.mrf.mxu0
        %v981 = vadd.f32 %v611, %v980
        %982 = vmatmul.bf16.gmra.mxu0 %v774
        %v983 = vpop.f32.mrf.mxu0
        %v984 = vadd.f32 %v611, %v983
        %v985 = vpop.f32.mrf.mxu0
        %v986 = vadd.f32 %v611, %v985
        %987 = vmatmul.bf16.gmra.mxu0 %v777
        %v988 = vpop.f32.mrf.mxu0
        %v989 = vadd.f32 %v611, %v988
        %v990 = vpop.f32.mrf.mxu0
        %v991 = vadd.f32 %v611, %v990
        %992 = vmatmul.bf16.gmra.mxu0 %v780
        %v993 = vpop.f32.mrf.mxu0
        %v994 = vadd.f32 %v611, %v993
        %v995 = vpop.f32.mrf.mxu0
        %v996 = vadd.f32 %v611, %v995
        %997 = vmatmul.bf16.gmra.mxu0 %v783
        %v998 = vpop.f32.mrf.mxu0
        %v999 = vadd.f32 %v611, %v998
        %v1000 = vpop.f32.mrf.mxu0
        %v1001 = vadd.f32 %v611, %v1000
        %1002 = vmatmul.bf16.gmra.mxu0 %v786
        %v1003 = vpop.f32.mrf.mxu0
        %v1004 = vadd.f32 %v611, %v1003
        %v1005 = vpop.f32.mrf.mxu0
        %v1006 = vadd.f32 %v611, %v1005
        %1007 = vmatmul.bf16.gmra.mxu0 %v789
        %v1008 = vpop.f32.mrf.mxu0
        %v1009 = vadd.f32 %v611, %v1008
        %v1010 = vpop.f32.mrf.mxu0
        %v1011 = vadd.f32 %v611, %v1010
        %1012 = vmatmul.bf16.gmra.mxu0 %v792
        %v1013 = vpop.f32.mrf.mxu0
        %v1014 = vadd.f32 %v611, %v1013
        %v1015 = vpop.f32.mrf.mxu0
        %v1016 = vadd.f32 %v611, %v1015
        %1017 = vmatmul.bf16.gmra.mxu0 %v795
        %v1018 = vpop.f32.mrf.mxu0
        %v1019 = vadd.f32 %v611, %v1018
        %v1020 = vpop.f32.mrf.mxu0
        %v1021 = vadd.f32 %v611, %v1020
        %1022 = vmatmul.bf16.gmra.mxu0 %v798
        %v1023 = vpop.f32.mrf.mxu0
        %v1024 = vadd.f32 %v611, %v1023
        %v1025 = vpop.f32.mrf.mxu0
        %v1026 = vadd.f32 %v611, %v1025
        %1027 = vmatmul.bf16.gmra.mxu0 %v801
        %v1028 = vpop.f32.mrf.mxu0
        %v1029 = vadd.f32 %v611, %v1028
        %v1030 = vpop.f32.mrf.mxu0
        %v1031 = vadd.f32 %v611, %v1030
        %1032 = vmatmul.bf16.gmra.mxu0 %v804
        %v1033 = vpop.f32.mrf.mxu0
        %v1034 = vadd.f32 %v611, %v1033
        %v1035 = vpop.f32.mrf.mxu0
        %v1036 = vadd.f32 %v611, %v1035
        %1037 = vmatmul.bf16.gmra.mxu0 %v807
        %v1038 = vpop.f32.mrf.mxu0
        %v1039 = vadd.f32 %v611, %v1038
        %v1040 = vpop.f32.mrf.mxu0
        %v1041 = vadd.f32 %v611, %v1040
        %1042 = vmatmul.bf16.gmra.mxu0 %v810
        %v1043 = vpop.f32.mrf.mxu0
        %v1044 = vadd.f32 %v611, %v1043
        %v1045 = vpop.f32.mrf.mxu0
        %v1046 = vadd.f32 %v611, %v1045
        %1047 = vmatmul.bf16.gmra.mxu0 %v813
        %v1048 = vpop.f32.mrf.mxu0
        %v1049 = vadd.f32 %v611, %v1048
        %v1050 = vpop.f32.mrf.mxu0
        %v1051 = vadd.f32 %v611, %v1050
        %1052 = vmatmul.bf16.gmra.mxu0 %v816
        %v1053 = vpop.f32.mrf.mxu0
        %v1054 = vadd.f32 %v611, %v1053
        %v1055 = vpop.f32.mrf.mxu0
        %v1056 = vadd.f32 %v611, %v1055
        %1057 = vmatmul.bf16.gmra.mxu0 %v819
        %v1058 = vpop.f32.mrf.mxu0
        %v1059 = vadd.f32 %v611, %v1058
        %v1060 = vpop.f32.mrf.mxu0
        %v1061 = vadd.f32 %v611, %v1060
        %1062 = vmatmul.bf16.gmra.mxu0 %v822
        %v1063 = vpop.f32.mrf.mxu0
        %v1064 = vadd.f32 %v611, %v1063
        %v1065 = vpop.f32.mrf.mxu0
        %1066 = vdwg.mxu0
        %s1067 = scalar_lea.vmem %s529, 172 [#allocation2]
        %v1068 = vld [vmem:[%s1067] sm:$0xf]
        %v1069 = vld [vmem:[%s1067 + $0x4] sm:$0xf]
        %v1070 = vld [vmem:[%s1067 + $0x8] sm:$0xf]
        %v1071 = vld [vmem:[%s1067 + $0xc] sm:$0xf]
        %v1072 = vld [vmem:[%s1067 + $0x10] sm:$0xf]
        %v1073 = vld [vmem:[%s1067 + $0x14] sm:$0xf]
        %v1074 = vld [vmem:[%s1067 + $0x18] sm:$0xf]
        %v1075 = vld [vmem:[%s1067 + $0x1c] sm:$0xf]
        %v1076 = vld [vmem:[%s1067 + $0x20] sm:$0xf]
        %v1077 = vld [vmem:[%s1067 + $0x24] sm:$0xf]
        %v1078 = vld [vmem:[%s1067 + $0x28] sm:$0xf]
        %v1079 = vld [vmem:[%s1067 + $0x2c] sm:$0xf]
        %v1080 = vld [vmem:[%s1067 + $0x30] sm:$0xf]
        %v1081 = vld [vmem:[%s1067 + $0x34] sm:$0xf]
        %v1082 = vld [vmem:[%s1067 + $0x38] sm:$0xf]
        %v1083 = vld [vmem:[%s1067 + $0x3c] sm:$0xf]
        %v1084 = vld [vmem:[%s1067 + $0x40] sm:$0xf]
        %v1085 = vld [vmem:[%s1067 + $0x44] sm:$0xf]
        %v1086 = vld [vmem:[%s1067 + $0x48] sm:$0xf]
        %v1087 = vld [vmem:[%s1067 + $0x4c] sm:$0xf]
        %v1088 = vld [vmem:[%s1067 + $0x50] sm:$0xf]
        %v1089 = vld [vmem:[%s1067 + $0x54] sm:$0xf]
        %v1090 = vld [vmem:[%s1067 + $0x58] sm:$0xf]
        %v1091 = vld [vmem:[%s1067 + $0x5c] sm:$0xf]
        %v1092 = vld [vmem:[%s1067 + $0x60] sm:$0xf]
        %v1093 = vld [vmem:[%s1067 + $0x64] sm:$0xf]
        %v1094 = vld [vmem:[%s1067 + $0x68] sm:$0xf]
        %v1095 = vld [vmem:[%s1067 + $0x6c] sm:$0xf]
        %v1096 = vld [vmem:[%s1067 + $0x70] sm:$0xf]
        %v1097 = vld [vmem:[%s1067 + $0x74] sm:$0xf]
        %v1098 = vld [vmem:[%s1067 + $0x78] sm:$0xf]
        %v1099 = vld [vmem:[%s1067 + $0x7c] sm:$0xf]
        %v1100 = vld [vmem:[%s1067 + $0x80] sm:$0xf]
        %v1101 = vld [vmem:[%s1067 + $0x84] sm:$0xf]
        %v1102 = vld [vmem:[%s1067 + $0x88] sm:$0xf]
        %v1103 = vld [vmem:[%s1067 + $0x8c] sm:$0xf]
        %v1104 = vld [vmem:[%s1067 + $0x90] sm:$0xf]
        %v1105 = vld [vmem:[%s1067 + $0x94] sm:$0xf]
        %v1106 = vld [vmem:[%s1067 + $0x98] sm:$0xf]
        %v1107 = vld [vmem:[%s1067 + $0x9c] sm:$0xf]
        %v1108 = vld [vmem:[%s1067 + $0xa0] sm:$0xf]
        %v1109 = vld [vmem:[%s1067 + $0xa4] sm:$0xf]
        %v1110 = vld [vmem:[%s1067 + $0xa8] sm:$0xf]
        %v1154 = vunpack.c.l.b16 %v1068
        %v1155 = vunpack.c.l.b16 %v1069
        %v1156 = vunpack.c.l.b16 %v1070
        %v1157 = vunpack.c.l.b16 %v1071
        %v1158 = vunpack.c.l.b16 %v1072
        %v1159 = vunpack.c.l.b16 %v1073
        %v1160 = vunpack.c.l.b16 %v1074
        %v1161 = vunpack.c.l.b16 %v1075
        %v1162 = vunpack.c.l.b16 %v1076
        %v1163 = vunpack.c.l.b16 %v1077
        %v1164 = vunpack.c.l.b16 %v1078
        %v1165 = vunpack.c.l.b16 %v1079
        %v1166 = vunpack.c.l.b16 %v1080
        %v1167 = vunpack.c.l.b16 %v1081
        %v1168 = vunpack.c.l.b16 %v1082
        %v1169 = vunpack.c.l.b16 %v1083
        %v1170 = vunpack.c.l.b16 %v1084
        %v1171 = vunpack.c.l.b16 %v1085
        %v1172 = vunpack.c.l.b16 %v1086
        %v1173 = vunpack.c.l.b16 %v1087
        %v1174 = vunpack.c.l.b16 %v1088
        %v1175 = vunpack.c.l.b16 %v1089
        %v1176 = vunpack.c.l.b16 %v1090
        %v1177 = vunpack.c.l.b16 %v1091
        %v1178 = vunpack.c.l.b16 %v1092
        %v1179 = vunpack.c.l.b16 %v1093
        %v1180 = vunpack.c.l.b16 %v1094
        %v1181 = vunpack.c.l.b16 %v1095
        %v1182 = vunpack.c.l.b16 %v1096
        %v1183 = vunpack.c.l.b16 %v1097
        %v1184 = vunpack.c.l.b16 %v1098
        %v1185 = vunpack.c.l.b16 %v1099
        %v1186 = vunpack.c.l.b16 %v1100
        %v1187 = vunpack.c.l.b16 %v1101
        %v1188 = vunpack.c.l.b16 %v1102
        %v1189 = vunpack.c.l.b16 %v1103
        %v1190 = vunpack.c.l.b16 %v1104
        %v1191 = vunpack.c.l.b16 %v1105
        %v1192 = vunpack.c.l.b16 %v1106
        %v1193 = vunpack.c.l.b16 %v1107
        %v1194 = vunpack.c.l.b16 %v1108
        %v1195 = vunpack.c.l.b16 %v1109
        %v1196 = vunpack.c.l.b16 %v1110
        %v1197 = vpack.c.b16 %v1155, %v1154
        %v1198 = vpack.c.b16 %v1157, %v1156
        %v1199 = vpack.c.b16 %v1159, %v1158
        %v1200 = vpack.c.b16 %v1161, %v1160
        %v1201 = vpack.c.b16 %v1163, %v1162
        %v1202 = vpack.c.b16 %v1165, %v1164
        %v1203 = vpack.c.b16 %v1167, %v1166
        %v1204 = vpack.c.b16 %v1169, %v1168
        %v1205 = vpack.c.b16 %v1171, %v1170
        %v1206 = vpack.c.b16 %v1173, %v1172
        %v1207 = vpack.c.b16 %v1175, %v1174
        %v1208 = vpack.c.b16 %v1177, %v1176
        %v1209 = vpack.c.b16 %v1179, %v1178
        %v1210 = vpack.c.b16 %v1181, %v1180
        %v1211 = vpack.c.b16 %v1183, %v1182
        %v1212 = vpack.c.b16 %v1185, %v1184
        %v1213 = vpack.c.b16 %v1187, %v1186
        %v1214 = vpack.c.b16 %v1189, %v1188
        %v1215 = vpack.c.b16 %v1191, %v1190
        %v1216 = vpack.c.b16 %v1193, %v1192
        %v1217 = vpack.c.b16 %v1195, %v1194
        %v1218 = vpack.c.b16 %v1196, %v1196
        %v1220 = vsel %vm757, %v1197, 0
        %v1223 = vsel %vm757, %v1198, 0
        %v1226 = vsel %vm757, %v1199, 0
        %v1229 = vsel %vm757, %v1200, 0
        %v1232 = vsel %vm757, %v1201, 0
        %v1235 = vsel %vm757, %v1202, 0
        %v1238 = vsel %vm757, %v1203, 0
        %v1241 = vsel %vm757, %v1204, 0
        %v1244 = vsel %vm757, %v1205, 0
        %v1247 = vsel %vm757, %v1206, 0
        %v1250 = vsel %vm757, %v1207, 0
        %v1253 = vsel %vm757, %v1208, 0
        %v1256 = vsel %vm757, %v1209, 0
        %v1259 = vsel %vm757, %v1210, 0
        %v1262 = vsel %vm757, %v1211, 0
        %v1265 = vsel %vm757, %v1212, 0
        %v1268 = vsel %vm757, %v1213, 0
        %v1271 = vsel %vm757, %v1214, 0
        %v1274 = vsel %vm757, %v1215, 0
        %v1277 = vsel %vm757, %v1216, 0
        %v1280 = vsel %vm757, %v1217, 0
        %v1283 = vsel %vm757, %v1218, 0
        %1285 = vmatpush.bf16.msra.mxu0 0
        %1286 = vmatpush.bf16.msra.mxu0 0
        %1287 = vmatpush.bf16.msra.mxu0 0
        %1288 = vmatpush.bf16.msra.mxu0 0
        %1289 = vmatpush.bf16.msra.mxu0 %v826
        %1290 = vmatpush.bf16.msra.mxu0 %v747
        %1291 = vmatpush.bf16.msra.mxu0 %v745
        %1292 = vmatpush.bf16.msra.mxu0 %v743
        %1293 = vmatmul.bf16.gmra.mxu0 %v1220
        %v1294 = vpop.f32.mrf.mxu0
        %v1295 = vadd.f32 %v610, %v1294
        %v1296 = vpop.f32.mrf.mxu0
        %v1297 = vadd.f32 %v610, %v1296
        %1298 = vmatmul.bf16.gmra.mxu0 %v1223
        %v1299 = vpop.f32.mrf.mxu0
        %v1300 = vadd.f32 %v610, %v1299
        %v1301 = vpop.f32.mrf.mxu0
        %v1302 = vadd.f32 %v610, %v1301
        %1303 = vmatmul.bf16.gmra.mxu0 %v1226
        %v1304 = vpop.f32.mrf.mxu0
        %v1305 = vadd.f32 %v610, %v1304
        %v1306 = vpop.f32.mrf.mxu0
        %v1307 = vadd.f32 %v610, %v1306
        %1308 = vmatmul.bf16.gmra.mxu0 %v1229
        %v1309 = vpop.f32.mrf.mxu0
        %v1310 = vadd.f32 %v610, %v1309
        %v1311 = vpop.f32.mrf.mxu0
        %v1312 = vadd.f32 %v610, %v1311
        %1313 = vmatmul.bf16.gmra.mxu0 %v1232
        %v1314 = vpop.f32.mrf.mxu0
        %v1315 = vadd.f32 %v610, %v1314
        %v1316 = vpop.f32.mrf.mxu0
        %v1317 = vadd.f32 %v610, %v1316
        %1318 = vmatmul.bf16.gmra.mxu0 %v1235
        %v1319 = vpop.f32.mrf.mxu0
        %v1320 = vadd.f32 %v610, %v1319
        %v1321 = vpop.f32.mrf.mxu0
        %v1322 = vadd.f32 %v610, %v1321
        %1323 = vmatmul.bf16.gmra.mxu0 %v1238
        %v1324 = vpop.f32.mrf.mxu0
        %v1325 = vadd.f32 %v610, %v1324
        %v1326 = vpop.f32.mrf.mxu0
        %v1327 = vadd.f32 %v610, %v1326
        %1328 = vmatmul.bf16.gmra.mxu0 %v1241
        %v1329 = vpop.f32.mrf.mxu0
        %v1330 = vadd.f32 %v610, %v1329
        %v1331 = vpop.f32.mrf.mxu0
        %v1332 = vadd.f32 %v610, %v1331
        %1333 = vmatmul.bf16.gmra.mxu0 %v1244
        %v1334 = vpop.f32.mrf.mxu0
        %v1335 = vadd.f32 %v610, %v1334
        %v1336 = vpop.f32.mrf.mxu0
        %v1337 = vadd.f32 %v610, %v1336
        %1338 = vmatmul.bf16.gmra.mxu0 %v1247
        %v1339 = vpop.f32.mrf.mxu0
        %v1340 = vadd.f32 %v610, %v1339
        %v1341 = vpop.f32.mrf.mxu0
        %v1342 = vadd.f32 %v610, %v1341
        %1343 = vmatmul.bf16.gmra.mxu0 %v1250
        %v1344 = vpop.f32.mrf.mxu0
        %v1345 = vadd.f32 %v610, %v1344
        %v1346 = vpop.f32.mrf.mxu0
        %v1347 = vadd.f32 %v610, %v1346
        %1348 = vmatmul.bf16.gmra.mxu0 %v1253
        %v1349 = vpop.f32.mrf.mxu0
        %v1350 = vadd.f32 %v610, %v1349
        %v1351 = vpop.f32.mrf.mxu0
        %v1352 = vadd.f32 %v610, %v1351
        %1353 = vmatmul.bf16.gmra.mxu0 %v1256
        %v1354 = vpop.f32.mrf.mxu0
        %v1355 = vadd.f32 %v610, %v1354
        %v1356 = vpop.f32.mrf.mxu0
        %v1357 = vadd.f32 %v610, %v1356
        %1358 = vmatmul.bf16.gmra.mxu0 %v1259
        %v1359 = vpop.f32.mrf.mxu0
        %v1360 = vadd.f32 %v610, %v1359
        %v1361 = vpop.f32.mrf.mxu0
        %v1362 = vadd.f32 %v610, %v1361
        %1363 = vmatmul.bf16.gmra.mxu0 %v1262
        %v1364 = vpop.f32.mrf.mxu0
        %v1365 = vadd.f32 %v610, %v1364
        %v1366 = vpop.f32.mrf.mxu0
        %v1367 = vadd.f32 %v610, %v1366
        %1368 = vmatmul.bf16.gmra.mxu0 %v1265
        %v1369 = vpop.f32.mrf.mxu0
        %v1370 = vadd.f32 %v610, %v1369
        %v1371 = vpop.f32.mrf.mxu0
        %v1372 = vadd.f32 %v610, %v1371
        %1373 = vmatmul.bf16.gmra.mxu0 %v1268
        %v1374 = vpop.f32.mrf.mxu0
        %v1375 = vadd.f32 %v610, %v1374
        %v1376 = vpop.f32.mrf.mxu0
        %v1377 = vadd.f32 %v610, %v1376
        %1378 = vmatmul.bf16.gmra.mxu0 %v1271
        %v1379 = vpop.f32.mrf.mxu0
        %v1380 = vadd.f32 %v610, %v1379
        %v1381 = vpop.f32.mrf.mxu0
        %v1382 = vadd.f32 %v610, %v1381
        %1383 = vmatmul.bf16.gmra.mxu0 %v1274
        %v1384 = vpop.f32.mrf.mxu0
        %v1385 = vadd.f32 %v610, %v1384
        %v1386 = vpop.f32.mrf.mxu0
        %v1387 = vadd.f32 %v610, %v1386
        %1388 = vmatmul.bf16.gmra.mxu0 %v1277
        %v1389 = vpop.f32.mrf.mxu0
        %v1390 = vadd.f32 %v610, %v1389
        %v1391 = vpop.f32.mrf.mxu0
        %v1392 = vadd.f32 %v610, %v1391
        %1393 = vmatmul.bf16.gmra.mxu0 %v1280
        %v1394 = vpop.f32.mrf.mxu0
        %v1395 = vadd.f32 %v610, %v1394
        %v1396 = vpop.f32.mrf.mxu0
        %v1397 = vadd.f32 %v610, %v1396
        %1398 = vmatmul.bf16.gmra.mxu0 %v1283
        %v1399 = vpop.f32.mrf.mxu0
        %v1400 = vadd.f32 %v610, %v1399
        %v1401 = vpop.f32.mrf.mxu0
        %1402 = vdwg.mxu0
        %1403 = vmatpush.bf16.msra.mxu0 0
        %1404 = vmatpush.bf16.msra.mxu0 0
        %1405 = vmatpush.bf16.msra.mxu0 0
        %1406 = vmatpush.bf16.msra.mxu0 0
        %1407 = vmatpush.bf16.msra.mxu0 %v829
        %1408 = vmatpush.bf16.msra.mxu0 %v748
        %1409 = vmatpush.bf16.msra.mxu0 %v746
        %1410 = vmatpush.bf16.msra.mxu0 %v744
        %1411 = vmatmul.bf16.gmra.mxu0 %v1220
        %v1412 = vpop.f32.mrf.mxu0
        %v1413 = vadd.f32 %v611, %v1412
        %v1414 = vpop.f32.mrf.mxu0
        %v1415 = vadd.f32 %v611, %v1414
        %1416 = vmatmul.bf16.gmra.mxu0 %v1223
        %v1417 = vpop.f32.mrf.mxu0
        %v1418 = vadd.f32 %v611, %v1417
        %v1419 = vpop.f32.mrf.mxu0
        %v1420 = vadd.f32 %v611, %v1419
        %1421 = vmatmul.bf16.gmra.mxu0 %v1226
        %v1422 = vpop.f32.mrf.mxu0
        %v1423 = vadd.f32 %v611, %v1422
        %v1424 = vpop.f32.mrf.mxu0
        %v1425 = vadd.f32 %v611, %v1424
        %1426 = vmatmul.bf16.gmra.mxu0 %v1229
        %v1427 = vpop.f32.mrf.mxu0
        %v1428 = vadd.f32 %v611, %v1427
        %v1429 = vpop.f32.mrf.mxu0
        %v1430 = vadd.f32 %v611, %v1429
        %1431 = vmatmul.bf16.gmra.mxu0 %v1232
        %v1432 = vpop.f32.mrf.mxu0
        %v1433 = vadd.f32 %v611, %v1432
        %v1434 = vpop.f32.mrf.mxu0
        %v1435 = vadd.f32 %v611, %v1434
        %1436 = vmatmul.bf16.gmra.mxu0 %v1235
        %v1437 = vpop.f32.mrf.mxu0
        %v1438 = vadd.f32 %v611, %v1437
        %v1439 = vpop.f32.mrf.mxu0
        %v1440 = vadd.f32 %v611, %v1439
        %1441 = vmatmul.bf16.gmra.mxu0 %v1238
        %v1442 = vpop.f32.mrf.mxu0
        %v1443 = vadd.f32 %v611, %v1442
        %v1444 = vpop.f32.mrf.mxu0
        %v1445 = vadd.f32 %v611, %v1444
        %1446 = vmatmul.bf16.gmra.mxu0 %v1241
        %v1447 = vpop.f32.mrf.mxu0
        %v1448 = vadd.f32 %v611, %v1447
        %v1449 = vpop.f32.mrf.mxu0
        %v1450 = vadd.f32 %v611, %v1449
        %1451 = vmatmul.bf16.gmra.mxu0 %v1244
        %v1452 = vpop.f32.mrf.mxu0
        %v1453 = vadd.f32 %v611, %v1452
        %v1454 = vpop.f32.mrf.mxu0
        %v1455 = vadd.f32 %v611, %v1454
        %1456 = vmatmul.bf16.gmra.mxu0 %v1247
        %v1457 = vpop.f32.mrf.mxu0
        %v1458 = vadd.f32 %v611, %v1457
        %v1459 = vpop.f32.mrf.mxu0
        %v1460 = vadd.f32 %v611, %v1459
        %1461 = vmatmul.bf16.gmra.mxu0 %v1250
        %v1462 = vpop.f32.mrf.mxu0
        %v1463 = vadd.f32 %v611, %v1462
        %v1464 = vpop.f32.mrf.mxu0
        %v1465 = vadd.f32 %v611, %v1464
        %1466 = vmatmul.bf16.gmra.mxu0 %v1253
        %v1467 = vpop.f32.mrf.mxu0
        %v1468 = vadd.f32 %v611, %v1467
        %v1469 = vpop.f32.mrf.mxu0
        %v1470 = vadd.f32 %v611, %v1469
        %1471 = vmatmul.bf16.gmra.mxu0 %v1256
        %v1472 = vpop.f32.mrf.mxu0
        %v1473 = vadd.f32 %v611, %v1472
        %v1474 = vpop.f32.mrf.mxu0
        %v1475 = vadd.f32 %v611, %v1474
        %1476 = vmatmul.bf16.gmra.mxu0 %v1259
        %v1477 = vpop.f32.mrf.mxu0
        %v1478 = vadd.f32 %v611, %v1477
        %v1479 = vpop.f32.mrf.mxu0
        %v1480 = vadd.f32 %v611, %v1479
        %1481 = vmatmul.bf16.gmra.mxu0 %v1262
        %v1482 = vpop.f32.mrf.mxu0
        %v1483 = vadd.f32 %v611, %v1482
        %v1484 = vpop.f32.mrf.mxu0
        %v1485 = vadd.f32 %v611, %v1484
        %1486 = vmatmul.bf16.gmra.mxu0 %v1265
        %v1487 = vpop.f32.mrf.mxu0
        %v1488 = vadd.f32 %v611, %v1487
        %v1489 = vpop.f32.mrf.mxu0
        %v1490 = vadd.f32 %v611, %v1489
        %1491 = vmatmul.bf16.gmra.mxu0 %v1268
        %v1492 = vpop.f32.mrf.mxu0
        %v1493 = vadd.f32 %v611, %v1492
        %v1494 = vpop.f32.mrf.mxu0
        %v1495 = vadd.f32 %v611, %v1494
        %1496 = vmatmul.bf16.gmra.mxu0 %v1271
        %v1497 = vpop.f32.mrf.mxu0
        %v1498 = vadd.f32 %v611, %v1497
        %v1499 = vpop.f32.mrf.mxu0
        %v1500 = vadd.f32 %v611, %v1499
        %1501 = vmatmul.bf16.gmra.mxu0 %v1274
        %v1502 = vpop.f32.mrf.mxu0
        %v1503 = vadd.f32 %v611, %v1502
        %v1504 = vpop.f32.mrf.mxu0
        %v1505 = vadd.f32 %v611, %v1504
        %1506 = vmatmul.bf16.gmra.mxu0 %v1277
        %v1507 = vpop.f32.mrf.mxu0
        %v1508 = vadd.f32 %v611, %v1507
        %v1509 = vpop.f32.mrf.mxu0
        %v1510 = vadd.f32 %v611, %v1509
        %1511 = vmatmul.bf16.gmra.mxu0 %v1280
        %v1512 = vpop.f32.mrf.mxu0
        %v1513 = vadd.f32 %v611, %v1512
        %v1514 = vpop.f32.mrf.mxu0
        %v1515 = vadd.f32 %v611, %v1514
        %1516 = vmatmul.bf16.gmra.mxu0 %v1283
        %v1517 = vpop.f32.mrf.mxu0
        %v1518 = vadd.f32 %v611, %v1517
        %v1519 = vpop.f32.mrf.mxu0
        %1520 = vdwg.mxu0
        %v1521 = vmax.f32 %v841, %v1295
        %v1522 = vmax.f32 %v959, %v1413
        %v1523 = vmax.f32 %v843, %v1297
        %v1524 = vmax.f32 %v961, %v1415
        %v1525 = vmax.f32 %v846, %v1300
        %v1526 = vmax.f32 %v964, %v1418
        %v1527 = vmax.f32 %v848, %v1302
        %v1528 = vmax.f32 %v966, %v1420
        %v1529 = vmax.f32 %v851, %v1305
        %v1530 = vmax.f32 %v969, %v1423
        %v1531 = vmax.f32 %v853, %v1307
        %v1532 = vmax.f32 %v971, %v1425
        %v1533 = vmax.f32 %v856, %v1310
        %v1534 = vmax.f32 %v974, %v1428
        %v1535 = vmax.f32 %v858, %v1312
        %v1536 = vmax.f32 %v976, %v1430
        %v1537 = vmax.f32 %v861, %v1315
        %v1538 = vmax.f32 %v979, %v1433
        %v1539 = vmax.f32 %v863, %v1317
        %v1540 = vmax.f32 %v981, %v1435
        %v1541 = vmax.f32 %v866, %v1320
        %v1542 = vmax.f32 %v984, %v1438
        %v1543 = vmax.f32 %v868, %v1322
        %v1544 = vmax.f32 %v986, %v1440
        %v1545 = vmax.f32 %v871, %v1325
        %v1546 = vmax.f32 %v989, %v1443
        %v1547 = vmax.f32 %v873, %v1327
        %v1548 = vmax.f32 %v991, %v1445
        %v1549 = vmax.f32 %v876, %v1330
        %v1550 = vmax.f32 %v994, %v1448
        %v1551 = vmax.f32 %v878, %v1332
        %v1552 = vmax.f32 %v996, %v1450
        %v1553 = vmax.f32 %v881, %v1335
        %v1554 = vmax.f32 %v999, %v1453
        %v1555 = vmax.f32 %v883, %v1337
        %v1556 = vmax.f32 %v1001, %v1455
        %v1557 = vmax.f32 %v886, %v1340
        %v1558 = vmax.f32 %v1004, %v1458
        %v1559 = vmax.f32 %v888, %v1342
        %v1560 = vmax.f32 %v1006, %v1460
        %v1561 = vmax.f32 %v891, %v1345
        %v1562 = vmax.f32 %v1009, %v1463
        %v1563 = vmax.f32 %v893, %v1347
        %v1564 = vmax.f32 %v1011, %v1465
        %v1565 = vmax.f32 %v896, %v1350
        %v1566 = vmax.f32 %v1014, %v1468
        %v1567 = vmax.f32 %v898, %v1352
        %v1568 = vmax.f32 %v1016, %v1470
        %v1569 = vmax.f32 %v901, %v1355
        %v1570 = vmax.f32 %v1019, %v1473
        %v1571 = vmax.f32 %v903, %v1357
        %v1572 = vmax.f32 %v1021, %v1475
        %v1573 = vmax.f32 %v906, %v1360
        %v1574 = vmax.f32 %v1024, %v1478
        %v1575 = vmax.f32 %v908, %v1362
        %v1576 = vmax.f32 %v1026, %v1480
        %v1577 = vmax.f32 %v911, %v1365
        %v1578 = vmax.f32 %v1029, %v1483
        %v1579 = vmax.f32 %v913, %v1367
        %v1580 = vmax.f32 %v1031, %v1485
        %v1581 = vmax.f32 %v916, %v1370
        %v1582 = vmax.f32 %v1034, %v1488
        %v1583 = vmax.f32 %v918, %v1372
        %v1584 = vmax.f32 %v1036, %v1490
        %v1585 = vmax.f32 %v921, %v1375
        %v1586 = vmax.f32 %v1039, %v1493
        %v1587 = vmax.f32 %v923, %v1377
        %v1588 = vmax.f32 %v1041, %v1495
        %v1589 = vmax.f32 %v926, %v1380
        %v1590 = vmax.f32 %v1044, %v1498
        %v1591 = vmax.f32 %v928, %v1382
        %v1592 = vmax.f32 %v1046, %v1500
        %v1593 = vmax.f32 %v931, %v1385
        %v1594 = vmax.f32 %v1049, %v1503
        %v1595 = vmax.f32 %v933, %v1387
        %v1596 = vmax.f32 %v1051, %v1505
        %v1597 = vmax.f32 %v936, %v1390
        %v1598 = vmax.f32 %v1054, %v1508
        %v1599 = vmax.f32 %v938, %v1392
        %v1600 = vmax.f32 %v1056, %v1510
        %v1601 = vmax.f32 %v941, %v1395
        %v1602 = vmax.f32 %v1059, %v1513
        %v1603 = vmax.f32 %v943, %v1397
        %v1604 = vmax.f32 %v1061, %v1515
        %v1605 = vmax.f32 %v946, %v1400
        %v1606 = vmax.f32 %v1064, %v1518
        %v1607 = vmax.f32 %v1521, 0.0
        %v1608 = vmax.f32 %v1522, 0.0
        %v1609 = vmax.f32 %v1523, 0.0
        %v1610 = vmax.f32 %v1524, 0.0
        %v1611 = vmax.f32 %v1525, 0.0
        %v1612 = vmax.f32 %v1526, 0.0
        %v1613 = vmax.f32 %v1527, 0.0
        %v1614 = vmax.f32 %v1528, 0.0
        %v1615 = vmax.f32 %v1529, 0.0
        %v1616 = vmax.f32 %v1530, 0.0
        %v1617 = vmax.f32 %v1531, 0.0
        %v1618 = vmax.f32 %v1532, 0.0
        %v1619 = vmax.f32 %v1533, 0.0
        %v1620 = vmax.f32 %v1534, 0.0
        %v1621 = vmax.f32 %v1535, 0.0
        %v1622 = vmax.f32 %v1536, 0.0
        %v1623 = vmax.f32 %v1537, 0.0
        %v1624 = vmax.f32 %v1538, 0.0
        %v1625 = vmax.f32 %v1539, 0.0
        %v1626 = vmax.f32 %v1540, 0.0
        %v1627 = vmax.f32 %v1541, 0.0
        %v1628 = vmax.f32 %v1542, 0.0
        %v1629 = vmax.f32 %v1543, 0.0
        %v1630 = vmax.f32 %v1544, 0.0
        %v1631 = vmax.f32 %v1545, 0.0
        %v1632 = vmax.f32 %v1546, 0.0
        %v1633 = vmax.f32 %v1547, 0.0
        %v1634 = vmax.f32 %v1548, 0.0
        %v1635 = vmax.f32 %v1549, 0.0
        %v1636 = vmax.f32 %v1550, 0.0
        %v1637 = vmax.f32 %v1551, 0.0
        %v1638 = vmax.f32 %v1552, 0.0
        %v1639 = vmax.f32 %v1553, 0.0
        %v1640 = vmax.f32 %v1554, 0.0
        %v1641 = vmax.f32 %v1555, 0.0
        %v1642 = vmax.f32 %v1556, 0.0
        %v1643 = vmax.f32 %v1557, 0.0
        %v1644 = vmax.f32 %v1558, 0.0
        %v1645 = vmax.f32 %v1559, 0.0
        %v1646 = vmax.f32 %v1560, 0.0
        %v1647 = vmax.f32 %v1561, 0.0
        %v1648 = vmax.f32 %v1562, 0.0
        %v1649 = vmax.f32 %v1563, 0.0
        %v1650 = vmax.f32 %v1564, 0.0
        %v1651 = vmax.f32 %v1565, 0.0
        %v1652 = vmax.f32 %v1566, 0.0
        %v1653 = vmax.f32 %v1567, 0.0
        %v1654 = vmax.f32 %v1568, 0.0
        %v1655 = vmax.f32 %v1569, 0.0
        %v1656 = vmax.f32 %v1570, 0.0
        %v1657 = vmax.f32 %v1571, 0.0
        %v1658 = vmax.f32 %v1572, 0.0
        %v1659 = vmax.f32 %v1573, 0.0
        %v1660 = vmax.f32 %v1574, 0.0
        %v1661 = vmax.f32 %v1575, 0.0
        %v1662 = vmax.f32 %v1576, 0.0
        %v1663 = vmax.f32 %v1577, 0.0
        %v1664 = vmax.f32 %v1578, 0.0
        %v1665 = vmax.f32 %v1579, 0.0
        %v1666 = vmax.f32 %v1580, 0.0
        %v1667 = vmax.f32 %v1581, 0.0
        %v1668 = vmax.f32 %v1582, 0.0
        %v1669 = vmax.f32 %v1583, 0.0
        %v1670 = vmax.f32 %v1584, 0.0
        %v1671 = vmax.f32 %v1585, 0.0
        %v1672 = vmax.f32 %v1586, 0.0
        %v1673 = vmax.f32 %v1587, 0.0
        %v1674 = vmax.f32 %v1588, 0.0
        %v1675 = vmax.f32 %v1589, 0.0
        %v1676 = vmax.f32 %v1590, 0.0
        %v1677 = vmax.f32 %v1591, 0.0
        %v1678 = vmax.f32 %v1592, 0.0
        %v1679 = vmax.f32 %v1593, 0.0
        %v1680 = vmax.f32 %v1594, 0.0
        %v1681 = vmax.f32 %v1595, 0.0
        %v1682 = vmax.f32 %v1596, 0.0
        %v1683 = vmax.f32 %v1597, 0.0
        %v1684 = vmax.f32 %v1598, 0.0
        %v1685 = vmax.f32 %v1599, 0.0
        %v1686 = vmax.f32 %v1600, 0.0
        %v1687 = vmax.f32 %v1601, 0.0
        %v1688 = vmax.f32 %v1602, 0.0
        %v1689 = vmax.f32 %v1603, 0.0
        %v1690 = vmax.f32 %v1604, 0.0
        %v1691 = vmax.f32 %v1605, 0.0
        %v1692 = vmax.f32 %v1606, 0.0
        %1736 = vrot.lane.b32.xlu0 %v1607, 64
        %v1737 = vpop.permute.xlu0 %1736
        %1738 = vrot.lane.b32.xlu0 %v1609, 64
        %v1739 = vpop.permute.xlu0 %1738
        %1740 = vrot.lane.b32.xlu0 %v1611, 64
        %v1741 = vpop.permute.xlu0 %1740
        %1742 = vrot.lane.b32.xlu0 %v1613, 64
        %v1743 = vpop.permute.xlu0 %1742
        %1744 = vrot.lane.b32.xlu0 %v1615, 64
        %v1745 = vpop.permute.xlu0 %1744
        %1746 = vrot.lane.b32.xlu0 %v1617, 64
        %v1747 = vpop.permute.xlu0 %1746
        %1748 = vrot.lane.b32.xlu0 %v1619, 64
        %v1749 = vpop.permute.xlu0 %1748
        %1750 = vrot.lane.b32.xlu0 %v1621, 64
        %v1751 = vpop.permute.xlu0 %1750
        %1752 = vrot.lane.b32.xlu0 %v1623, 64
        %v1753 = vpop.permute.xlu0 %1752
        %1754 = vrot.lane.b32.xlu0 %v1625, 64
        %v1755 = vpop.permute.xlu0 %1754
        %1756 = vrot.lane.b32.xlu0 %v1627, 64
        %v1757 = vpop.permute.xlu0 %1756
        %1758 = vrot.lane.b32.xlu0 %v1629, 64
        %v1759 = vpop.permute.xlu0 %1758
        %1760 = vrot.lane.b32.xlu0 %v1631, 64
        %v1761 = vpop.permute.xlu0 %1760
        %1762 = vrot.lane.b32.xlu0 %v1633, 64
        %v1763 = vpop.permute.xlu0 %1762
        %1764 = vrot.lane.b32.xlu0 %v1635, 64
        %v1765 = vpop.permute.xlu0 %1764
        %1766 = vrot.lane.b32.xlu0 %v1637, 64
        %v1767 = vpop.permute.xlu0 %1766
        %1768 = vrot.lane.b32.xlu0 %v1639, 64
        %v1769 = vpop.permute.xlu0 %1768
        %1770 = vrot.lane.b32.xlu0 %v1641, 64
        %v1771 = vpop.permute.xlu0 %1770
        %1772 = vrot.lane.b32.xlu0 %v1643, 64
        %v1773 = vpop.permute.xlu0 %1772
        %1774 = vrot.lane.b32.xlu0 %v1645, 64
        %v1775 = vpop.permute.xlu0 %1774
        %1776 = vrot.lane.b32.xlu0 %v1647, 64
        %v1777 = vpop.permute.xlu0 %1776
        %1778 = vrot.lane.b32.xlu0 %v1649, 64
        %v1779 = vpop.permute.xlu0 %1778
        %1780 = vrot.lane.b32.xlu0 %v1651, 64
        %v1781 = vpop.permute.xlu0 %1780
        %1782 = vrot.lane.b32.xlu0 %v1653, 64
        %v1783 = vpop.permute.xlu0 %1782
        %1784 = vrot.lane.b32.xlu0 %v1655, 64
        %v1785 = vpop.permute.xlu0 %1784
        %1786 = vrot.lane.b32.xlu0 %v1657, 64
        %v1787 = vpop.permute.xlu0 %1786
        %1788 = vrot.lane.b32.xlu0 %v1659, 64
        %v1789 = vpop.permute.xlu0 %1788
        %1790 = vrot.lane.b32.xlu0 %v1661, 64
        %v1791 = vpop.permute.xlu0 %1790
        %1792 = vrot.lane.b32.xlu0 %v1663, 64
        %v1793 = vpop.permute.xlu0 %1792
        %1794 = vrot.lane.b32.xlu0 %v1665, 64
        %v1795 = vpop.permute.xlu0 %1794
        %1796 = vrot.lane.b32.xlu0 %v1667, 64
        %v1797 = vpop.permute.xlu0 %1796
        %1798 = vrot.lane.b32.xlu0 %v1669, 64
        %v1799 = vpop.permute.xlu0 %1798
        %1800 = vrot.lane.b32.xlu0 %v1671, 64
        %v1801 = vpop.permute.xlu0 %1800
        %1802 = vrot.lane.b32.xlu0 %v1673, 64
        %v1803 = vpop.permute.xlu0 %1802
        %1804 = vrot.lane.b32.xlu0 %v1675, 64
        %v1805 = vpop.permute.xlu0 %1804
        %1806 = vrot.lane.b32.xlu0 %v1677, 64
        %v1807 = vpop.permute.xlu0 %1806
        %1808 = vrot.lane.b32.xlu0 %v1679, 64
        %v1809 = vpop.permute.xlu0 %1808
        %1810 = vrot.lane.b32.xlu0 %v1681, 64
        %v1811 = vpop.permute.xlu0 %1810
        %1812 = vrot.lane.b32.xlu0 %v1683, 64
        %v1813 = vpop.permute.xlu0 %1812
        %1814 = vrot.lane.b32.xlu0 %v1685, 64
        %v1815 = vpop.permute.xlu0 %1814
        %1816 = vrot.lane.b32.xlu0 %v1687, 64
        %v1817 = vpop.permute.xlu0 %1816
        %1818 = vrot.lane.b32.xlu0 %v1689, 64
        %v1819 = vpop.permute.xlu0 %1818
        %1820 = vrot.lane.b32.xlu0 %v1691, 64
        %v1821 = vpop.permute.xlu0 %1820
        %v1865 = vmax.f32 %v1607, %v1737
        %v1866 = vmax.f32 %v1609, %v1739
        %v1867 = vmax.f32 %v1611, %v1741
        %v1868 = vmax.f32 %v1613, %v1743
        %v1869 = vmax.f32 %v1615, %v1745
        %v1870 = vmax.f32 %v1617, %v1747
        %v1871 = vmax.f32 %v1619, %v1749
        %v1872 = vmax.f32 %v1621, %v1751
        %v1873 = vmax.f32 %v1623, %v1753
        %v1874 = vmax.f32 %v1625, %v1755
        %v1875 = vmax.f32 %v1627, %v1757
        %v1876 = vmax.f32 %v1629, %v1759
        %v1877 = vmax.f32 %v1631, %v1761
        %v1878 = vmax.f32 %v1633, %v1763
        %v1879 = vmax.f32 %v1635, %v1765
        %v1880 = vmax.f32 %v1637, %v1767
        %v1881 = vmax.f32 %v1639, %v1769
        %v1882 = vmax.f32 %v1641, %v1771
        %v1883 = vmax.f32 %v1643, %v1773
        %v1884 = vmax.f32 %v1645, %v1775
        %v1885 = vmax.f32 %v1647, %v1777
        %v1886 = vmax.f32 %v1649, %v1779
        %v1887 = vmax.f32 %v1651, %v1781
        %v1888 = vmax.f32 %v1653, %v1783
        %v1889 = vmax.f32 %v1655, %v1785
        %v1890 = vmax.f32 %v1657, %v1787
        %v1891 = vmax.f32 %v1659, %v1789
        %v1892 = vmax.f32 %v1661, %v1791
        %v1893 = vmax.f32 %v1663, %v1793
        %v1894 = vmax.f32 %v1665, %v1795
        %v1895 = vmax.f32 %v1667, %v1797
        %v1896 = vmax.f32 %v1669, %v1799
        %v1897 = vmax.f32 %v1671, %v1801
        %v1898 = vmax.f32 %v1673, %v1803
        %v1899 = vmax.f32 %v1675, %v1805
        %v1900 = vmax.f32 %v1677, %v1807
        %v1901 = vmax.f32 %v1679, %v1809
        %v1902 = vmax.f32 %v1681, %v1811
        %v1903 = vmax.f32 %v1683, %v1813
        %v1904 = vmax.f32 %v1685, %v1815
        %v1905 = vmax.f32 %v1687, %v1817
        %v1906 = vmax.f32 %v1689, %v1819
        %v1907 = vmax.f32 %v1691, %v1821
        %1951 = vrot.lane.b32.xlu0 %v1608, 64
        %v1952 = vpop.permute.xlu0 %1951
        %1953 = vrot.lane.b32.xlu0 %v1610, 64
        %v1954 = vpop.permute.xlu0 %1953
        %1955 = vrot.lane.b32.xlu0 %v1612, 64
        %v1956 = vpop.permute.xlu0 %1955
        %1957 = vrot.lane.b32.xlu0 %v1614, 64
        %v1958 = vpop.permute.xlu0 %1957
        %1959 = vrot.lane.b32.xlu0 %v1616, 64
        %v1960 = vpop.permute.xlu0 %1959
        %1961 = vrot.lane.b32.xlu0 %v1618, 64
        %v1962 = vpop.permute.xlu0 %1961
        %1963 = vrot.lane.b32.xlu0 %v1620, 64
        %v1964 = vpop.permute.xlu0 %1963
        %1965 = vrot.lane.b32.xlu0 %v1622, 64
        %v1966 = vpop.permute.xlu0 %1965
        %1967 = vrot.lane.b32.xlu0 %v1624, 64
        %v1968 = vpop.permute.xlu0 %1967
        %1969 = vrot.lane.b32.xlu0 %v1626, 64
        %v1970 = vpop.permute.xlu0 %1969
        %1971 = vrot.lane.b32.xlu0 %v1628, 64
        %v1972 = vpop.permute.xlu0 %1971
        %1973 = vrot.lane.b32.xlu0 %v1630, 64
        %v1974 = vpop.permute.xlu0 %1973
        %1975 = vrot.lane.b32.xlu0 %v1632, 64
        %v1976 = vpop.permute.xlu0 %1975
        %1977 = vrot.lane.b32.xlu0 %v1634, 64
        %v1978 = vpop.permute.xlu0 %1977
        %1979 = vrot.lane.b32.xlu0 %v1636, 64
        %v1980 = vpop.permute.xlu0 %1979
        %1981 = vrot.lane.b32.xlu0 %v1638, 64
        %v1982 = vpop.permute.xlu0 %1981
        %1983 = vrot.lane.b32.xlu0 %v1640, 64
        %v1984 = vpop.permute.xlu0 %1983
        %1985 = vrot.lane.b32.xlu0 %v1642, 64
        %v1986 = vpop.permute.xlu0 %1985
        %1987 = vrot.lane.b32.xlu0 %v1644, 64
        %v1988 = vpop.permute.xlu0 %1987
        %1989 = vrot.lane.b32.xlu0 %v1646, 64
        %v1990 = vpop.permute.xlu0 %1989
        %1991 = vrot.lane.b32.xlu0 %v1648, 64
        %v1992 = vpop.permute.xlu0 %1991
        %1993 = vrot.lane.b32.xlu0 %v1650, 64
        %v1994 = vpop.permute.xlu0 %1993
        %1995 = vrot.lane.b32.xlu0 %v1652, 64
        %v1996 = vpop.permute.xlu0 %1995
        %1997 = vrot.lane.b32.xlu0 %v1654, 64
        %v1998 = vpop.permute.xlu0 %1997
        %1999 = vrot.lane.b32.xlu0 %v1656, 64
        %v2000 = vpop.permute.xlu0 %1999
        %2001 = vrot.lane.b32.xlu0 %v1658, 64
        %v2002 = vpop.permute.xlu0 %2001
        %2003 = vrot.lane.b32.xlu0 %v1660, 64
        %v2004 = vpop.permute.xlu0 %2003
        %2005 = vrot.lane.b32.xlu0 %v1662, 64
        %v2006 = vpop.permute.xlu0 %2005
        %2007 = vrot.lane.b32.xlu0 %v1664, 64
        %v2008 = vpop.permute.xlu0 %2007
        %2009 = vrot.lane.b32.xlu0 %v1666, 64
        %v2010 = vpop.permute.xlu0 %2009
        %2011 = vrot.lane.b32.xlu0 %v1668, 64
        %v2012 = vpop.permute.xlu0 %2011
        %2013 = vrot.lane.b32.xlu0 %v1670, 64
        %v2014 = vpop.permute.xlu0 %2013
        %2015 = vrot.lane.b32.xlu0 %v1672, 64
        %v2016 = vpop.permute.xlu0 %2015
        %2017 = vrot.lane.b32.xlu0 %v1674, 64
        %v2018 = vpop.permute.xlu0 %2017
        %2019 = vrot.lane.b32.xlu0 %v1676, 64
        %v2020 = vpop.permute.xlu0 %2019
        %2021 = vrot.lane.b32.xlu0 %v1678, 64
        %v2022 = vpop.permute.xlu0 %2021
        %2023 = vrot.lane.b32.xlu0 %v1680, 64
        %v2024 = vpop.permute.xlu0 %2023
        %2025 = vrot.lane.b32.xlu0 %v1682, 64
        %v2026 = vpop.permute.xlu0 %2025
        %2027 = vrot.lane.b32.xlu0 %v1684, 64
        %v2028 = vpop.permute.xlu0 %2027
        %2029 = vrot.lane.b32.xlu0 %v1686, 64
        %v2030 = vpop.permute.xlu0 %2029
        %2031 = vrot.lane.b32.xlu0 %v1688, 64
        %v2032 = vpop.permute.xlu0 %2031
        %2033 = vrot.lane.b32.xlu0 %v1690, 64
        %v2034 = vpop.permute.xlu0 %2033
        %2035 = vrot.lane.b32.xlu0 %v1692, 64
        %v2036 = vpop.permute.xlu0 %2035
        %v2080 = vmax.f32 %v1608, %v1952
        %v2081 = vmax.f32 %v1610, %v1954
        %v2082 = vmax.f32 %v1612, %v1956
        %v2083 = vmax.f32 %v1614, %v1958
        %v2084 = vmax.f32 %v1616, %v1960
        %v2085 = vmax.f32 %v1618, %v1962
        %v2086 = vmax.f32 %v1620, %v1964
        %v2087 = vmax.f32 %v1622, %v1966
        %v2088 = vmax.f32 %v1624, %v1968
        %v2089 = vmax.f32 %v1626, %v1970
        %v2090 = vmax.f32 %v1628, %v1972
        %v2091 = vmax.f32 %v1630, %v1974
        %v2092 = vmax.f32 %v1632, %v1976
        %v2093 = vmax.f32 %v1634, %v1978
        %v2094 = vmax.f32 %v1636, %v1980
        %v2095 = vmax.f32 %v1638, %v1982
        %v2096 = vmax.f32 %v1640, %v1984
        %v2097 = vmax.f32 %v1642, %v1986
        %v2098 = vmax.f32 %v1644, %v1988
        %v2099 = vmax.f32 %v1646, %v1990
        %v2100 = vmax.f32 %v1648, %v1992
        %v2101 = vmax.f32 %v1650, %v1994
        %v2102 = vmax.f32 %v1652, %v1996
        %v2103 = vmax.f32 %v1654, %v1998
        %v2104 = vmax.f32 %v1656, %v2000
        %v2105 = vmax.f32 %v1658, %v2002
        %v2106 = vmax.f32 %v1660, %v2004
        %v2107 = vmax.f32 %v1662, %v2006
        %v2108 = vmax.f32 %v1664, %v2008
        %v2109 = vmax.f32 %v1666, %v2010
        %v2110 = vmax.f32 %v1668, %v2012
        %v2111 = vmax.f32 %v1670, %v2014
        %v2112 = vmax.f32 %v1672, %v2016
        %v2113 = vmax.f32 %v1674, %v2018
        %v2114 = vmax.f32 %v1676, %v2020
        %v2115 = vmax.f32 %v1678, %v2022
        %v2116 = vmax.f32 %v1680, %v2024
        %v2117 = vmax.f32 %v1682, %v2026
        %v2118 = vmax.f32 %v1684, %v2028
        %v2119 = vmax.f32 %v1686, %v2030
        %v2120 = vmax.f32 %v1688, %v2032
        %v2121 = vmax.f32 %v1690, %v2034
        %v2122 = vmax.f32 %v1692, %v2036
        %2166 = vrot.lane.b32.xlu0 %v2080, 64
        %v2167 = vpop.permute.xlu0 %2166
        %2168 = vrot.lane.b32.xlu0 %v2081, 64
        %v2169 = vpop.permute.xlu0 %2168
        %2170 = vrot.lane.b32.xlu0 %v2082, 64
        %v2171 = vpop.permute.xlu0 %2170
        %2172 = vrot.lane.b32.xlu0 %v2083, 64
        %v2173 = vpop.permute.xlu0 %2172
        %2174 = vrot.lane.b32.xlu0 %v2084, 64
        %v2175 = vpop.permute.xlu0 %2174
        %2176 = vrot.lane.b32.xlu0 %v2085, 64
        %v2177 = vpop.permute.xlu0 %2176
        %2178 = vrot.lane.b32.xlu0 %v2086, 64
        %v2179 = vpop.permute.xlu0 %2178
        %2180 = vrot.lane.b32.xlu0 %v2087, 64
        %v2181 = vpop.permute.xlu0 %2180
        %2182 = vrot.lane.b32.xlu0 %v2088, 64
        %v2183 = vpop.permute.xlu0 %2182
        %2184 = vrot.lane.b32.xlu0 %v2089, 64
        %v2185 = vpop.permute.xlu0 %2184
        %2186 = vrot.lane.b32.xlu0 %v2090, 64
        %v2187 = vpop.permute.xlu0 %2186
        %2188 = vrot.lane.b32.xlu0 %v2091, 64
        %v2189 = vpop.permute.xlu0 %2188
        %2190 = vrot.lane.b32.xlu0 %v2092, 64
        %v2191 = vpop.permute.xlu0 %2190
        %2192 = vrot.lane.b32.xlu0 %v2093, 64
        %v2193 = vpop.permute.xlu0 %2192
        %2194 = vrot.lane.b32.xlu0 %v2094, 64
        %v2195 = vpop.permute.xlu0 %2194
        %2196 = vrot.lane.b32.xlu0 %v2095, 64
        %v2197 = vpop.permute.xlu0 %2196
        %2198 = vrot.lane.b32.xlu0 %v2096, 64
        %v2199 = vpop.permute.xlu0 %2198
        %2200 = vrot.lane.b32.xlu0 %v2097, 64
        %v2201 = vpop.permute.xlu0 %2200
        %2202 = vrot.lane.b32.xlu0 %v2098, 64
        %v2203 = vpop.permute.xlu0 %2202
        %2204 = vrot.lane.b32.xlu0 %v2099, 64
        %v2205 = vpop.permute.xlu0 %2204
        %2206 = vrot.lane.b32.xlu0 %v2100, 64
        %v2207 = vpop.permute.xlu0 %2206
        %2208 = vrot.lane.b32.xlu0 %v2101, 64
        %v2209 = vpop.permute.xlu0 %2208
        %2210 = vrot.lane.b32.xlu0 %v2102, 64
        %v2211 = vpop.permute.xlu0 %2210
        %2212 = vrot.lane.b32.xlu0 %v2103, 64
        %v2213 = vpop.permute.xlu0 %2212
        %2214 = vrot.lane.b32.xlu0 %v2104, 64
        %v2215 = vpop.permute.xlu0 %2214
        %2216 = vrot.lane.b32.xlu0 %v2105, 64
        %v2217 = vpop.permute.xlu0 %2216
        %2218 = vrot.lane.b32.xlu0 %v2106, 64
        %v2219 = vpop.permute.xlu0 %2218
        %2220 = vrot.lane.b32.xlu0 %v2107, 64
        %v2221 = vpop.permute.xlu0 %2220
        %2222 = vrot.lane.b32.xlu0 %v2108, 64
        %v2223 = vpop.permute.xlu0 %2222
        %2224 = vrot.lane.b32.xlu0 %v2109, 64
        %v2225 = vpop.permute.xlu0 %2224
        %2226 = vrot.lane.b32.xlu0 %v2110, 64
        %v2227 = vpop.permute.xlu0 %2226
        %2228 = vrot.lane.b32.xlu0 %v2111, 64
        %v2229 = vpop.permute.xlu0 %2228
        %2230 = vrot.lane.b32.xlu0 %v2112, 64
        %v2231 = vpop.permute.xlu0 %2230
        %2232 = vrot.lane.b32.xlu0 %v2113, 64
        %v2233 = vpop.permute.xlu0 %2232
        %2234 = vrot.lane.b32.xlu0 %v2114, 64
        %v2235 = vpop.permute.xlu0 %2234
        %2236 = vrot.lane.b32.xlu0 %v2115, 64
        %v2237 = vpop.permute.xlu0 %2236
        %2238 = vrot.lane.b32.xlu0 %v2116, 64
        %v2239 = vpop.permute.xlu0 %2238
        %2240 = vrot.lane.b32.xlu0 %v2117, 64
        %v2241 = vpop.permute.xlu0 %2240
        %2242 = vrot.lane.b32.xlu0 %v2118, 64
        %v2243 = vpop.permute.xlu0 %2242
        %2244 = vrot.lane.b32.xlu0 %v2119, 64
        %v2245 = vpop.permute.xlu0 %2244
        %2246 = vrot.lane.b32.xlu0 %v2120, 64
        %v2247 = vpop.permute.xlu0 %2246
        %2248 = vrot.lane.b32.xlu0 %v2121, 64
        %v2249 = vpop.permute.xlu0 %2248
        %2250 = vrot.lane.b32.xlu0 %v2122, 64
        %v2251 = vpop.permute.xlu0 %2250
        %vm2295 = vcmask 523264
        %v2296 = vsel %vm2295, %v1865, %v2167
        %v2297 = vsel %vm2295, %v1866, %v2169
        %v2298 = vsel %vm2295, %v1867, %v2171
        %v2299 = vsel %vm2295, %v1868, %v2173
        %v2300 = vsel %vm2295, %v1869, %v2175
        %v2301 = vsel %vm2295, %v1870, %v2177
        %v2302 = vsel %vm2295, %v1871, %v2179
        %v2303 = vsel %vm2295, %v1872, %v2181
        %v2304 = vsel %vm2295, %v1873, %v2183
        %v2305 = vsel %vm2295, %v1874, %v2185
        %v2306 = vsel %vm2295, %v1875, %v2187
        %v2307 = vsel %vm2295, %v1876, %v2189
        %v2308 = vsel %vm2295, %v1877, %v2191
        %v2309 = vsel %vm2295, %v1878, %v2193
        %v2310 = vsel %vm2295, %v1879, %v2195
        %v2311 = vsel %vm2295, %v1880, %v2197
        %v2312 = vsel %vm2295, %v1881, %v2199
        %v2313 = vsel %vm2295, %v1882, %v2201
        %v2314 = vsel %vm2295, %v1883, %v2203
        %v2315 = vsel %vm2295, %v1884, %v2205
        %v2316 = vsel %vm2295, %v1885, %v2207
        %v2317 = vsel %vm2295, %v1886, %v2209
        %v2318 = vsel %vm2295, %v1887, %v2211
        %v2319 = vsel %vm2295, %v1888, %v2213
        %v2320 = vsel %vm2295, %v1889, %v2215
        %v2321 = vsel %vm2295, %v1890, %v2217
        %v2322 = vsel %vm2295, %v1891, %v2219
        %v2323 = vsel %vm2295, %v1892, %v2221
        %v2324 = vsel %vm2295, %v1893, %v2223
        %v2325 = vsel %vm2295, %v1894, %v2225
        %v2326 = vsel %vm2295, %v1895, %v2227
        %v2327 = vsel %vm2295, %v1896, %v2229
        %v2328 = vsel %vm2295, %v1897, %v2231
        %v2329 = vsel %vm2295, %v1898, %v2233
        %v2330 = vsel %vm2295, %v1899, %v2235
        %v2331 = vsel %vm2295, %v1900, %v2237
        %v2332 = vsel %vm2295, %v1901, %v2239
        %v2333 = vsel %vm2295, %v1902, %v2241
        %v2334 = vsel %vm2295, %v1903, %v2243
        %v2335 = vsel %vm2295, %v1904, %v2245
        %v2336 = vsel %vm2295, %v1905, %v2247
        %v2337 = vsel %vm2295, %v1906, %v2249
        %v2338 = vsel %vm2295, %v1907, %v2251
        %v2339 = vpack.c.bf16 %v2296, %v2296
        %v2340 = vpack.c.bf16 %v2297, %v2297
        %v2341 = vpack.c.bf16 %v2298, %v2298
        %v2342 = vpack.c.bf16 %v2299, %v2299
        %v2343 = vpack.c.bf16 %v2300, %v2300
        %v2344 = vpack.c.bf16 %v2301, %v2301
        %v2345 = vpack.c.bf16 %v2302, %v2302
        %v2346 = vpack.c.bf16 %v2303, %v2303
        %v2347 = vpack.c.bf16 %v2304, %v2304
        %v2348 = vpack.c.bf16 %v2305, %v2305
        %v2349 = vpack.c.bf16 %v2306, %v2306
        %v2350 = vpack.c.bf16 %v2307, %v2307
        %v2351 = vpack.c.bf16 %v2308, %v2308
        %v2352 = vpack.c.bf16 %v2309, %v2309
        %v2353 = vpack.c.bf16 %v2310, %v2310
        %v2354 = vpack.c.bf16 %v2311, %v2311
        %v2355 = vpack.c.bf16 %v2312, %v2312
        %v2356 = vpack.c.bf16 %v2313, %v2313
        %v2357 = vpack.c.bf16 %v2314, %v2314
        %v2358 = vpack.c.bf16 %v2315, %v2315
        %v2359 = vpack.c.bf16 %v2316, %v2316
        %v2360 = vpack.c.bf16 %v2317, %v2317
        %v2361 = vpack.c.bf16 %v2318, %v2318
        %v2362 = vpack.c.bf16 %v2319, %v2319
        %v2363 = vpack.c.bf16 %v2320, %v2320
        %v2364 = vpack.c.bf16 %v2321, %v2321
        %v2365 = vpack.c.bf16 %v2322, %v2322
        %v2366 = vpack.c.bf16 %v2323, %v2323
        %v2367 = vpack.c.bf16 %v2324, %v2324
        %v2368 = vpack.c.bf16 %v2325, %v2325
        %v2369 = vpack.c.bf16 %v2326, %v2326
        %v2370 = vpack.c.bf16 %v2327, %v2327
        %v2371 = vpack.c.bf16 %v2328, %v2328
        %v2372 = vpack.c.bf16 %v2329, %v2329
        %v2373 = vpack.c.bf16 %v2330, %v2330
        %v2374 = vpack.c.bf16 %v2331, %v2331
        %v2375 = vpack.c.bf16 %v2332, %v2332
        %v2376 = vpack.c.bf16 %v2333, %v2333
        %v2377 = vpack.c.bf16 %v2334, %v2334
        %v2378 = vpack.c.bf16 %v2335, %v2335
        %v2379 = vpack.c.bf16 %v2336, %v2336
        %v2380 = vpack.c.bf16 %v2337, %v2337
        %v2381 = vpack.c.bf16 %v2338, %v2338
        %2382 = vst [vmem:[%s555] sm:$0xf] %v2339
        %2383 = vst [vmem:[%s555 + $0x4] sm:$0xf] %v2340
        %2384 = vst [vmem:[%s555 + $0x8] sm:$0xf] %v2341
        %2385 = vst [vmem:[%s555 + $0xc] sm:$0xf] %v2342
        %2386 = vst [vmem:[%s555 + $0x10] sm:$0xf] %v2343
        %2387 = vst [vmem:[%s555 + $0x14] sm:$0xf] %v2344
        %2388 = vst [vmem:[%s555 + $0x18] sm:$0xf] %v2345
        %2389 = vst [vmem:[%s555 + $0x1c] sm:$0xf] %v2346
        %2390 = vst [vmem:[%s555 + $0x20] sm:$0xf] %v2347
        %2391 = vst [vmem:[%s555 + $0x24] sm:$0xf] %v2348
        %2392 = vst [vmem:[%s555 + $0x28] sm:$0xf] %v2349
        %2393 = vst [vmem:[%s555 + $0x2c] sm:$0xf] %v2350
        %2394 = vst [vmem:[%s555 + $0x30] sm:$0xf] %v2351
        %2395 = vst [vmem:[%s555 + $0x34] sm:$0xf] %v2352
        %2396 = vst [vmem:[%s555 + $0x38] sm:$0xf] %v2353
        %2397 = vst [vmem:[%s555 + $0x3c] sm:$0xf] %v2354
        %2398 = vst [vmem:[%s555 + $0x40] sm:$0xf] %v2355
        %2399 = vst [vmem:[%s555 + $0x44] sm:$0xf] %v2356
        %2400 = vst [vmem:[%s555 + $0x48] sm:$0xf] %v2357
        %2401 = vst [vmem:[%s555 + $0x4c] sm:$0xf] %v2358
        %2402 = vst [vmem:[%s555 + $0x50] sm:$0xf] %v2359
        %2403 = vst [vmem:[%s555 + $0x54] sm:$0xf] %v2360
        %2404 = vst [vmem:[%s555 + $0x58] sm:$0xf] %v2361
        %2405 = vst [vmem:[%s555 + $0x5c] sm:$0xf] %v2362
        %2406 = vst [vmem:[%s555 + $0x60] sm:$0xf] %v2363
        %2407 = vst [vmem:[%s555 + $0x64] sm:$0xf] %v2364
        %2408 = vst [vmem:[%s555 + $0x68] sm:$0xf] %v2365
        %2409 = vst [vmem:[%s555 + $0x6c] sm:$0xf] %v2366
        %2410 = vst [vmem:[%s555 + $0x70] sm:$0xf] %v2367
        %2411 = vst [vmem:[%s555 + $0x74] sm:$0xf] %v2368
        %2412 = vst [vmem:[%s555 + $0x78] sm:$0xf] %v2369
        %2413 = vst [vmem:[%s555 + $0x7c] sm:$0xf] %v2370
        %2414 = vst [vmem:[%s555 + $0x80] sm:$0xf] %v2371
        %2415 = vst [vmem:[%s555 + $0x84] sm:$0xf] %v2372
        %2416 = vst [vmem:[%s555 + $0x88] sm:$0xf] %v2373
        %2417 = vst [vmem:[%s555 + $0x8c] sm:$0xf] %v2374
        %2418 = vst [vmem:[%s555 + $0x90] sm:$0xf] %v2375
        %2419 = vst [vmem:[%s555 + $0x94] sm:$0xf] %v2376
        %2420 = vst [vmem:[%s555 + $0x98] sm:$0xf] %v2377
        %2421 = vst [vmem:[%s555 + $0x9c] sm:$0xf] %v2378
        %2422 = vst [vmem:[%s555 + $0xa0] sm:$0xf] %v2379
        %2423 = vst [vmem:[%s555 + $0xa4] sm:$0xf] %v2380
        %2424 = vst [vmem:[%s555 + $0xa8] sm:$0xf] %v2381
        %s2425 = smul.u32 43, %s14
        %p2426 = scmp.lt.s32.totalorder %s2425, 85
        %s2427 = scalar_select %p2426, %s2425, 85
        %s2428 = smul.addr %s2427, 4
        %s2429 = scalar_lea.vmem %s3, %s2428
        // Predicated region
        $region74: #{cnn_forward.3} parent=68 // pred_check
          %p2430 = pneg %p100
        $region75: #{cnn_forward.3} parent=68 // pred_check_branch
          %2432 = sbr.rel (%p2430) target = $region77
        $region76: #{cnn_forward.3} parent=68 // pred_region
          %s2433 = smul.u32 43, %s14
        $region77: #{cnn_forward.3} parent=68 // pred_fallthru
          _
      $region69: #{cnn_forward.3} parent=5 // pred_fallthru
        _
      %p2434 = scmp.le.s32.totalorder 2, %s9
      // Predicated region
      $region78: #{cnn_forward.3} parent=5 // pred_check
        %p2435 = pneg %p2434
      $region79: #{cnn_forward.3} parent=5 // pred_check_branch
        %2437 = sbr.rel (%p2435) target = $region81
      $region80: #{cnn_forward.3} parent=5 // pred_region
        %s2438 = ssub.s32 %s9, 2
        // Predicated region
        $region82: #{cnn_forward.3} parent=80 // pred_check
          %p2439 = pneg %p106
        $region83: #{cnn_forward.3} parent=80 // pred_check_branch
          %2441 = sbr.rel (%p2439) target = $region85
        $region84: #{cnn_forward.3} parent=80 // pred_region
          %s2442 = smul.u32 43, %s15
          %p2443 = scmp.lt.s32.totalorder %s2442, 85
          %s2444 = scalar_select %p2443, %s2442, 85
          %s2445 = smul.addr %s2444, 4
          %s2446 = scalar_lea.vmem %s3, %s2445
        $region85: #{cnn_forward.3} parent=80 // pred_fallthru
          _
      $region81: #{cnn_forward.3} parent=5 // pred_fallthru
        _
    $region6: #{cnn_forward.3} parent=1 // loop_footer
      %s13 = sadd.s32 1, %s9
    $region7: #{cnn_forward.3} parent=1 // loop_footer_branch
      %8 = sbr.rel target = $region3
    $region8: #{cnn_forward.3} parent=1 // loop_exit
      _

// kernel: cnn_forward.4
$region0: #{cnn_forward.4}
  #allocation0 [shape = 'u32[]', space=smem, size = 0x4, offset = 0x4, fixed_abs, tag = 'smem constant byte address 0x4 - core index']
  #allocation1 [shape = 'u32[72,128]{1,0:T(1,128)}', space=vmem, size = 0x9000, scoped, tag = 'internal scratch']
  %s0 = inlined_call_operand.vmem [shape: bf16[2,144,1152], index: 0, kind: input, shape index: {}]
  %s1 = inlined_call_operand.vmem [shape: bf16[1152,128], index: 1, kind: input, shape index: {}]
  %s2 = inlined_call_operand.vmem [shape: f32[1,128], index: 2, kind: input, shape index: {}]
  %s3 = inlined_call_operand.vmem [shape: bf16[144,64], index: 3, kind: output, shape index: {}]
  %s4 = sld [smem:[#allocation0]]
  $region71: #{cnn_forward.4} parent=0
    _
  %s6 = ssub.s32 1, %s4
  %s7 = scalar_select 0, %s6, %s4
  $region1: #{cnn_forward.4} parent=0
    #allocation2 [shape = 'u8[663552]{0}', space=vmem, size = 0xa2000, scoped, tag = 'input window, operand 0']
    loop: start=0, step=1, limit=4
    $region2: #{cnn_forward.4} parent=1 // loop_pre_header
      _
    $region3: #{cnn_forward.4} parent=1 // loop_header
      %s9 = sphi 0, %s13
      %p10 = scmp.ge.s32.totalorder %s9, 4
      %s19 = sphi 0, %s21
      %s22 = sphi 0, %s19
      %s23 = sphi 0, %s22
      %s39 = sphi 0, %s23
      %s43 = sphi 0, %s43
      %s45 = sphi 0, %s43
      %s46 = sphi 0, %s45
      %s60 = sphi 0, %s46
      %s64 = sphi 0, %s64
      %s66 = sphi 0, %s64
      %s67 = sphi 0, %s66
      %s81 = sphi 0, %s67
      %s87 = sphi 0, %s89
      %s90 = sphi 0, %s87
      %s91 = sphi 0, %s90
      %s107 = sphi 0, %s91
    $region4: #{cnn_forward.4} parent=1 // loop_header_branch
      %12 = sbr.rel (%p10) target = $region8
    $region5: #{cnn_forward.4} parent=1 // loop_body
      %s14 = ssub.s32 %s9, 1
      %s15 = ssub.s32 %s9, 2
      %s16 = sadd.s32 %s9, 1
      %s17 = ssub.s32 %s9, %s16
      %p18 = scmp.eq.s32.totalorder %s17, 0
      %s20 = sadd.s32 %s19, 1
      %s21 = scalar_select %p18, %s19, %s20
      %p24 = pneg %p18
      %p25 = scmp.eq.s32.totalorder %s9, 1
      %p26 = por %p24, %p25
      %p27 = scmp.ne.s32.totalorder %s19, %s22
      %p28 = scmp.eq.s32.totalorder %s9, 0
      %p29 = por %p27, %p28
      %p30 = scmp.ne.s32.totalorder %s19, %s22
      %p31 = scmp.eq.s32.totalorder %s14, 1
      %p32 = por %p30, %p31
      %p33 = scmp.ne.s32.totalorder %s22, %s23
      %p34 = scmp.eq.s32.totalorder %s14, 0
      %p35 = por %p33, %p34
      %p36 = scmp.ne.s32.totalorder %s22, %s23
      %p37 = scmp.eq.s32.totalorder %s15, 1
      %p38 = por %p36, %p37
      %p40 = scmp.ne.s32.totalorder %s23, %s39
      %p41 = scmp.eq.s32.totalorder %s15, 0
      %p42 = por %p40, %p41
      %s44 = sadd.s32 %s43, 1
      %p47 = scmp.eq.s32.totalorder %s9, 1
      %p48 = scmp.ne.s32.totalorder %s43, %s45
      %p49 = scmp.eq.s32.totalorder %s9, 0
      %p50 = por %p48, %p49
      %p51 = scmp.ne.s32.totalorder %s43, %s45
      %p52 = scmp.eq.s32.totalorder %s14, 1
      %p53 = por %p51, %p52
      %p54 = scmp.ne.s32.totalorder %s45, %s46
      %p55 = scmp.eq.s32.totalorder %s14, 0
      %p56 = por %p54, %p55
      %p57 = scmp.ne.s32.totalorder %s45, %s46
      %p58 = scmp.eq.s32.totalorder %s15, 1
      %p59 = por %p57, %p58
      %p61 = scmp.ne.s32.totalorder %s46, %s60
      %p62 = scmp.eq.s32.totalorder %s15, 0
      %p63 = por %p61, %p62
      %s65 = sadd.s32 %s64, 1
      %p68 = scmp.eq.s32.totalorder %s9, 1
      %p69 = scmp.ne.s32.totalorder %s64, %s66
      %p70 = scmp.eq.s32.totalorder %s9, 0
      %p71 = por %p69, %p70
      %p72 = scmp.ne.s32.totalorder %s64, %s66
      %p73 = scmp.eq.s32.totalorder %s14, 1
      %p74 = por %p72, %p73
      %p75 = scmp.ne.s32.totalorder %s66, %s67
      %p76 = scmp.eq.s32.totalorder %s14, 0
      %p77 = por %p75, %p76
      %p78 = scmp.ne.s32.totalorder %s66, %s67
      %p79 = scmp.eq.s32.totalorder %s15, 1
      %p80 = por %p78, %p79
      %p82 = scmp.ne.s32.totalorder %s67, %s81
      %p83 = scmp.eq.s32.totalorder %s15, 0
      %p84 = por %p82, %p83
      %s85 = ssub.s32 %s9, %s16
      %p86 = scmp.eq.s32.totalorder %s85, 0
      %s88 = sadd.s32 %s87, 1
      %s89 = scalar_select %p86, %s87, %s88
      %p92 = pneg %p86
      %p93 = scmp.eq.s32.totalorder %s9, 1
      %p94 = por %p92, %p93
      %p95 = scmp.ne.s32.totalorder %s87, %s90
      %p96 = scmp.eq.s32.totalorder %s9, 0
      %p97 = por %p95, %p96
      %p98 = scmp.ne.s32.totalorder %s87, %s90
      %p99 = scmp.eq.s32.totalorder %s14, 1
      %p100 = por %p98, %p99
      %p101 = scmp.ne.s32.totalorder %s90, %s91
      %p102 = scmp.eq.s32.totalorder %s14, 0
      %p103 = por %p101, %p102
      %p104 = scmp.ne.s32.totalorder %s90, %s91
      %p105 = scmp.eq.s32.totalorder %s15, 1
      %p106 = por %p104, %p105
      %p108 = scmp.ne.s32.totalorder %s91, %s107
      %p109 = scmp.eq.s32.totalorder %s15, 0
      %p110 = por %p108, %p109
      %p111 = scmp.le.s32.totalorder 1, %s9
      %p112 = scmp.lt.s32.totalorder %s9, 3
      %p113 = pnand %p111, %p112
      %p114 = pneg %p113
      // Predicated region
      $region9: #{cnn_forward.4} parent=5 // pred_check
        _
      $region10: #{cnn_forward.4} parent=5 // pred_check_branch
        %116 = sbr.rel (%p113) target = $region12
      $region11: #{cnn_forward.4} parent=5 // pred_region
        %s117 = ssub.s32 %s9, 1
        // Predicated region
        $region13: #{cnn_forward.4} parent=11 // pred_check
          %p118 = pneg %p56
        $region14: #{cnn_forward.4} parent=11 // pred_check_branch
          %120 = sbr.rel (%p118) target = $region16
        $region15: #{cnn_forward.4} parent=11 // pred_region
          _
        $region16: #{cnn_forward.4} parent=11 // pred_fallthru
          _
        // Predicated region
        $region17: #{cnn_forward.4} parent=11 // pred_check
          %p121 = pneg %p77
        $region18: #{cnn_forward.4} parent=11 // pred_check_branch
          %123 = sbr.rel (%p121) target = $region20
        $region19: #{cnn_forward.4} parent=11 // pred_region
          _
        $region20: #{cnn_forward.4} parent=11 // pred_fallthru
          _
      $region12: #{cnn_forward.4} parent=5 // pred_fallthru
        _
      %p124 = scmp.lt.s32.totalorder %s9, 2
      // Predicated region
      $region21: #{cnn_forward.4} parent=5 // pred_check
        %p125 = pneg %p124
      $region22: #{cnn_forward.4} parent=5 // pred_check_branch
        %127 = sbr.rel (%p125) target = $region24
      $region23: #{cnn_forward.4} parent=5 // pred_region
        // Predicated region
        $region25: #{cnn_forward.4} parent=23 // pred_check
          %p128 = pneg %p29
        $region26: #{cnn_forward.4} parent=23 // pred_check_branch
          %130 = sbr.rel (%p128) target = $region28
        $region27: #{cnn_forward.4} parent=23 // pred_region
          %s131 = sand.u32 %s19, 1
          %s132 = sand.u32 %s19, 1
          %s133 = smul.addr %s132, 648
          %s134 = scalar_lea.vmem [#allocation2], %s133
          %s135 = smul.u32 9, %s9
          %s136 = smul.addr %s135, 9
          %s137 = smul.addr %s136, 4
          %s138 = scalar_lea.vmem %s0, %s137
          // Predicated region
          $region29: #{cnn_forward.4} parent=27 // pred_check
            _
          $region30: #{cnn_forward.4} parent=27 // pred_check_branch
            %140 = sbr.rel (0) target = $region32
          $region31: #{cnn_forward.4} parent=27 // pred_region
            // Predicated region
            $region33: #{cnn_forward.4} parent=31 // pred_check
              _
            $region34: #{cnn_forward.4} parent=31 // pred_check_branch
              %142 = sbr.rel (0) target = $region36
            $region35: #{cnn_forward.4} parent=31 // pred_region
              %s143 = scalar_lea.vmem %s138, 32
              %s144 = scalar_lea.vmem %s134, 32 [#allocation2]
              loop: start=0, step=1, limit=1
              $region37: #{cnn_forward.4} parent=35 // loop_pre_header
                _
              $region38: #{cnn_forward.4} parent=35 // loop_header
                %s146 = sphi 0, %s150
                %p147 = scmp.ge.s32.totalorder %s146, 1
                %s151 = sphi %s138, %s138
                %s152 = sphi %s134, %s134
              $region39: #{cnn_forward.4} parent=35 // loop_header_branch
                %149 = sbr.rel (%p147) target = $region43
              $region40: #{cnn_forward.4} parent=35 // loop_body
                %v153 = vld [vmem:[%s151] sm:$0xff]
                %154 = vst [vmem:[%s152] sm:$0xff] %v153
                %v155 = vld [vmem:[%s151 + $0x8] sm:$0xff]
                %156 = vst [vmem:[%s152 + $0x8] sm:$0xff] %v155
                %v157 = vld [vmem:[%s151 + $0x10] sm:$0xff]
                %158 = vst [vmem:[%s152 + $0x10] sm:$0xff] %v157
                %v159 = vld [vmem:[%s151 + $0x18] sm:$0xff]
                %160 = vst [vmem:[%s152 + $0x18] sm:$0xff] %v159
                %v161 = vld [vmem:[%s151 + $0x24] sm:$0xff]
                %162 = vst [vmem:[%s152 + $0x24] sm:$0xff] %v161
                %v163 = vld [vmem:[%s151 + $0x2c] sm:$0xff]
                %164 = vst [vmem:[%s152 + $0x2c] sm:$0xff] %v163
                %v165 = vld [vmem:[%s151 + $0x34] sm:$0xff]
                %166 = vst [vmem:[%s152 + $0x34] sm:$0xff] %v165
                %v167 = vld [vmem:[%s151 + $0x3c] sm:$0xff]
                %168 = vst [vmem:[%s152 + $0x3c] sm:$0xff] %v167
                %v169 = vld [vmem:[%s151 + $0x48] sm:$0xff]
                %170 = vst [vmem:[%s152 + $0x48] sm:$0xff] %v169
                %v171 = vld [vmem:[%s151 + $0x50] sm:$0xff]
                %172 = vst [vmem:[%s152 + $0x50] sm:$0xff] %v171
                %v173 = vld [vmem:[%s151 + $0x58] sm:$0xff]
                %174 = vst [vmem:[%s152 + $0x58] sm:$0xff] %v173
                %v175 = vld [vmem:[%s151 + $0x60] sm:$0xff]
                %176 = vst [vmem:[%s152 + $0x60] sm:$0xff] %v175
                %v177 = vld [vmem:[%s151 + $0x6c] sm:$0xff]
                %178 = vst [vmem:[%s152 + $0x6c] sm:$0xff] %v177
                %v179 = vld [vmem:[%s151 + $0x74] sm:$0xff]
                %180 = vst [vmem:[%s152 + $0x74] sm:$0xff] %v179
                %v181 = vld [vmem:[%s151 + $0x7c] sm:$0xff]
                %182 = vst [vmem:[%s152 + $0x7c] sm:$0xff] %v181
                %v183 = vld [vmem:[%s151 + $0x84] sm:$0xff]
                %184 = vst [vmem:[%s152 + $0x84] sm:$0xff] %v183
                %v185 = vld [vmem:[%s151 + $0x90] sm:$0xff]
                %186 = vst [vmem:[%s152 + $0x90] sm:$0xff] %v185
                %v187 = vld [vmem:[%s151 + $0x98] sm:$0xff]
                %188 = vst [vmem:[%s152 + $0x98] sm:$0xff] %v187
                %v189 = vld [vmem:[%s151 + $0xa0] sm:$0xff]
                %190 = vst [vmem:[%s152 + $0xa0] sm:$0xff] %v189
                %v191 = vld [vmem:[%s151 + $0xa8] sm:$0xff]
                %192 = vst [vmem:[%s152 + $0xa8] sm:$0xff] %v191
                %v193 = vld [vmem:[%s151 + $0xb4] sm:$0xff]
                %194 = vst [vmem:[%s152 + $0xb4] sm:$0xff] %v193
                %v195 = vld [vmem:[%s151 + $0xbc] sm:$0xff]
                %196 = vst [vmem:[%s152 + $0xbc] sm:$0xff] %v195
                %v197 = vld [vmem:[%s151 + $0xc4] sm:$0xff]
                %198 = vst [vmem:[%s152 + $0xc4] sm:$0xff] %v197
                %v199 = vld [vmem:[%s151 + $0xcc] sm:$0xff]
                %200 = vst [vmem:[%s152 + $0xcc] sm:$0xff] %v199
                %v201 = vld [vmem:[%s151 + $0xd8] sm:$0xff]
                %202 = vst [vmem:[%s152 + $0xd8] sm:$0xff] %v201
                %v203 = vld [vmem:[%s151 + $0xe0] sm:$0xff]
                %204 = vst [vmem:[%s152 + $0xe0] sm:$0xff] %v203
                %v205 = vld [vmem:[%s151 + $0xe8] sm:$0xff]
                %206 = vst [vmem:[%s152 + $0xe8] sm:$0xff] %v205
                %v207 = vld [vmem:[%s151 + $0xf0] sm:$0xff]
                %208 = vst [vmem:[%s152 + $0xf0] sm:$0xff] %v207
                %v209 = vld [vmem:[%s151 + $0xfc] sm:$0xff]
                %210 = vst [vmem:[%s152 + $0xfc] sm:$0xff] %v209
                %v211 = vld [vmem:[%s151 + $0x104] sm:$0xff]
                %212 = vst [vmem:[%s152 + $0x104] sm:$0xff] %v211
                %v213 = vld [vmem:[%s151 + $0x10c] sm:$0xff]
                %214 = vst [vmem:[%s152 + $0x10c] sm:$0xff] %v213
                %v215 = vld [vmem:[%s151 + $0x114] sm:$0xff]
                %216 = vst [vmem:[%s152 + $0x114] sm:$0xff] %v215
                %v217 = vld [vmem:[%s151 + $0x120] sm:$0xff]
                %218 = vst [vmem:[%s152 + $0x120] sm:$0xff] %v217
                %v219 = vld [vmem:[%s151 + $0x128] sm:$0xff]
                %220 = vst [vmem:[%s152 + $0x128] sm:$0xff] %v219
                %v221 = vld [vmem:[%s151 + $0x130] sm:$0xff]
                %222 = vst [vmem:[%s152 + $0x130] sm:$0xff] %v221
                %v223 = vld [vmem:[%s151 + $0x138] sm:$0xff]
                %224 = vst [vmem:[%s152 + $0x138] sm:$0xff] %v223
                %v225 = vld [vmem:[%s151 + $0x288] sm:$0xff]
                %226 = vst [vmem:[%s152 + $0x144] sm:$0xff] %v225
                %v227 = vld [vmem:[%s151 + $0x290] sm:$0xff]
                %228 = vst [vmem:[%s152 + $0x14c] sm:$0xff] %v227
                %v229 = vld [vmem:[%s151 + $0x298] sm:$0xff]
                %230 = vst [vmem:[%s152 + $0x154] sm:$0xff] %v229
                %v231 = vld [vmem:[%s151 + $0x2a0] sm:$0xff]
                %232 = vst [vmem:[%s152 + $0x15c] sm:$0xff] %v231
                %v233 = vld [vmem:[%s151 + $0x2ac] sm:$0xff]
                %234 = vst [vmem:[%s152 + $0x168] sm:$0xff] %v233
                %v235 = vld [vmem:[%s151 + $0x2b4] sm:$0xff]
                %236 = vst [vmem:[%s152 + $0x170] sm:$0xff] %v235
                %v237 = vld [vmem:[%s151 + $0x2bc] sm:$0xff]
                %238 = vst [vmem:[%s152 + $0x178] sm:$0xff] %v237
                %v239 = vld [vmem:[%s151 + $0x2c4] sm:$0xff]
                %240 = vst [vmem:[%s152 + $0x180] sm:$0xff] %v239
                %v241 = vld [vmem:[%s151 + $0x2d0] sm:$0xff]
                %242 = vst [vmem:[%s152 + $0x18c] sm:$0xff] %v241
                %v243 = vld [vmem:[%s151 + $0x2d8] sm:$0xff]
                %244 = vst [vmem:[%s152 + $0x194] sm:$0xff] %v243
                %v245 = vld [vmem:[%s151 + $0x2e0] sm:$0xff]
                %246 = vst [vmem:[%s152 + $0x19c] sm:$0xff] %v245
                %v247 = vld [vmem:[%s151 + $0x2e8] sm:$0xff]
                %248 = vst [vmem:[%s152 + $0x1a4] sm:$0xff] %v247
                %v249 = vld [vmem:[%s151 + $0x2f4] sm:$0xff]
                %250 = vst [vmem:[%s152 + $0x1b0] sm:$0xff] %v249
                %v251 = vld [vmem:[%s151 + $0x2fc] sm:$0xff]
                %252 = vst [vmem:[%s152 + $0x1b8] sm:$0xff] %v251
                %v253 = vld [vmem:[%s151 + $0x304] sm:$0xff]
                %254 = vst [vmem:[%s152 + $0x1c0] sm:$0xff] %v253
                %v255 = vld [vmem:[%s151 + $0x30c] sm:$0xff]
                %256 = vst [vmem:[%s152 + $0x1c8] sm:$0xff] %v255
                %v257 = vld [vmem:[%s151 + $0x318] sm:$0xff]
                %258 = vst [vmem:[%s152 + $0x1d4] sm:$0xff] %v257
                %v259 = vld [vmem:[%s151 + $0x320] sm:$0xff]
                %260 = vst [vmem:[%s152 + $0x1dc] sm:$0xff] %v259
                %v261 = vld [vmem:[%s151 + $0x328] sm:$0xff]
                %262 = vst [vmem:[%s152 + $0x1e4] sm:$0xff] %v261
                %v263 = vld [vmem:[%s151 + $0x330] sm:$0xff]
                %264 = vst [vmem:[%s152 + $0x1ec] sm:$0xff] %v263
                %v265 = vld [vmem:[%s151 + $0x33c] sm:$0xff]
                %266 = vst [vmem:[%s152 + $0x1f8] sm:$0xff] %v265
                %v267 = vld [vmem:[%s151 + $0x344] sm:$0xff]
                %268 = vst [vmem:[%s152 + $0x200] sm:$0xff] %v267
                %v269 = vld [vmem:[%s151 + $0x34c] sm:$0xff]
                %270 = vst [vmem:[%s152 + $0x208] sm:$0xff] %v269
                %v271 = vld [vmem:[%s151 + $0x354] sm:$0xff]
                %272 = vst [vmem:[%s152 + $0x210] sm:$0xff] %v271
                %v273 = vld [vmem:[%s151 + $0x360] sm:$0xff]
                %274 = vst [vmem:[%s152 + $0x21c] sm:$0xff] %v273
                %v275 = vld [vmem:[%s151 + $0x368] sm:$0xff]
                %276 = vst [vmem:[%s152 + $0x224] sm:$0xff] %v275
                %v277 = vld [vmem:[%s151 + $0x370] sm:$0xff]
                %278 = vst [vmem:[%s152 + $0x22c] sm:$0xff] %v277
                %v279 = vld [vmem:[%s151 + $0x378] sm:$0xff]
                %280 = vst [vmem:[%s152 + $0x234] sm:$0xff] %v279
                %v281 = vld [vmem:[%s151 + $0x384] sm:$0xff]
                %282 = vst [vmem:[%s152 + $0x240] sm:$0xff] %v281
                %v283 = vld [vmem:[%s151 + $0x38c] sm:$0xff]
                %284 = vst [vmem:[%s152 + $0x248] sm:$0xff] %v283
                %v285 = vld [vmem:[%s151 + $0x394] sm:$0xff]
                %286 = vst [vmem:[%s152 + $0x250] sm:$0xff] %v285
                %v287 = vld [vmem:[%s151 + $0x39c] sm:$0xff]
                %288 = vst [vmem:[%s152 + $0x258] sm:$0xff] %v287
                %v289 = vld [vmem:[%s151 + $0x3a8] sm:$0xff]
                %290 = vst [vmem:[%s152 + $0x264] sm:$0xff] %v289
                %v291 = vld [vmem:[%s151 + $0x3b0] sm:$0xff]
                %292 = vst [vmem:[%s152 + $0x26c] sm:$0xff] %v291
                %v293 = vld [vmem:[%s151 + $0x3b8] sm:$0xff]
                %294 = vst [vmem:[%s152 + $0x274] sm:$0xff] %v293
                %v295 = vld [vmem:[%s151 + $0x3c0] sm:$0xff]
                %296 = vst [vmem:[%s152 + $0x27c] sm:$0xff] %v295
              $region41: #{cnn_forward.4} parent=35 // loop_footer
                %s150 = sadd.s32 1, %s146
              $region42: #{cnn_forward.4} parent=35 // loop_footer_branch
                %145 = sbr.rel target = $region38
              $region43: #{cnn_forward.4} parent=35 // loop_exit
                _
              %s298 = ssub.s32 16, 1
              loop: start=0, step=1, limit=1
              $region44: #{cnn_forward.4} parent=35 // loop_pre_header
                _
              $region45: #{cnn_forward.4} parent=35 // loop_header
                %s300 = sphi 0, %s304
                %p301 = scmp.ge.s32.totalorder %s300, 1
                %s305 = sphi %s143, %s143
                %s306 = sphi %s144, %s144
              $region46: #{cnn_forward.4} parent=35 // loop_header_branch
                %303 = sbr.rel (%p301) target = $region50
              $region47: #{cnn_forward.4} parent=35 // loop_body
                %v307 = vld [vmem:[%s305] sm:%s298]
                %308 = vst [vmem:[%s306] sm:%s298] %v307
                %v309 = vld [vmem:[%s305 + $0x24] sm:%s298]
                %310 = vst [vmem:[%s306 + $0x24] sm:%s298] %v309
                %v311 = vld [vmem:[%s305 + $0x48] sm:%s298]
                %312 = vst [vmem:[%s306 + $0x48] sm:%s298] %v311
                %v313 = vld [vmem:[%s305 + $0x6c] sm:%s298]
                %314 = vst [vmem:[%s306 + $0x6c] sm:%s298] %v313
                %v315 = vld [vmem:[%s305 + $0x90] sm:%s298]
                %316 = vst [vmem:[%s306 + $0x90] sm:%s298] %v315
                %v317 = vld [vmem:[%s305 + $0xb4] sm:%s298]
                %318 = vst [vmem:[%s306 + $0xb4] sm:%s298] %v317
                %v319 = vld [vmem:[%s305 + $0xd8] sm:%s298]
                %320 = vst [vmem:[%s306 + $0xd8] sm:%s298] %v319
                %v321 = vld [vmem:[%s305 + $0xfc] sm:%s298]
                %322 = vst [vmem:[%s306 + $0xfc] sm:%s298] %v321
                %v323 = vld [vmem:[%s305 + $0x120] sm:%s298]
                %324 = vst [vmem:[%s306 + $0x120] sm:%s298] %v323
                %v325 = vld [vmem:[%s305 + $0x288] sm:%s298]
                %326 = vst [vmem:[%s306 + $0x144] sm:%s298] %v325
                %v327 = vld [vmem:[%s305 + $0x2ac] sm:%s298]
                %328 = vst [vmem:[%s306 + $0x168] sm:%s298] %v327
                %v329 = vld [vmem:[%s305 + $0x2d0] sm:%s298]
                %330 = vst [vmem:[%s306 + $0x18c] sm:%s298] %v329
                %v331 = vld [vmem:[%s305 + $0x2f4] sm:%s298]
                %332 = vst [vmem:[%s306 + $0x1b0] sm:%s298] %v331
                %v333 = vld [vmem:[%s305 + $0x318] sm:%s298]
                %334 = vst [vmem:[%s306 + $0x1d4] sm:%s298] %v333
                %v335 = vld [vmem:[%s305 + $0x33c] sm:%s298]
                %336 = vst [vmem:[%s306 + $0x1f8] sm:%s298] %v335
                %v337 = vld [vmem:[%s305 + $0x360] sm:%s298]
                %338 = vst [vmem:[%s306 + $0x21c] sm:%s298] %v337
                %v339 = vld [vmem:[%s305 + $0x384] sm:%s298]
                %340 = vst [vmem:[%s306 + $0x240] sm:%s298] %v339
                %v341 = vld [vmem:[%s305 + $0x3a8] sm:%s298]
                %342 = vst [vmem:[%s306 + $0x264] sm:%s298] %v341
              $region48: #{cnn_forward.4} parent=35 // loop_footer
                %s304 = sadd.s32 1, %s300
              $region49: #{cnn_forward.4} parent=35 // loop_footer_branch
                %299 = sbr.rel target = $region45
              $region50: #{cnn_forward.4} parent=35 // loop_exit
                _
            $region36: #{cnn_forward.4} parent=31 // pred_fallthru
              _
          $region32: #{cnn_forward.4} parent=27 // pred_fallthru
            _
          %343 = vnop
        $region28: #{cnn_forward.4} parent=23 // pred_fallthru
          _
      $region24: #{cnn_forward.4} parent=5 // pred_fallthru
        _
      %p344 = scmp.le.s32.totalorder 1, %s9
      %p345 = scmp.lt.s32.totalorder %s9, 3
      %p346 = pnand %p344, %p345
      %p347 = pneg %p346
      // Predicated region
      $region51: #{cnn_forward.4} parent=5 // pred_check
        _
      $region52: #{cnn_forward.4} parent=5 // pred_check_branch
        %349 = sbr.rel (%p346) target = $region54
      $region53: #{cnn_forward.4} parent=5 // pred_region
        %s350 = ssub.s32 %s9, 1
        %s351 = sand.u32 %s22, 1
        %s352 = sand.u32 %s22, 1
        %s353 = smul.addr %s352, 648
        %s354 = scalar_lea.vmem [#allocation2], %s353
        // Predicated region
        $region55: #{cnn_forward.4} parent=53 // pred_check
          %p355 = pneg %p35
        $region56: #{cnn_forward.4} parent=53 // pred_check_branch
          %357 = sbr.rel (%p355) target = $region58
        $region57: #{cnn_forward.4} parent=53 // pred_region
          _
        $region58: #{cnn_forward.4} parent=53 // pred_fallthru
          _
        %s358 = sand.u32 %s22, 1
        %s359 = sand.u32 %s22, 1
        %s360 = smul.addr %s359, 648
        %s361 = scalar_lea.vmem [#allocation2], %s360
        %p362 = pneg %p35
        %p363 = pneg %p32
        %p364 = pneg %p56
        %p365 = pneg %p53
        %p366 = pneg %p77
        %p367 = pneg %p74
        %p368 = pneg %p103
        %p369 = pneg %p100
        %s370 = smul.u32 9, %s14
        %p371 = scmp.lt.s32.totalorder %s370, 17
        %s372 = scalar_select %p371, %s370, 17
        %s373 = smul.addr %s372, 4
        %s374 = scalar_lea.vmem %s3, %s373
        %s375 = smul.u32 9, %s14
        %s376 = smul.u32 9, %s14
        %p377 = scmp.lt.s32.totalorder %s376, 17
        %s378 = scalar_select %p377, %s376, 17
        %s379 = smul.addr %s378, 4
        %s380 = scalar_lea.vmem %s3, %s379
        %s381 = smul.u32 9, %s14
        %v382 = vld [vmem:[%s1] sm:$0xf]
        %v383 = vld [vmem:[%s1 + $0x4] sm:$0xf]
        %v384 = vld [vmem:[%s1 + $0x8] sm:$0xf]
        %v385 = vld [vmem:[%s1 + $0xc] sm:$0xf]
        %v386 = vld [vmem:[%s1 + $0x10] sm:$0xf]
        %v387 = vld [vmem:[%s1 + $0x14] sm:$0xf]
        %v388 = vld [vmem:[%s1 + $0x18] sm:$0xf]
        %v389 = vld [vmem:[%s1 + $0x1c] sm:$0xf]
        %v390 = vld [vmem:[%s1 + $0x20] sm:$0xf]
        %v391 = vld [vmem:[%s1 + $0x24] sm:$0xf]
        %v392 = vld [vmem:[%s1 + $0x28] sm:$0xf]
        %v393 = vld [vmem:[%s1 + $0x2c] sm:$0xf]
        %v394 = vld [vmem:[%s1 + $0x30] sm:$0xf]
        %v395 = vld [vmem:[%s1 + $0x34] sm:$0xf]
        %v396 = vld [vmem:[%s1 + $0x38] sm:$0xf]
        %v397 = vld [vmem:[%s1 + $0x3c] sm:$0xf]
        %v398 = vld [vmem:[%s1 + $0x40] sm:$0xf]
        %v399 = vld [vmem:[%s1 + $0x44] sm:$0xf]
        %v400 = vld [vmem:[%s1 + $0x48] sm:$0xf]
        %v401 = vld [vmem:[%s1 + $0x4c] sm:$0xf]
        %v402 = vld [vmem:[%s1 + $0x50] sm:$0xf]
        %v403 = vld [vmem:[%s1 + $0x54] sm:$0xf]
        %v404 = vld [vmem:[%s1 + $0x58] sm:$0xf]
        %v405 = vld [vmem:[%s1 + $0x5c] sm:$0xf]
        %v406 = vld [vmem:[%s1 + $0x60] sm:$0xf]
        %v407 = vld [vmem:[%s1 + $0x64] sm:$0xf]
        %v408 = vld [vmem:[%s1 + $0x68] sm:$0xf]
        %v409 = vld [vmem:[%s1 + $0x6c] sm:$0xf]
        %v410 = vld [vmem:[%s1 + $0x70] sm:$0xf]
        %v411 = vld [vmem:[%s1 + $0x74] sm:$0xf]
        %v412 = vld [vmem:[%s1 + $0x78] sm:$0xf]
        %v413 = vld [vmem:[%s1 + $0x7c] sm:$0xf]
        %v414 = vld [vmem:[%s1 + $0x80] sm:$0xf]
        %v415 = vld [vmem:[%s1 + $0x84] sm:$0xf]
        %v416 = vld [vmem:[%s1 + $0x88] sm:$0xf]
        %v417 = vld [vmem:[%s1 + $0x8c] sm:$0xf]
        %v418 = vld [vmem:[%s1 + $0x90] sm:$0xf]
        %v419 = vld [vmem:[%s1 + $0x94] sm:$0xf]
        %v420 = vld [vmem:[%s1 + $0x98] sm:$0xf]
        %v421 = vld [vmem:[%s1 + $0x9c] sm:$0xf]
        %v422 = vld [vmem:[%s1 + $0xa0] sm:$0xf]
        %v423 = vld [vmem:[%s1 + $0xa4] sm:$0xf]
        %v424 = vld [vmem:[%s1 + $0xa8] sm:$0xf]
        %v425 = vld [vmem:[%s1 + $0xac] sm:$0xf]
        %v426 = vld [vmem:[%s1 + $0xb0] sm:$0xf]
        %v427 = vld [vmem:[%s1 + $0xb4] sm:$0xf]
        %v428 = vld [vmem:[%s1 + $0xb8] sm:$0xf]
        %v429 = vld [vmem:[%s1 + $0xbc] sm:$0xf]
        %v430 = vld [vmem:[%s1 + $0xc0] sm:$0xf]
        %v431 = vld [vmem:[%s1 + $0xc4] sm:$0xf]
        %v432 = vld [vmem:[%s1 + $0xc8] sm:$0xf]
        %v433 = vld [vmem:[%s1 + $0xcc] sm:$0xf]
        %v434 = vld [vmem:[%s1 + $0xd0] sm:$0xf]
        %v435 = vld [vmem:[%s1 + $0xd4] sm:$0xf]
        %v436 = vld [vmem:[%s1 + $0xd8] sm:$0xf]
        %v437 = vld [vmem:[%s1 + $0xdc] sm:$0xf]
        %v438 = vld [vmem:[%s1 + $0xe0] sm:$0xf]
        %v439 = vld [vmem:[%s1 + $0xe4] sm:$0xf]
        %v440 = vld [vmem:[%s1 + $0xe8] sm:$0xf]
        %v441 = vld [vmem:[%s1 + $0xec] sm:$0xf]
        %v442 = vld [vmem:[%s1 + $0xf0] sm:$0xf]
        %v443 = vld [vmem:[%s1 + $0xf4] sm:$0xf]
        %v444 = vld [vmem:[%s1 + $0xf8] sm:$0xf]
        %v445 = vld [vmem:[%s1 + $0xfc] sm:$0xf]
        %v446 = vld [vmem:[%s1 + $0x100] sm:$0xf]
        %v447 = vld [vmem:[%s1 + $0x104] sm:$0xf]
        %v448 = vld [vmem:[%s1 + $0x108] sm:$0xf]
        %v449 = vld [vmem:[%s1 + $0x10c] sm:$0xf]
        %v450 = vld [vmem:[%s1 + $0x110] sm:$0xf]
        %v451 = vld [vmem:[%s1 + $0x114] sm:$0xf]
        %v452 = vld [vmem:[%s1 + $0x118] sm:$0xf]
        %v453 = vld [vmem:[%s1 + $0x11c] sm:$0xf]
        %v454 = vld [vmem:[%s1 + $0x120] sm:$0xf]
        %v455 = vld [vmem:[%s1 + $0x124] sm:$0xf]
        %v456 = vld [vmem:[%s1 + $0x128] sm:$0xf]
        %v457 = vld [vmem:[%s1 + $0x12c] sm:$0xf]
        %v458 = vld [vmem:[%s1 + $0x130] sm:$0xf]
        %v459 = vld [vmem:[%s1 + $0x134] sm:$0xf]
        %v460 = vld [vmem:[%s1 + $0x138] sm:$0xf]
        %v461 = vld [vmem:[%s1 + $0x13c] sm:$0xf]
        %v462 = vld [vmem:[%s1 + $0x140] sm:$0xf]
        %v463 = vld [vmem:[%s1 + $0x144] sm:$0xf]
        %v464 = vld [vmem:[%s1 + $0x148] sm:$0xf]
        %v465 = vld [vmem:[%s1 + $0x14c] sm:$0xf]
        %v466 = vld [vmem:[%s1 + $0x150] sm:$0xf]
        %v467 = vld [vmem:[%s1 + $0x154] sm:$0xf]
        %v468 = vld [vmem:[%s1 + $0x158] sm:$0xf]
        %v469 = vld [vmem:[%s1 + $0x15c] sm:$0xf]
        %v470 = vld [vmem:[%s1 + $0x160] sm:$0xf]
        %v471 = vld [vmem:[%s1 + $0x164] sm:$0xf]
        %v472 = vld [vmem:[%s1 + $0x168] sm:$0xf]
        %v473 = vld [vmem:[%s1 + $0x16c] sm:$0xf]
        %v474 = vld [vmem:[%s1 + $0x170] sm:$0xf]
        %v475 = vld [vmem:[%s1 + $0x174] sm:$0xf]
        %v476 = vld [vmem:[%s1 + $0x178] sm:$0xf]
        %v477 = vld [vmem:[%s1 + $0x17c] sm:$0xf]
        %v478 = vld [vmem:[%s1 + $0x180] sm:$0xf]
        %v479 = vld [vmem:[%s1 + $0x184] sm:$0xf]
        %v480 = vld [vmem:[%s1 + $0x188] sm:$0xf]
        %v481 = vld [vmem:[%s1 + $0x18c] sm:$0xf]
        %v482 = vld [vmem:[%s1 + $0x190] sm:$0xf]
        %v483 = vld [vmem:[%s1 + $0x194] sm:$0xf]
        %v484 = vld [vmem:[%s1 + $0x198] sm:$0xf]
        %v485 = vld [vmem:[%s1 + $0x19c] sm:$0xf]
        %v486 = vld [vmem:[%s1 + $0x1a0] sm:$0xf]
        %v487 = vld [vmem:[%s1 + $0x1a4] sm:$0xf]
        %v488 = vld [vmem:[%s1 + $0x1a8] sm:$0xf]
        %v489 = vld [vmem:[%s1 + $0x1ac] sm:$0xf]
        %v490 = vld [vmem:[%s1 + $0x1b0] sm:$0xf]
        %v491 = vld [vmem:[%s1 + $0x1b4] sm:$0xf]
        %v492 = vld [vmem:[%s1 + $0x1b8] sm:$0xf]
        %v493 = vld [vmem:[%s1 + $0x1bc] sm:$0xf]
        %v494 = vld [vmem:[%s1 + $0x1c0] sm:$0xf]
        %v495 = vld [vmem:[%s1 + $0x1c4] sm:$0xf]
        %v496 = vld [vmem:[%s1 + $0x1c8] sm:$0xf]
        %v497 = vld [vmem:[%s1 + $0x1cc] sm:$0xf]
        %v498 = vld [vmem:[%s1 + $0x1d0] sm:$0xf]
        %v499 = vld [vmem:[%s1 + $0x1d4] sm:$0xf]
        %v500 = vld [vmem:[%s1 + $0x1d8] sm:$0xf]
        %v501 = vld [vmem:[%s1 + $0x1dc] sm:$0xf]
        %v502 = vld [vmem:[%s1 + $0x1e0] sm:$0xf]
        %v503 = vld [vmem:[%s1 + $0x1e4] sm:$0xf]
        %v504 = vld [vmem:[%s1 + $0x1e8] sm:$0xf]
        %v505 = vld [vmem:[%s1 + $0x1ec] sm:$0xf]
        %v506 = vld [vmem:[%s1 + $0x1f0] sm:$0xf]
        %v507 = vld [vmem:[%s1 + $0x1f4] sm:$0xf]
        %v508 = vld [vmem:[%s1 + $0x1f8] sm:$0xf]
        %v509 = vld [vmem:[%s1 + $0x1fc] sm:$0xf]
        %v510 = vld [vmem:[%s1 + $0x200] sm:$0xf]
        %v511 = vld [vmem:[%s1 + $0x204] sm:$0xf]
        %v512 = vld [vmem:[%s1 + $0x208] sm:$0xf]
        %v513 = vld [vmem:[%s1 + $0x20c] sm:$0xf]
        %v514 = vld [vmem:[%s1 + $0x210] sm:$0xf]
        %v515 = vld [vmem:[%s1 + $0x214] sm:$0xf]
        %v516 = vld [vmem:[%s1 + $0x218] sm:$0xf]
        %v517 = vld [vmem:[%s1 + $0x21c] sm:$0xf]
        %v518 = vld [vmem:[%s1 + $0x220] sm:$0xf]
        %v519 = vld [vmem:[%s1 + $0x224] sm:$0xf]
        %v520 = vld [vmem:[%s1 + $0x228] sm:$0xf]
        %v521 = vld [vmem:[%s1 + $0x22c] sm:$0xf]
        %v522 = vld [vmem:[%s1 + $0x230] sm:$0xf]
        %v523 = vld [vmem:[%s1 + $0x234] sm:$0xf]
        %v524 = vld [vmem:[%s1 + $0x238] sm:$0xf]
        %v525 = vld [vmem:[%s1 + $0x23c] sm:$0xf]
        %v526 = vld [vmem:[%s2] sm:$0x1]
        %v527 = vld [vmem:[%s354] sm:$0xff]
        %v528 = vld [vmem:[%s354 + $0x8] sm:$0xff]
        %v529 = vld [vmem:[%s354 + $0x10] sm:$0xff]
        %v530 = vld [vmem:[%s354 + $0x18] sm:$0xff]
        %v531 = vld [vmem:[%s354 + $0x20] sm:$0xf]
        %v532 = vld [vmem:[%s354 + $0x24] sm:$0xff]
        %v533 = vld [vmem:[%s354 + $0x2c] sm:$0xff]
        %v534 = vld [vmem:[%s354 + $0x34] sm:$0xff]
        %v535 = vld [vmem:[%s354 + $0x3c] sm:$0xff]
        %v536 = vld [vmem:[%s354 + $0x44] sm:$0xf]
        %v537 = vld [vmem:[%s354 + $0x48] sm:$0xff]
        %v538 = vld [vmem:[%s354 + $0x50] sm:$0xff]
        %v539 = vld [vmem:[%s354 + $0x58] sm:$0xff]
        %v540 = vld [vmem:[%s354 + $0x60] sm:$0xff]
        %v541 = vld [vmem:[%s354 + $0x68] sm:$0xf]
        %v542 = vld [vmem:[%s354 + $0x6c] sm:$0xff]
        %v543 = vld [vmem:[%s354 + $0x74] sm:$0xff]
        %v544 = vld [vmem:[%s354 + $0x7c] sm:$0xff]
        %v545 = vld [vmem:[%s354 + $0x84] sm:$0xff]
        %v546 = vld [vmem:[%s354 + $0x8c] sm:$0xf]
        %v547 = vld [vmem:[%s354 + $0x90] sm:$0xff]
        %v548 = vld [vmem:[%s354 + $0x98] sm:$0xff]
        %v549 = vld [vmem:[%s354 + $0xa0] sm:$0xff]
        %v550 = vld [vmem:[%s354 + $0xa8] sm:$0xff]
        %v551 = vld [vmem:[%s354 + $0xb0] sm:$0xf]
        %v552 = vld [vmem:[%s354 + $0xb4] sm:$0xff]
        %v553 = vld [vmem:[%s354 + $0xbc] sm:$0xff]
        %v554 = vld [vmem:[%s354 + $0xc4] sm:$0xff]
        %v555 = vld [vmem:[%s354 + $0xcc] sm:$0xff]
        %v556 = vld [vmem:[%s354 + $0xd4] sm:$0xf]
        %v557 = vld [vmem:[%s354 + $0xd8] sm:$0xff]
        %v558 = vld [vmem:[%s354 + $0xe0] sm:$0xff]
        %v559 = vld [vmem:[%s354 + $0xe8] sm:$0xff]
        %v560 = vld [vmem:[%s354 + $0xf0] sm:$0xff]
        %v561 = vld [vmem:[%s354 + $0xf8] sm:$0xf]
        %v562 = vld [vmem:[%s354 + $0xfc] sm:$0xff]
        %v563 = vld [vmem:[%s354 + $0x104] sm:$0xff]
        %v564 = vld [vmem:[%s354 + $0x10c] sm:$0xff]
        %v565 = vld [vmem:[%s354 + $0x114] sm:$0xff]
        %v566 = vld [vmem:[%s354 + $0x11c] sm:$0xf]
        %v567 = vld [vmem:[%s354 + $0x120] sm:$0xff]
        %v568 = vld [vmem:[%s354 + $0x128] sm:$0xff]
        %v569 = vld [vmem:[%s354 + $0x130] sm:$0xff]
        %v570 = vld [vmem:[%s354 + $0x138] sm:$0xff]
        %v571 = vld [vmem:[%s354 + $0x140] sm:$0xf]
        %v573 = vperm.slane %v526, 0
        %v620 = vunpack.c.l.b16 %v527
        %v621 = vunpack.c.h.b16 %v527
        %v622 = vunpack.c.l.b16 %v528
        %v623 = vunpack.c.h.b16 %v528
        %v624 = vunpack.c.l.b16 %v529
        %v625 = vunpack.c.h.b16 %v529
        %v626 = vunpack.c.l.b16 %v530
        %v627 = vunpack.c.h.b16 %v530
        %v628 = vunpack.c.l.b16 %v531
        %v629 = vunpack.c.l.b16 %v532
        %v630 = vunpack.c.h.b16 %v532
        %v631 = vunpack.c.l.b16 %v533
        %v632 = vunpack.c.h.b16 %v533
        %v633 = vunpack.c.l.b16 %v534
        %v634 = vunpack.c.h.b16 %v534
        %v635 = vunpack.c.l.b16 %v535
        %v636 = vunpack.c.h.b16 %v535
        %v637 = vunpack.c.l.b16 %v536
        %v638 = vunpack.c.l.b16 %v537
        %v639 = vunpack.c.h.b16 %v537
        %v640 = vunpack.c.l.b16 %v538
        %v641 = vunpack.c.h.b16 %v538
        %v642 = vunpack.c.l.b16 %v539
        %v643 = vunpack.c.h.b16 %v539
        %v644 = vunpack.c.l.b16 %v540
        %v645 = vunpack.c.h.b16 %v540
        %v646 = vunpack.c.l.b16 %v541
        %v647 = vunpack.c.l.b16 %v542
        %v648 = vunpack.c.h.b16 %v542
        %v649 = vunpack.c.l.b16 %v543
        %v650 = vunpack.c.h.b16 %v543
        %v651 = vunpack.c.l.b16 %v544
        %v652 = vunpack.c.h.b16 %v544
        %v653 = vunpack.c.l.b16 %v545
        %v654 = vunpack.c.h.b16 %v545
        %v655 = vunpack.c.l.b16 %v546
        %v656 = vunpack.c.l.b16 %v547
        %v657 = vunpack.c.h.b16 %v547
        %v658 = vunpack.c.l.b16 %v548
        %v659 = vunpack.c.h.b16 %v548
        %v660 = vunpack.c.l.b16 %v549
        %v661 = vunpack.c.h.b16 %v549
        %v662 = vunpack.c.l.b16 %v550
        %v663 = vunpack.c.h.b16 %v550
        %v664 = vunpack.c.l.b16 %v551
        %v665 = vunpack.c.l.b16 %v552
        %v666 = vunpack.c.h.b16 %v552
        %v667 = vunpack.c.l.b16 %v553
        %v668 = vunpack.c.h.b16 %v553
        %v669 = vunpack.c.l.b16 %v554
        %v670 = vunpack.c.h.b16 %v554
        %v671 = vunpack.c.l.b16 %v555
        %v672 = vunpack.c.h.b16 %v555
        %v673 = vunpack.c.l.b16 %v556
        %v674 = vunpack.c.l.b16 %v557
        %v675 = vunpack.c.h.b16 %v557
        %v676 = vunpack.c.l.b16 %v558
        %v677 = vunpack.c.h.b16 %v558
        %v678 = vunpack.c.l.b16 %v559
        %v679 = vunpack.c.h.b16 %v559
        %v680 = vunpack.c.l.b16 %v560
        %v681 = vunpack.c.h.b16 %v560
        %v682 = vunpack.c.l.b16 %v561
        %v683 = vunpack.c.l.b16 %v562
        %v684 = vunpack.c.h.b16 %v562
        %v685 = vunpack.c.l.b16 %v563
        %v686 = vunpack.c.h.b16 %v563
        %v687 = vunpack.c.l.b16 %v564
        %v688 = vunpack.c.h.b16 %v564
        %v689 = vunpack.c.l.b16 %v565
        %v690 = vunpack.c.h.b16 %v565
        %v691 = vunpack.c.l.b16 %v566
        %v692 = vunpack.c.l.b16 %v567
        %v693 = vunpack.c.h.b16 %v567
        %v694 = vunpack.c.l.b16 %v568
        %v695 = vunpack.c.h.b16 %v568
        %v696 = vunpack.c.l.b16 %v569
        %v697 = vunpack.c.h.b16 %v569
        %v698 = vunpack.c.l.b16 %v570
        %v699 = vunpack.c.h.b16 %v570
        %v700 = vunpack.c.l.b16 %v571
        %v701 = vpack.c.b16 %v629, %v620
        %v702 = vpack.c.b16 %v630, %v621
        %v703 = vpack.c.b16 %v631, %v622
        %v704 = vpack.c.b16 %v632, %v623
        %v705 = vpack.c.b16 %v633, %v624
        %v706 = vpack.c.b16 %v634, %v625
        %v707 = vpack.c.b16 %v635, %v626
        %v708 = vpack.c.b16 %v636, %v627
        %v709 = vpack.c.b16 %v637, %v628
        %v710 = vpack.c.b16 %v647, %v638
        %v711 = vpack.c.b16 %v648, %v639
        %v712 = vpack.c.b16 %v649, %v640
        %v713 = vpack.c.b16 %v650, %v641
        %v714 = vpack.c.b16 %v651, %v642
        %v715 = vpack.c.b16 %v652, %v643
        %v716 = vpack.c.b16 %v653, %v644
        %v717 = vpack.c.b16 %v654, %v645
        %v718 = vpack.c.b16 %v655, %v646
        %v719 = vpack.c.b16 %v665, %v656
        %v720 = vpack.c.b16 %v666, %v657
        %v721 = vpack.c.b16 %v667, %v658
        %v722 = vpack.c.b16 %v668, %v659
        %v723 = vpack.c.b16 %v669, %v660
        %v724 = vpack.c.b16 %v670, %v661
        %v725 = vpack.c.b16 %v671, %v662
        %v726 = vpack.c.b16 %v672, %v663
        %v727 = vpack.c.b16 %v673, %v664
        %v728 = vpack.c.b16 %v683, %v674
        %v729 = vpack.c.b16 %v684, %v675
        %v730 = vpack.c.b16 %v685, %v676
        %v731 = vpack.c.b16 %v686, %v677
        %v732 = vpack.c.b16 %v687, %v678
        %v733 = vpack.c.b16 %v688, %v679
        %v734 = vpack.c.b16 %v689, %v680
        %v735 = vpack.c.b16 %v690, %v681
        %v736 = vpack.c.b16 %v691, %v682
        %v737 = vpack.c.b16 %v692, %v692
        %v738 = vpack.c.b16 %v693, %v693
        %v739 = vpack.c.b16 %v694, %v694
        %v740 = vpack.c.b16 %v695, %v695
        %v741 = vpack.c.b16 %v696, %v696
        %v742 = vpack.c.b16 %v697, %v697
        %v743 = vpack.c.b16 %v698, %v698
        %v744 = vpack.c.b16 %v699, %v699
        %v745 = vpack.c.b16 %v700, %v700
        %v935 = vunpack.c.l.b16 %v382
        %v936 = vunpack.c.l.b16 %v383
        %v937 = vunpack.c.l.b16 %v384
        %v938 = vunpack.c.l.b16 %v385
        %v939 = vunpack.c.l.b16 %v386
        %v940 = vunpack.c.l.b16 %v387
        %v941 = vunpack.c.l.b16 %v388
        %v942 = vunpack.c.l.b16 %v389
        %v943 = vunpack.c.l.b16 %v390
        %v944 = vunpack.c.l.b16 %v391
        %v945 = vunpack.c.l.b16 %v392
        %v946 = vunpack.c.l.b16 %v393
        %v947 = vunpack.c.l.b16 %v394
        %v948 = vunpack.c.l.b16 %v395
        %v949 = vunpack.c.l.b16 %v396
        %v950 = vunpack.c.l.b16 %v397
        %v951 = vunpack.c.l.b16 %v398
        %v952 = vunpack.c.l.b16 %v399
        %v953 = vunpack.c.l.b16 %v400
        %v954 = vunpack.c.l.b16 %v401
        %v955 = vunpack.c.l.b16 %v402
        %v956 = vunpack.c.l.b16 %v403
        %v957 = vunpack.c.l.b16 %v404
        %v958 = vunpack.c.l.b16 %v405
        %v959 = vunpack.c.l.b16 %v406
        %v960 = vunpack.c.l.b16 %v407
        %v961 = vunpack.c.l.b16 %v408
        %v962 = vunpack.c.l.b16 %v409
        %v963 = vunpack.c.l.b16 %v410
        %v964 = vunpack.c.l.b16 %v411
        %v965 = vunpack.c.l.b16 %v412
        %v966 = vunpack.c.l.b16 %v413
        %v967 = vunpack.c.l.b16 %v414
        %v968 = vunpack.c.l.b16 %v415
        %v969 = vunpack.c.l.b16 %v416
        %v970 = vunpack.c.l.b16 %v417
        %v971 = vunpack.c.l.b16 %v418
        %v972 = vunpack.c.l.b16 %v419
        %v973 = vunpack.c.l.b16 %v420
        %v974 = vunpack.c.l.b16 %v421
        %v975 = vunpack.c.l.b16 %v422
        %v976 = vunpack.c.l.b16 %v423
        %v977 = vunpack.c.l.b16 %v424
        %v978 = vunpack.c.l.b16 %v425
        %v979 = vunpack.c.l.b16 %v426
        %v980 = vunpack.c.l.b16 %v427
        %v981 = vunpack.c.l.b16 %v428
        %v982 = vunpack.c.l.b16 %v429
        %v983 = vunpack.c.l.b16 %v430
        %v984 = vunpack.c.l.b16 %v431
        %v985 = vunpack.c.l.b16 %v432
        %v986 = vunpack.c.l.b16 %v433
        %v987 = vunpack.c.l.b16 %v434
        %v988 = vunpack.c.l.b16 %v435
        %v989 = vunpack.c.l.b16 %v436
        %v990 = vunpack.c.l.b16 %v437
        %v991 = vunpack.c.l.b16 %v438
        %v992 = vunpack.c.l.b16 %v439
        %v993 = vunpack.c.l.b16 %v440
        %v994 = vunpack.c.l.b16 %v441
        %v995 = vunpack.c.l.b16 %v442
        %v996 = vunpack.c.l.b16 %v443
        %v997 = vunpack.c.l.b16 %v444
        %v998 = vunpack.c.l.b16 %v445
        %v999 = vunpack.c.l.b16 %v446
        %v1000 = vunpack.c.l.b16 %v447
        %v1001 = vunpack.c.l.b16 %v448
        %v1002 = vunpack.c.l.b16 %v449
        %v1003 = vunpack.c.l.b16 %v450
        %v1004 = vunpack.c.l.b16 %v451
        %v1005 = vunpack.c.l.b16 %v452
        %v1006 = vunpack.c.l.b16 %v453
        %v1007 = vunpack.c.l.b16 %v454
        %v1008 = vunpack.c.l.b16 %v455
        %v1009 = vunpack.c.l.b16 %v456
        %v1010 = vunpack.c.l.b16 %v457
        %v1011 = vunpack.c.l.b16 %v458
        %v1012 = vunpack.c.l.b16 %v459
        %v1013 = vunpack.c.l.b16 %v460
        %v1014 = vunpack.c.l.b16 %v461
        %v1015 = vunpack.c.l.b16 %v462
        %v1016 = vunpack.c.l.b16 %v463
        %v1017 = vunpack.c.l.b16 %v464
        %v1018 = vunpack.c.l.b16 %v465
        %v1019 = vunpack.c.l.b16 %v466
        %v1020 = vunpack.c.l.b16 %v467
        %v1021 = vunpack.c.l.b16 %v468
        %v1022 = vunpack.c.l.b16 %v469
        %v1023 = vunpack.c.l.b16 %v470
        %v1024 = vunpack.c.l.b16 %v471
        %v1025 = vunpack.c.l.b16 %v472
        %v1026 = vunpack.c.l.b16 %v473
        %v1027 = vunpack.c.l.b16 %v474
        %v1028 = vunpack.c.l.b16 %v475
        %v1029 = vunpack.c.l.b16 %v476
        %v1030 = vunpack.c.l.b16 %v477
        %v1031 = vunpack.c.l.b16 %v478
        %v1032 = vunpack.c.l.b16 %v479
        %v1033 = vunpack.c.l.b16 %v480
        %v1034 = vunpack.c.l.b16 %v481
        %v1035 = vunpack.c.l.b16 %v482
        %v1036 = vunpack.c.l.b16 %v483
        %v1037 = vunpack.c.l.b16 %v484
        %v1038 = vunpack.c.l.b16 %v485
        %v1039 = vunpack.c.l.b16 %v486
        %v1040 = vunpack.c.l.b16 %v487
        %v1041 = vunpack.c.l.b16 %v488
        %v1042 = vunpack.c.l.b16 %v489
        %v1043 = vunpack.c.l.b16 %v490
        %v1044 = vunpack.c.l.b16 %v491
        %v1045 = vunpack.c.l.b16 %v492
        %v1046 = vunpack.c.l.b16 %v493
        %v1047 = vunpack.c.l.b16 %v494
        %v1048 = vunpack.c.l.b16 %v495
        %v1049 = vunpack.c.l.b16 %v496
        %v1050 = vunpack.c.l.b16 %v497
        %v1051 = vunpack.c.l.b16 %v498
        %v1052 = vunpack.c.l.b16 %v499
        %v1053 = vunpack.c.l.b16 %v500
        %v1054 = vunpack.c.l.b16 %v501
        %v1055 = vunpack.c.l.b16 %v502
        %v1056 = vunpack.c.l.b16 %v503
        %v1057 = vunpack.c.l.b16 %v504
        %v1058 = vunpack.c.l.b16 %v505
        %v1059 = vunpack.c.l.b16 %v506
        %v1060 = vunpack.c.l.b16 %v507
        %v1061 = vunpack.c.l.b16 %v508
        %v1062 = vunpack.c.l.b16 %v509
        %v1063 = vunpack.c.l.b16 %v510
        %v1064 = vunpack.c.l.b16 %v511
        %v1065 = vunpack.c.l.b16 %v512
        %v1066 = vunpack.c.l.b16 %v513
        %v1067 = vunpack.c.l.b16 %v514
        %v1068 = vunpack.c.l.b16 %v515
        %v1069 = vunpack.c.l.b16 %v516
        %v1070 = vunpack.c.l.b16 %v517
        %v1071 = vunpack.c.l.b16 %v518
        %v1072 = vunpack.c.l.b16 %v519
        %v1073 = vunpack.c.l.b16 %v520
        %v1074 = vunpack.c.l.b16 %v521
        %v1075 = vunpack.c.l.b16 %v522
        %v1076 = vunpack.c.l.b16 %v523
        %v1077 = vunpack.c.l.b16 %v524
        %v1078 = vunpack.c.l.b16 %v525
        %v1079 = vpack.c.b16 %v936, %v935
        %v1080 = vpack.c.b16 %v938, %v937
        %v1081 = vpack.c.b16 %v940, %v939
        %v1082 = vpack.c.b16 %v942, %v941
        %v1083 = vpack.c.b16 %v944, %v943
        %v1084 = vpack.c.b16 %v946, %v945
        %v1085 = vpack.c.b16 %v948, %v947
        %v1086 = vpack.c.b16 %v950, %v949
        %v1087 = vpack.c.b16 %v952, %v951
        %v1088 = vpack.c.b16 %v954, %v953
        %v1089 = vpack.c.b16 %v956, %v955
        %v1090 = vpack.c.b16 %v958, %v957
        %v1091 = vpack.c.b16 %v960, %v959
        %v1092 = vpack.c.b16 %v962, %v961
        %v1093 = vpack.c.b16 %v964, %v963
        %v1094 = vpack.c.b16 %v966, %v965
        %v1095 = vpack.c.b16 %v968, %v967
        %v1096 = vpack.c.b16 %v970, %v969
        %v1097 = vpack.c.b16 %v972, %v971
        %v1098 = vpack.c.b16 %v974, %v973
        %v1099 = vpack.c.b16 %v976, %v975
        %v1100 = vpack.c.b16 %v978, %v977
        %v1101 = vpack.c.b16 %v980, %v979
        %v1102 = vpack.c.b16 %v982, %v981
        %v1103 = vpack.c.b16 %v984, %v983
        %v1104 = vpack.c.b16 %v986, %v985
        %v1105 = vpack.c.b16 %v988, %v987
        %v1106 = vpack.c.b16 %v990, %v989
        %v1107 = vpack.c.b16 %v992, %v991
        %v1108 = vpack.c.b16 %v994, %v993
        %v1109 = vpack.c.b16 %v996, %v995
        %v1110 = vpack.c.b16 %v998, %v997
        %v1111 = vpack.c.b16 %v1000, %v999
        %v1112 = vpack.c.b16 %v1002, %v1001
        %v1113 = vpack.c.b16 %v1004, %v1003
        %v1114 = vpack.c.b16 %v1006, %v1005
        %v1115 = vpack.c.b16 %v1008, %v1007
        %v1116 = vpack.c.b16 %v1010, %v1009
        %v1117 = vpack.c.b16 %v1012, %v1011
        %v1118 = vpack.c.b16 %v1014, %v1013
        %v1119 = vpack.c.b16 %v1016, %v1015
        %v1120 = vpack.c.b16 %v1018, %v1017
        %v1121 = vpack.c.b16 %v1020, %v1019
        %v1122 = vpack.c.b16 %v1022, %v1021
        %v1123 = vpack.c.b16 %v1024, %v1023
        %v1124 = vpack.c.b16 %v1026, %v1025
        %v1125 = vpack.c.b16 %v1028, %v1027
        %v1126 = vpack.c.b16 %v1030, %v1029
        %v1127 = vpack.c.b16 %v1032, %v1031
        %v1128 = vpack.c.b16 %v1034, %v1033
        %v1129 = vpack.c.b16 %v1036, %v1035
        %v1130 = vpack.c.b16 %v1038, %v1037
        %v1131 = vpack.c.b16 %v1040, %v1039
        %v1132 = vpack.c.b16 %v1042, %v1041
        %v1133 = vpack.c.b16 %v1044, %v1043
        %v1134 = vpack.c.b16 %v1046, %v1045
        %v1135 = vpack.c.b16 %v1048, %v1047
        %v1136 = vpack.c.b16 %v1050, %v1049
        %v1137 = vpack.c.b16 %v1052, %v1051
        %v1138 = vpack.c.b16 %v1054, %v1053
        %v1139 = vpack.c.b16 %v1056, %v1055
        %v1140 = vpack.c.b16 %v1058, %v1057
        %v1141 = vpack.c.b16 %v1060, %v1059
        %v1142 = vpack.c.b16 %v1062, %v1061
        %v1143 = vpack.c.b16 %v1064, %v1063
        %v1144 = vpack.c.b16 %v1066, %v1065
        %v1145 = vpack.c.b16 %v1068, %v1067
        %v1146 = vpack.c.b16 %v1070, %v1069
        %v1147 = vpack.c.b16 %v1072, %v1071
        %v1148 = vpack.c.b16 %v1074, %v1073
        %v1149 = vpack.c.b16 %v1076, %v1075
        %v1150 = vpack.c.b16 %v1078, %v1077
        %1223 = vmatpush.bf16.msra.mxu0 %v1086
        %1224 = vmatpush.bf16.msra.mxu0 %v1085
        %1225 = vmatpush.bf16.msra.mxu0 %v1084
        %1226 = vmatpush.bf16.msra.mxu0 %v1083
        %1227 = vmatpush.bf16.msra.mxu0 %v1082
        %1228 = vmatpush.bf16.msra.mxu0 %v1081
        %1229 = vmatpush.bf16.msra.mxu0 %v1080
        %1230 = vmatpush.bf16.msra.mxu0 %v1079
        %1231 = vmatmul.bf16.gmra.mxu0 %v701
        %v1232 = vpop.f32.mrf.mxu0
        %v1233 = vadd.f32 %v573, %v1232
        %v1234 = vpop.f32.mrf.mxu0
        %v1235 = vadd.f32 %v573, %v1234
        %1236 = vmatmul.bf16.gmra.mxu0 %v710
        %v1237 = vpop.f32.mrf.mxu0
        %v1238 = vadd.f32 %v573, %v1237
        %v1239 = vpop.f32.mrf.mxu0
        %v1240 = vadd.f32 %v573, %v1239
        %1241 = vmatmul.bf16.gmra.mxu0 %v719
        %v1242 = vpop.f32.mrf.mxu0
        %v1243 = vadd.f32 %v573, %v1242
        %v1244 = vpop.f32.mrf.mxu0
        %v1245 = vadd.f32 %v573, %v1244
        %1246 = vmatmul.bf16.gmra.mxu0 %v728
        %v1247 = vpop.f32.mrf.mxu0
        %v1248 = vadd.f32 %v573, %v1247
        %v1249 = vpop.f32.mrf.mxu0
        %v1250 = vadd.f32 %v573, %v1249
        %1251 = vmatmul.bf16.gmra.mxu0 %v737
        %v1252 = vpop.f32.mrf.mxu0
        %v1253 = vadd.f32 %v573, %v1252
        %v1254 = vpop.f32.mrf.mxu0
        %1255 = vdwg.mxu0
        %1256 = vmatpush.bf16.msra.mxu0 %v1094
        %1257 = vmatpush.bf16.msra.mxu0 %v1093
        %1258 = vmatpush.bf16.msra.mxu0 %v1092
        %1259 = vmatpush.bf16.msra.mxu0 %v1091
        %1260 = vmatpush.bf16.msra.mxu0 %v1090
        %1261 = vmatpush.bf16.msra.mxu0 %v1089
        %1262 = vmatpush.bf16.msra.mxu0 %v1088
        %1263 = vmatpush.bf16.msra.mxu0 %v1087
        %1264 = vmatmul.bf16.gmra.mxu0 %v702
        %v1265 = vpop.f32.mrf.mxu0
        %v1266 = vadd.f32 %v1233, %v1265
        %v1267 = vpop.f32.mrf.mxu0
        %v1268 = vadd.f32 %v1235, %v1267
        %1269 = vmatmul.bf16.gmra.mxu0 %v711
        %v1270 = vpop.f32.mrf.mxu0
        %v1271 = vadd.f32 %v1238, %v1270
        %v1272 = vpop.f32.mrf.mxu0
        %v1273 = vadd.f32 %v1240, %v1272
        %1274 = vmatmul.bf16.gmra.mxu0 %v720
        %v1275 = vpop.f32.mrf.mxu0
        %v1276 = vadd.f32 %v1243, %v1275
        %v1277 = vpop.f32.mrf.mxu0
        %v1278 = vadd.f32 %v1245, %v1277
        %1279 = vmatmul.bf16.gmra.mxu0 %v729
        %v1280 = vpop.f32.mrf.mxu0
        %v1281 = vadd.f32 %v1248, %v1280
        %v1282 = vpop.f32.mrf.mxu0
        %v1283 = vadd.f32 %v1250, %v1282
        %1284 = vmatmul.bf16.gmra.mxu0 %v738
        %v1285 = vpop.f32.mrf.mxu0
        %v1286 = vadd.f32 %v1253, %v1285
        %v1287 = vpop.f32.mrf.mxu0
        %1288 = vdwg.mxu0
        %1289 = vmatpush.bf16.msra.mxu0 %v1102
        %1290 = vmatpush.bf16.msra.mxu0 %v1101
        %1291 = vmatpush.bf16.msra.mxu0 %v1100
        %1292 = vmatpush.bf16.msra.mxu0 %v1099
        %1293 = vmatpush.bf16.msra.mxu0 %v1098
        %1294 = vmatpush.bf16.msra.mxu0 %v1097
        %1295 = vmatpush.bf16.msra.mxu0 %v1096
        %1296 = vmatpush.bf16.msra.mxu0 %v1095
        %1297 = vmatmul.bf16.gmra.mxu0 %v703
        %v1298 = vpop.f32.mrf.mxu0
        %v1299 = vadd.f32 %v1266, %v1298
        %v1300 = vpop.f32.mrf.mxu0
        %v1301 = vadd.f32 %v1268, %v1300
        %1302 = vmatmul.bf16.gmra.mxu0 %v712
        %v1303 = vpop.f32.mrf.mxu0
        %v1304 = vadd.f32 %v1271, %v1303
        %v1305 = vpop.f32.mrf.mxu0
        %v1306 = vadd.f32 %v1273, %v1305
        %1307 = vmatmul.bf16.gmra.mxu0 %v721
        %v1308 = vpop.f32.mrf.mxu0
        %v1309 = vadd.f32 %v1276, %v1308
        %v1310 = vpop.f32.mrf.mxu0
        %v1311 = vadd.f32 %v1278, %v1310
        %1312 = vmatmul.bf16.gmra.mxu0 %v730
        %v1313 = vpop.f32.mrf.mxu0
        %v1314 = vadd.f32 %v1281, %v1313
        %v1315 = vpop.f32.mrf.mxu0
        %v1316 = vadd.f32 %v1283, %v1315
        %1317 = vmatmul.bf16.gmra.mxu0 %v739
        %v1318 = vpop.f32.mrf.mxu0
        %v1319 = vadd.f32 %v1286, %v1318
        %v1320 = vpop.f32.mrf.mxu0
        %1321 = vdwg.mxu0
        %1322 = vmatpush.bf16.msra.mxu0 %v1110
        %1323 = vmatpush.bf16.msra.mxu0 %v1109
        %1324 = vmatpush.bf16.msra.mxu0 %v1108
        %1325 = vmatpush.bf16.msra.mxu0 %v1107
        %1326 = vmatpush.bf16.msra.mxu0 %v1106
        %1327 = vmatpush.bf16.msra.mxu0 %v1105
        %1328 = vmatpush.bf16.msra.mxu0 %v1104
        %1329 = vmatpush.bf16.msra.mxu0 %v1103
        %1330 = vmatmul.bf16.gmra.mxu0 %v704
        %v1331 = vpop.f32.mrf.mxu0
        %v1332 = vadd.f32 %v1299, %v1331
        %v1333 = vpop.f32.mrf.mxu0
        %v1334 = vadd.f32 %v1301, %v1333
        %1335 = vmatmul.bf16.gmra.mxu0 %v713
        %v1336 = vpop.f32.mrf.mxu0
        %v1337 = vadd.f32 %v1304, %v1336
        %v1338 = vpop.f32.mrf.mxu0
        %v1339 = vadd.f32 %v1306, %v1338
        %1340 = vmatmul.bf16.gmra.mxu0 %v722
        %v1341 = vpop.f32.mrf.mxu0
        %v1342 = vadd.f32 %v1309, %v1341
        %v1343 = vpop.f32.mrf.mxu0
        %v1344 = vadd.f32 %v1311, %v1343
        %1345 = vmatmul.bf16.gmra.mxu0 %v731
        %v1346 = vpop.f32.mrf.mxu0
        %v1347 = vadd.f32 %v1314, %v1346
        %v1348 = vpop.f32.mrf.mxu0
        %v1349 = vadd.f32 %v1316, %v1348
        %1350 = vmatmul.bf16.gmra.mxu0 %v740
        %v1351 = vpop.f32.mrf.mxu0
        %v1352 = vadd.f32 %v1319, %v1351
        %v1353 = vpop.f32.mrf.mxu0
        %1354 = vdwg.mxu0
        %1355 = vmatpush.bf16.msra.mxu0 %v1118
        %1356 = vmatpush.bf16.msra.mxu0 %v1117
        %1357 = vmatpush.bf16.msra.mxu0 %v1116
        %1358 = vmatpush.bf16.msra.mxu0 %v1115
        %1359 = vmatpush.bf16.msra.mxu0 %v1114
        %1360 = vmatpush.bf16.msra.mxu0 %v1113
        %1361 = vmatpush.bf16.msra.mxu0 %v1112
        %1362 = vmatpush.bf16.msra.mxu0 %v1111
        %1363 = vmatmul.bf16.gmra.mxu0 %v705
        %v1364 = vpop.f32.mrf.mxu0
        %v1365 = vadd.f32 %v1332, %v1364
        %v1366 = vpop.f32.mrf.mxu0
        %v1367 = vadd.f32 %v1334, %v1366
        %1368 = vmatmul.bf16.gmra.mxu0 %v714
        %v1369 = vpop.f32.mrf.mxu0
        %v1370 = vadd.f32 %v1337, %v1369
        %v1371 = vpop.f32.mrf.mxu0
        %v1372 = vadd.f32 %v1339, %v1371
        %1373 = vmatmul.bf16.gmra.mxu0 %v723
        %v1374 = vpop.f32.mrf.mxu0
        %v1375 = vadd.f32 %v1342, %v1374
        %v1376 = vpop.f32.mrf.mxu0
        %v1377 = vadd.f32 %v1344, %v1376
        %1378 = vmatmul.bf16.gmra.mxu0 %v732
        %v1379 = vpop.f32.mrf.mxu0
        %v1380 = vadd.f32 %v1347, %v1379
        %v1381 = vpop.f32.mrf.mxu0
        %v1382 = vadd.f32 %v1349, %v1381
        %1383 = vmatmul.bf16.gmra.mxu0 %v741
        %v1384 = vpop.f32.mrf.mxu0
        %v1385 = vadd.f32 %v1352, %v1384
        %v1386 = vpop.f32.mrf.mxu0
        %1387 = vdwg.mxu0
        %1388 = vmatpush.bf16.msra.mxu0 %v1126
        %1389 = vmatpush.bf16.msra.mxu0 %v1125
        %1390 = vmatpush.bf16.msra.mxu0 %v1124
        %1391 = vmatpush.bf16.msra.mxu0 %v1123
        %1392 = vmatpush.bf16.msra.mxu0 %v1122
        %1393 = vmatpush.bf16.msra.mxu0 %v1121
        %1394 = vmatpush.bf16.msra.mxu0 %v1120
        %1395 = vmatpush.bf16.msra.mxu0 %v1119
        %1396 = vmatmul.bf16.gmra.mxu0 %v706
        %v1397 = vpop.f32.mrf.mxu0
        %v1398 = vadd.f32 %v1365, %v1397
        %v1399 = vpop.f32.mrf.mxu0
        %v1400 = vadd.f32 %v1367, %v1399
        %1401 = vmatmul.bf16.gmra.mxu0 %v715
        %v1402 = vpop.f32.mrf.mxu0
        %v1403 = vadd.f32 %v1370, %v1402
        %v1404 = vpop.f32.mrf.mxu0
        %v1405 = vadd.f32 %v1372, %v1404
        %1406 = vmatmul.bf16.gmra.mxu0 %v724
        %v1407 = vpop.f32.mrf.mxu0
        %v1408 = vadd.f32 %v1375, %v1407
        %v1409 = vpop.f32.mrf.mxu0
        %v1410 = vadd.f32 %v1377, %v1409
        %1411 = vmatmul.bf16.gmra.mxu0 %v733
        %v1412 = vpop.f32.mrf.mxu0
        %v1413 = vadd.f32 %v1380, %v1412
        %v1414 = vpop.f32.mrf.mxu0
        %v1415 = vadd.f32 %v1382, %v1414
        %1416 = vmatmul.bf16.gmra.mxu0 %v742
        %v1417 = vpop.f32.mrf.mxu0
        %v1418 = vadd.f32 %v1385, %v1417
        %v1419 = vpop.f32.mrf.mxu0
        %1420 = vdwg.mxu0
        %1421 = vmatpush.bf16.msra.mxu0 %v1134
        %1422 = vmatpush.bf16.msra.mxu0 %v1133
        %1423 = vmatpush.bf16.msra.mxu0 %v1132
        %1424 = vmatpush.bf16.msra.mxu0 %v1131
        %1425 = vmatpush.bf16.msra.mxu0 %v1130
        %1426 = vmatpush.bf16.msra.mxu0 %v1129
        %1427 = vmatpush.bf16.msra.mxu0 %v1128
        %1428 = vmatpush.bf16.msra.mxu0 %v1127
        %1429 = vmatmul.bf16.gmra.mxu0 %v707
        %v1430 = vpop.f32.mrf.mxu0
        %v1431 = vadd.f32 %v1398, %v1430
        %v1432 = vpop.f32.mrf.mxu0
        %v1433 = vadd.f32 %v1400, %v1432
        %1434 = vmatmul.bf16.gmra.mxu0 %v716
        %v1435 = vpop.f32.mrf.mxu0
        %v1436 = vadd.f32 %v1403, %v1435
        %v1437 = vpop.f32.mrf.mxu0
        %v1438 = vadd.f32 %v1405, %v1437
        %1439 = vmatmul.bf16.gmra.mxu0 %v725
        %v1440 = vpop.f32.mrf.mxu0
        %v1441 = vadd.f32 %v1408, %v1440
        %v1442 = vpop.f32.mrf.mxu0
        %v1443 = vadd.f32 %v1410, %v1442
        %1444 = vmatmul.bf16.gmra.mxu0 %v734
        %v1445 = vpop.f32.mrf.mxu0
        %v1446 = vadd.f32 %v1413, %v1445
        %v1447 = vpop.f32.mrf.mxu0
        %v1448 = vadd.f32 %v1415, %v1447
        %1449 = vmatmul.bf16.gmra.mxu0 %v743
        %v1450 = vpop.f32.mrf.mxu0
        %v1451 = vadd.f32 %v1418, %v1450
        %v1452 = vpop.f32.mrf.mxu0
        %1453 = vdwg.mxu0
        %1454 = vmatpush.bf16.msra.mxu0 %v1142
        %1455 = vmatpush.bf16.msra.mxu0 %v1141
        %1456 = vmatpush.bf16.msra.mxu0 %v1140
        %1457 = vmatpush.bf16.msra.mxu0 %v1139
        %1458 = vmatpush.bf16.msra.mxu0 %v1138
        %1459 = vmatpush.bf16.msra.mxu0 %v1137
        %1460 = vmatpush.bf16.msra.mxu0 %v1136
        %1461 = vmatpush.bf16.msra.mxu0 %v1135
        %1462 = vmatmul.bf16.gmra.mxu0 %v708
        %v1463 = vpop.f32.mrf.mxu0
        %v1464 = vadd.f32 %v1431, %v1463
        %v1465 = vpop.f32.mrf.mxu0
        %v1466 = vadd.f32 %v1433, %v1465
        %1467 = vmatmul.bf16.gmra.mxu0 %v717
        %v1468 = vpop.f32.mrf.mxu0
        %v1469 = vadd.f32 %v1436, %v1468
        %v1470 = vpop.f32.mrf.mxu0
        %v1471 = vadd.f32 %v1438, %v1470
        %1472 = vmatmul.bf16.gmra.mxu0 %v726
        %v1473 = vpop.f32.mrf.mxu0
        %v1474 = vadd.f32 %v1441, %v1473
        %v1475 = vpop.f32.mrf.mxu0
        %v1476 = vadd.f32 %v1443, %v1475
        %1477 = vmatmul.bf16.gmra.mxu0 %v735
        %v1478 = vpop.f32.mrf.mxu0
        %v1479 = vadd.f32 %v1446, %v1478
        %v1480 = vpop.f32.mrf.mxu0
        %v1481 = vadd.f32 %v1448, %v1480
        %1482 = vmatmul.bf16.gmra.mxu0 %v744
        %v1483 = vpop.f32.mrf.mxu0
        %v1484 = vadd.f32 %v1451, %v1483
        %v1485 = vpop.f32.mrf.mxu0
        %1486 = vdwg.mxu0
        %1487 = vmatpush.bf16.msra.mxu0 %v1150
        %1488 = vmatpush.bf16.msra.mxu0 %v1149
        %1489 = vmatpush.bf16.msra.mxu0 %v1148
        %1490 = vmatpush.bf16.msra.mxu0 %v1147
        %1491 = vmatpush.bf16.msra.mxu0 %v1146
        %1492 = vmatpush.bf16.msra.mxu0 %v1145
        %1493 = vmatpush.bf16.msra.mxu0 %v1144
        %1494 = vmatpush.bf16.msra.mxu0 %v1143
        %1495 = vmatmul.bf16.gmra.mxu0 %v709
        %v1496 = vpop.f32.mrf.mxu0
        %v1497 = vadd.f32 %v1464, %v1496
        %v1498 = vpop.f32.mrf.mxu0
        %v1499 = vadd.f32 %v1466, %v1498
        %1500 = vmatmul.bf16.gmra.mxu0 %v718
        %v1501 = vpop.f32.mrf.mxu0
        %v1502 = vadd.f32 %v1469, %v1501
        %v1503 = vpop.f32.mrf.mxu0
        %v1504 = vadd.f32 %v1471, %v1503
        %1505 = vmatmul.bf16.gmra.mxu0 %v727
        %v1506 = vpop.f32.mrf.mxu0
        %v1507 = vadd.f32 %v1474, %v1506
        %v1508 = vpop.f32.mrf.mxu0
        %v1509 = vadd.f32 %v1476, %v1508
        %1510 = vmatmul.bf16.gmra.mxu0 %v736
        %v1511 = vpop.f32.mrf.mxu0
        %v1512 = vadd.f32 %v1479, %v1511
        %v1513 = vpop.f32.mrf.mxu0
        %v1514 = vadd.f32 %v1481, %v1513
        %1515 = vmatmul.bf16.gmra.mxu0 %v745
        %v1516 = vpop.f32.mrf.mxu0
        %v1517 = vadd.f32 %v1484, %v1516
        %v1518 = vpop.f32.mrf.mxu0
        %1519 = vdwg.mxu0
        %s1520 = scalar_lea.vmem %s354, 324 [#allocation2]
        %v1521 = vld [vmem:[%s1520] sm:$0xff]
        %v1522 = vld [vmem:[%s1520 + $0x8] sm:$0xff]
        %v1523 = vld [vmem:[%s1520 + $0x10] sm:$0xff]
        %v1524 = vld [vmem:[%s1520 + $0x18] sm:$0xff]
        %v1525 = vld [vmem:[%s1520 + $0x20] sm:$0xf]
        %v1526 = vld [vmem:[%s1520 + $0x24] sm:$0xff]
        %v1527 = vld [vmem:[%s1520 + $0x2c] sm:$0xff]
        %v1528 = vld [vmem:[%s1520 + $0x34] sm:$0xff]
        %v1529 = vld [vmem:[%s1520 + $0x3c] sm:$0xff]
        %v1530 = vld [vmem:[%s1520 + $0x44] sm:$0xf]
        %v1531 = vld [vmem:[%s1520 + $0x48] sm:$0xff]
        %v1532 = vld [vmem:[%s1520 + $0x50] sm:$0xff]
        %v1533 = vld [vmem:[%s1520 + $0x58] sm:$0xff]
        %v1534 = vld [vmem:[%s1520 + $0x60] sm:$0xff]
        %v1535 = vld [vmem:[%s1520 + $0x68] sm:$0xf]
        %v1536 = vld [vmem:[%s1520 + $0x6c] sm:$0xff]
        %v1537 = vld [vmem:[%s1520 + $0x74] sm:$0xff]
        %v1538 = vld [vmem:[%s1520 + $0x7c] sm:$0xff]
        %v1539 = vld [vmem:[%s1520 + $0x84] sm:$0xff]
        %v1540 = vld [vmem:[%s1520 + $0x8c] sm:$0xf]
        %v1541 = vld [vmem:[%s1520 + $0x90] sm:$0xff]
        %v1542 = vld [vmem:[%s1520 + $0x98] sm:$0xff]
        %v1543 = vld [vmem:[%s1520 + $0xa0] sm:$0xff]
        %v1544 = vld [vmem:[%s1520 + $0xa8] sm:$0xff]
        %v1545 = vld [vmem:[%s1520 + $0xb0] sm:$0xf]
        %v1546 = vld [vmem:[%s1520 + $0xb4] sm:$0xff]
        %v1547 = vld [vmem:[%s1520 + $0xbc] sm:$0xff]
        %v1548 = vld [vmem:[%s1520 + $0xc4] sm:$0xff]
        %v1549 = vld [vmem:[%s1520 + $0xcc] sm:$0xff]
        %v1550 = vld [vmem:[%s1520 + $0xd4] sm:$0xf]
        %v1551 = vld [vmem:[%s1520 + $0xd8] sm:$0xff]
        %v1552 = vld [vmem:[%s1520 + $0xe0] sm:$0xff]
        %v1553 = vld [vmem:[%s1520 + $0xe8] sm:$0xff]
        %v1554 = vld [vmem:[%s1520 + $0xf0] sm:$0xff]
        %v1555 = vld [vmem:[%s1520 + $0xf8] sm:$0xf]
        %v1556 = vld [vmem:[%s1520 + $0xfc] sm:$0xff]
        %v1557 = vld [vmem:[%s1520 + $0x104] sm:$0xff]
        %v1558 = vld [vmem:[%s1520 + $0x10c] sm:$0xff]
        %v1559 = vld [vmem:[%s1520 + $0x114] sm:$0xff]
        %v1560 = vld [vmem:[%s1520 + $0x11c] sm:$0xf]
        %v1561 = vld [vmem:[%s1520 + $0x120] sm:$0xff]
        %v1562 = vld [vmem:[%s1520 + $0x128] sm:$0xff]
        %v1563 = vld [vmem:[%s1520 + $0x130] sm:$0xff]
        %v1564 = vld [vmem:[%s1520 + $0x138] sm:$0xff]
        %v1565 = vld [vmem:[%s1520 + $0x140] sm:$0xf]
        %v1611 = vunpack.c.l.b16 %v1521
        %v1612 = vunpack.c.h.b16 %v1521
        %v1613 = vunpack.c.l.b16 %v1522
        %v1614 = vunpack.c.h.b16 %v1522
        %v1615 = vunpack.c.l.b16 %v1523
        %v1616 = vunpack.c.h.b16 %v1523
        %v1617 = vunpack.c.l.b16 %v1524
        %v1618 = vunpack.c.h.b16 %v1524
        %v1619 = vunpack.c.l.b16 %v1525
        %v1620 = vunpack.c.l.b16 %v1526
        %v1621 = vunpack.c.h.b16 %v1526
        %v1622 = vunpack.c.l.b16 %v1527
        %v1623 = vunpack.c.h.b16 %v1527
        %v1624 = vunpack.c.l.b16 %v1528
        %v1625 = vunpack.c.h.b16 %v1528
        %v1626 = vunpack.c.l.b16 %v1529
        %v1627 = vunpack.c.h.b16 %v1529
        %v1628 = vunpack.c.l.b16 %v1530
        %v1629 = vunpack.c.l.b16 %v1531
        %v1630 = vunpack.c.h.b16 %v1531
        %v1631 = vunpack.c.l.b16 %v1532
        %v1632 = vunpack.c.h.b16 %v1532
        %v1633 = vunpack.c.l.b16 %v1533
        %v1634 = vunpack.c.h.b16 %v1533
        %v1635 = vunpack.c.l.b16 %v1534
        %v1636 = vunpack.c.h.b16 %v1534
        %v1637 = vunpack.c.l.b16 %v1535
        %v1638 = vunpack.c.l.b16 %v1536
        %v1639 = vunpack.c.h.b16 %v1536
        %v1640 = vunpack.c.l.b16 %v1537
        %v1641 = vunpack.c.h.b16 %v1537
        %v1642 = vunpack.c.l.b16 %v1538
        %v1643 = vunpack.c.h.b16 %v1538
        %v1644 = vunpack.c.l.b16 %v1539
        %v1645 = vunpack.c.h.b16 %v1539
        %v1646 = vunpack.c.l.b16 %v1540
        %v1647 = vunpack.c.l.b16 %v1541
        %v1648 = vunpack.c.h.b16 %v1541
        %v1649 = vunpack.c.l.b16 %v1542
        %v1650 = vunpack.c.h.b16 %v1542
        %v1651 = vunpack.c.l.b16 %v1543
        %v1652 = vunpack.c.h.b16 %v1543
        %v1653 = vunpack.c.l.b16 %v1544
        %v1654 = vunpack.c.h.b16 %v1544
        %v1655 = vunpack.c.l.b16 %v1545
        %v1656 = vunpack.c.l.b16 %v1546
        %v1657 = vunpack.c.h.b16 %v1546
        %v1658 = vunpack.c.l.b16 %v1547
        %v1659 = vunpack.c.h.b16 %v1547
        %v1660 = vunpack.c.l.b16 %v1548
        %v1661 = vunpack.c.h.b16 %v1548
        %v1662 = vunpack.c.l.b16 %v1549
        %v1663 = vunpack.c.h.b16 %v1549
        %v1664 = vunpack.c.l.b16 %v1550
        %v1665 = vunpack.c.l.b16 %v1551
        %v1666 = vunpack.c.h.b16 %v1551
        %v1667 = vunpack.c.l.b16 %v1552
        %v1668 = vunpack.c.h.b16 %v1552
        %v1669 = vunpack.c.l.b16 %v1553
        %v1670 = vunpack.c.h.b16 %v1553
        %v1671 = vunpack.c.l.b16 %v1554
        %v1672 = vunpack.c.h.b16 %v1554
        %v1673 = vunpack.c.l.b16 %v1555
        %v1674 = vunpack.c.l.b16 %v1556
        %v1675 = vunpack.c.h.b16 %v1556
        %v1676 = vunpack.c.l.b16 %v1557
        %v1677 = vunpack.c.h.b16 %v1557
        %v1678 = vunpack.c.l.b16 %v1558
        %v1679 = vunpack.c.h.b16 %v1558
        %v1680 = vunpack.c.l.b16 %v1559
        %v1681 = vunpack.c.h.b16 %v1559
        %v1682 = vunpack.c.l.b16 %v1560
        %v1683 = vunpack.c.l.b16 %v1561
        %v1684 = vunpack.c.h.b16 %v1561
        %v1685 = vunpack.c.l.b16 %v1562
        %v1686 = vunpack.c.h.b16 %v1562
        %v1687 = vunpack.c.l.b16 %v1563
        %v1688 = vunpack.c.h.b16 %v1563
        %v1689 = vunpack.c.l.b16 %v1564
        %v1690 = vunpack.c.h.b16 %v1564
        %v1691 = vunpack.c.l.b16 %v1565
        %v1692 = vpack.c.b16 %v1620, %v1611
        %v1693 = vpack.c.b16 %v1621, %v1612
        %v1694 = vpack.c.b16 %v1622, %v1613
        %v1695 = vpack.c.b16 %v1623, %v1614
        %v1696 = vpack.c.b16 %v1624, %v1615
        %v1697 = vpack.c.b16 %v1625, %v1616
        %v1698 = vpack.c.b16 %v1626, %v1617
        %v1699 = vpack.c.b16 %v1627, %v1618
        %v1700 = vpack.c.b16 %v1628, %v1619
        %v1701 = vpack.c.b16 %v1638, %v1629
        %v1702 = vpack.c.b16 %v1639, %v1630
        %v1703 = vpack.c.b16 %v1640, %v1631
        %v1704 = vpack.c.b16 %v1641, %v1632
        %v1705 = vpack.c.b16 %v1642, %v1633
        %v1706 = vpack.c.b16 %v1643, %v1634
        %v1707 = vpack.c.b16 %v1644, %v1635
        %v1708 = vpack.c.b16 %v1645, %v1636
        %v1709 = vpack.c.b16 %v1646, %v1637
        %v1710 = vpack.c.b16 %v1656, %v1647
        %v1711 = vpack.c.b16 %v1657, %v1648
        %v1712 = vpack.c.b16 %v1658, %v1649
        %v1713 = vpack.c.b16 %v1659, %v1650
        %v1714 = vpack.c.b16 %v1660, %v1651
        %v1715 = vpack.c.b16 %v1661, %v1652
        %v1716 = vpack.c.b16 %v1662, %v1653
        %v1717 = vpack.c.b16 %v1663, %v1654
        %v1718 = vpack.c.b16 %v1664, %v1655
        %v1719 = vpack.c.b16 %v1674, %v1665
        %v1720 = vpack.c.b16 %v1675, %v1666
        %v1721 = vpack.c.b16 %v1676, %v1667
        %v1722 = vpack.c.b16 %v1677, %v1668
        %v1723 = vpack.c.b16 %v1678, %v1669
        %v1724 = vpack.c.b16 %v1679, %v1670
        %v1725 = vpack.c.b16 %v1680, %v1671
        %v1726 = vpack.c.b16 %v1681, %v1672
        %v1727 = vpack.c.b16 %v1682, %v1673
        %v1728 = vpack.c.b16 %v1683, %v1683
        %v1729 = vpack.c.b16 %v1684, %v1684
        %v1730 = vpack.c.b16 %v1685, %v1685
        %v1731 = vpack.c.b16 %v1686, %v1686
        %v1732 = vpack.c.b16 %v1687, %v1687
        %v1733 = vpack.c.b16 %v1688, %v1688
        %v1734 = vpack.c.b16 %v1689, %v1689
        %v1735 = vpack.c.b16 %v1690, %v1690
        %v1736 = vpack.c.b16 %v1691, %v1691
        %1782 = vmatpush.bf16.msra.mxu0 %v1086
        %1783 = vmatpush.bf16.msra.mxu0 %v1085
        %1784 = vmatpush.bf16.msra.mxu0 %v1084
        %1785 = vmatpush.bf16.msra.mxu0 %v1083
        %1786 = vmatpush.bf16.msra.mxu0 %v1082
        %1787 = vmatpush.bf16.msra.mxu0 %v1081
        %1788 = vmatpush.bf16.msra.mxu0 %v1080
        %1789 = vmatpush.bf16.msra.mxu0 %v1079
        %1790 = vmatmul.bf16.gmra.mxu0 %v1692
        %v1791 = vpop.f32.mrf.mxu0
        %v1792 = vadd.f32 %v573, %v1791
        %v1793 = vpop.f32.mrf.mxu0
        %v1794 = vadd.f32 %v573, %v1793
        %1795 = vmatmul.bf16.gmra.mxu0 %v1701
        %v1796 = vpop.f32.mrf.mxu0
        %v1797 = vadd.f32 %v573, %v1796
        %v1798 = vpop.f32.mrf.mxu0
        %v1799 = vadd.f32 %v573, %v1798
        %1800 = vmatmul.bf16.gmra.mxu0 %v1710
        %v1801 = vpop.f32.mrf.mxu0
        %v1802 = vadd.f32 %v573, %v1801
        %v1803 = vpop.f32.mrf.mxu0
        %v1804 = vadd.f32 %v573, %v1803
        %1805 = vmatmul.bf16.gmra.mxu0 %v1719
        %v1806 = vpop.f32.mrf.mxu0
        %v1807 = vadd.f32 %v573, %v1806
        %v1808 = vpop.f32.mrf.mxu0
        %v1809 = vadd.f32 %v573, %v1808
        %1810 = vmatmul.bf16.gmra.mxu0 %v1728
        %v1811 = vpop.f32.mrf.mxu0
        %v1812 = vadd.f32 %v573, %v1811
        %v1813 = vpop.f32.mrf.mxu0
        %1814 = vdwg.mxu0
        %1815 = vmatpush.bf16.msra.mxu0 %v1094
        %1816 = vmatpush.bf16.msra.mxu0 %v1093
        %1817 = vmatpush.bf16.msra.mxu0 %v1092
        %1818 = vmatpush.bf16.msra.mxu0 %v1091
        %1819 = vmatpush.bf16.msra.mxu0 %v1090
        %1820 = vmatpush.bf16.msra.mxu0 %v1089
        %1821 = vmatpush.bf16.msra.mxu0 %v1088
        %1822 = vmatpush.bf16.msra.mxu0 %v1087
        %1823 = vmatmul.bf16.gmra.mxu0 %v1693
        %v1824 = vpop.f32.mrf.mxu0
        %v1825 = vadd.f32 %v1792, %v1824
        %v1826 = vpop.f32.mrf.mxu0
        %v1827 = vadd.f32 %v1794, %v1826
        %1828 = vmatmul.bf16.gmra.mxu0 %v1702
        %v1829 = vpop.f32.mrf.mxu0
        %v1830 = vadd.f32 %v1797, %v1829
        %v1831 = vpop.f32.mrf.mxu0
        %v1832 = vadd.f32 %v1799, %v1831
        %1833 = vmatmul.bf16.gmra.mxu0 %v1711
        %v1834 = vpop.f32.mrf.mxu0
        %v1835 = vadd.f32 %v1802, %v1834
        %v1836 = vpop.f32.mrf.mxu0
        %v1837 = vadd.f32 %v1804, %v1836
        %1838 = vmatmul.bf16.gmra.mxu0 %v1720
        %v1839 = vpop.f32.mrf.mxu0
        %v1840 = vadd.f32 %v1807, %v1839
        %v1841 = vpop.f32.mrf.mxu0
        %v1842 = vadd.f32 %v1809, %v1841
        %1843 = vmatmul.bf16.gmra.mxu0 %v1729
        %v1844 = vpop.f32.mrf.mxu0
        %v1845 = vadd.f32 %v1812, %v1844
        %v1846 = vpop.f32.mrf.mxu0
        %1847 = vdwg.mxu0
        %1848 = vmatpush.bf16.msra.mxu0 %v1102
        %1849 = vmatpush.bf16.msra.mxu0 %v1101
        %1850 = vmatpush.bf16.msra.mxu0 %v1100
        %1851 = vmatpush.bf16.msra.mxu0 %v1099
        %1852 = vmatpush.bf16.msra.mxu0 %v1098
        %1853 = vmatpush.bf16.msra.mxu0 %v1097
        %1854 = vmatpush.bf16.msra.mxu0 %v1096
        %1855 = vmatpush.bf16.msra.mxu0 %v1095
        %1856 = vmatmul.bf16.gmra.mxu0 %v1694
        %v1857 = vpop.f32.mrf.mxu0
        %v1858 = vadd.f32 %v1825, %v1857
        %v1859 = vpop.f32.mrf.mxu0
        %v1860 = vadd.f32 %v1827, %v1859
        %1861 = vmatmul.bf16.gmra.mxu0 %v1703
        %v1862 = vpop.f32.mrf.mxu0
        %v1863 = vadd.f32 %v1830, %v1862
        %v1864 = vpop.f32.mrf.mxu0
        %v1865 = vadd.f32 %v1832, %v1864
        %1866 = vmatmul.bf16.gmra.mxu0 %v1712
        %v1867 = vpop.f32.mrf.mxu0
        %v1868 = vadd.f32 %v1835, %v1867
        %v1869 = vpop.f32.mrf.mxu0
        %v1870 = vadd.f32 %v1837, %v1869
        %1871 = vmatmul.bf16.gmra.mxu0 %v1721
        %v1872 = vpop.f32.mrf.mxu0
        %v1873 = vadd.f32 %v1840, %v1872
        %v1874 = vpop.f32.mrf.mxu0
        %v1875 = vadd.f32 %v1842, %v1874
        %1876 = vmatmul.bf16.gmra.mxu0 %v1730
        %v1877 = vpop.f32.mrf.mxu0
        %v1878 = vadd.f32 %v1845, %v1877
        %v1879 = vpop.f32.mrf.mxu0
        %1880 = vdwg.mxu0
        %1881 = vmatpush.bf16.msra.mxu0 %v1110
        %1882 = vmatpush.bf16.msra.mxu0 %v1109
        %1883 = vmatpush.bf16.msra.mxu0 %v1108
        %1884 = vmatpush.bf16.msra.mxu0 %v1107
        %1885 = vmatpush.bf16.msra.mxu0 %v1106
        %1886 = vmatpush.bf16.msra.mxu0 %v1105
        %1887 = vmatpush.bf16.msra.mxu0 %v1104
        %1888 = vmatpush.bf16.msra.mxu0 %v1103
        %1889 = vmatmul.bf16.gmra.mxu0 %v1695
        %v1890 = vpop.f32.mrf.mxu0
        %v1891 = vadd.f32 %v1858, %v1890
        %v1892 = vpop.f32.mrf.mxu0
        %v1893 = vadd.f32 %v1860, %v1892
        %1894 = vmatmul.bf16.gmra.mxu0 %v1704
        %v1895 = vpop.f32.mrf.mxu0
        %v1896 = vadd.f32 %v1863, %v1895
        %v1897 = vpop.f32.mrf.mxu0
        %v1898 = vadd.f32 %v1865, %v1897
        %1899 = vmatmul.bf16.gmra.mxu0 %v1713
        %v1900 = vpop.f32.mrf.mxu0
        %v1901 = vadd.f32 %v1868, %v1900
        %v1902 = vpop.f32.mrf.mxu0
        %v1903 = vadd.f32 %v1870, %v1902
        %1904 = vmatmul.bf16.gmra.mxu0 %v1722
        %v1905 = vpop.f32.mrf.mxu0
        %v1906 = vadd.f32 %v1873, %v1905
        %v1907 = vpop.f32.mrf.mxu0
        %v1908 = vadd.f32 %v1875, %v1907
        %1909 = vmatmul.bf16.gmra.mxu0 %v1731
        %v1910 = vpop.f32.mrf.mxu0
        %v1911 = vadd.f32 %v1878, %v1910
        %v1912 = vpop.f32.mrf.mxu0
        %1913 = vdwg.mxu0
        %1914 = vmatpush.bf16.msra.mxu0 %v1118
        %1915 = vmatpush.bf16.msra.mxu0 %v1117
        %1916 = vmatpush.bf16.msra.mxu0 %v1116
        %1917 = vmatpush.bf16.msra.mxu0 %v1115
        %1918 = vmatpush.bf16.msra.mxu0 %v1114
        %1919 = vmatpush.bf16.msra.mxu0 %v1113
        %1920 = vmatpush.bf16.msra.mxu0 %v1112
        %1921 = vmatpush.bf16.msra.mxu0 %v1111
        %1922 = vmatmul.bf16.gmra.mxu0 %v1696
        %v1923 = vpop.f32.mrf.mxu0
        %v1924 = vadd.f32 %v1891, %v1923
        %v1925 = vpop.f32.mrf.mxu0
        %v1926 = vadd.f32 %v1893, %v1925
        %1927 = vmatmul.bf16.gmra.mxu0 %v1705
        %v1928 = vpop.f32.mrf.mxu0
        %v1929 = vadd.f32 %v1896, %v1928
        %v1930 = vpop.f32.mrf.mxu0
        %v1931 = vadd.f32 %v1898, %v1930
        %1932 = vmatmul.bf16.gmra.mxu0 %v1714
        %v1933 = vpop.f32.mrf.mxu0
        %v1934 = vadd.f32 %v1901, %v1933
        %v1935 = vpop.f32.mrf.mxu0
        %v1936 = vadd.f32 %v1903, %v1935
        %1937 = vmatmul.bf16.gmra.mxu0 %v1723
        %v1938 = vpop.f32.mrf.mxu0
        %v1939 = vadd.f32 %v1906, %v1938
        %v1940 = vpop.f32.mrf.mxu0
        %v1941 = vadd.f32 %v1908, %v1940
        %1942 = vmatmul.bf16.gmra.mxu0 %v1732
        %v1943 = vpop.f32.mrf.mxu0
        %v1944 = vadd.f32 %v1911, %v1943
        %v1945 = vpop.f32.mrf.mxu0
        %1946 = vdwg.mxu0
        %1947 = vmatpush.bf16.msra.mxu0 %v1126
        %1948 = vmatpush.bf16.msra.mxu0 %v1125
        %1949 = vmatpush.bf16.msra.mxu0 %v1124
        %1950 = vmatpush.bf16.msra.mxu0 %v1123
        %1951 = vmatpush.bf16.msra.mxu0 %v1122
        %1952 = vmatpush.bf16.msra.mxu0 %v1121
        %1953 = vmatpush.bf16.msra.mxu0 %v1120
        %1954 = vmatpush.bf16.msra.mxu0 %v1119
        %1955 = vmatmul.bf16.gmra.mxu0 %v1697
        %v1956 = vpop.f32.mrf.mxu0
        %v1957 = vadd.f32 %v1924, %v1956
        %v1958 = vpop.f32.mrf.mxu0
        %v1959 = vadd.f32 %v1926, %v1958
        %1960 = vmatmul.bf16.gmra.mxu0 %v1706
        %v1961 = vpop.f32.mrf.mxu0
        %v1962 = vadd.f32 %v1929, %v1961
        %v1963 = vpop.f32.mrf.mxu0
        %v1964 = vadd.f32 %v1931, %v1963
        %1965 = vmatmul.bf16.gmra.mxu0 %v1715
        %v1966 = vpop.f32.mrf.mxu0
        %v1967 = vadd.f32 %v1934, %v1966
        %v1968 = vpop.f32.mrf.mxu0
        %v1969 = vadd.f32 %v1936, %v1968
        %1970 = vmatmul.bf16.gmra.mxu0 %v1724
        %v1971 = vpop.f32.mrf.mxu0
        %v1972 = vadd.f32 %v1939, %v1971
        %v1973 = vpop.f32.mrf.mxu0
        %v1974 = vadd.f32 %v1941, %v1973
        %1975 = vmatmul.bf16.gmra.mxu0 %v1733
        %v1976 = vpop.f32.mrf.mxu0
        %v1977 = vadd.f32 %v1944, %v1976
        %v1978 = vpop.f32.mrf.mxu0
        %1979 = vdwg.mxu0
        %1980 = vmatpush.bf16.msra.mxu0 %v1134
        %1981 = vmatpush.bf16.msra.mxu0 %v1133
        %1982 = vmatpush.bf16.msra.mxu0 %v1132
        %1983 = vmatpush.bf16.msra.mxu0 %v1131
        %1984 = vmatpush.bf16.msra.mxu0 %v1130
        %1985 = vmatpush.bf16.msra.mxu0 %v1129
        %1986 = vmatpush.bf16.msra.mxu0 %v1128
        %1987 = vmatpush.bf16.msra.mxu0 %v1127
        %1988 = vmatmul.bf16.gmra.mxu0 %v1698
        %v1989 = vpop.f32.mrf.mxu0
        %v1990 = vadd.f32 %v1957, %v1989
        %v1991 = vpop.f32.mrf.mxu0
        %v1992 = vadd.f32 %v1959, %v1991
        %1993 = vmatmul.bf16.gmra.mxu0 %v1707
        %v1994 = vpop.f32.mrf.mxu0
        %v1995 = vadd.f32 %v1962, %v1994
        %v1996 = vpop.f32.mrf.mxu0
        %v1997 = vadd.f32 %v1964, %v1996
        %1998 = vmatmul.bf16.gmra.mxu0 %v1716
        %v1999 = vpop.f32.mrf.mxu0
        %v2000 = vadd.f32 %v1967, %v1999
        %v2001 = vpop.f32.mrf.mxu0
        %v2002 = vadd.f32 %v1969, %v2001
        %2003 = vmatmul.bf16.gmra.mxu0 %v1725
        %v2004 = vpop.f32.mrf.mxu0
        %v2005 = vadd.f32 %v1972, %v2004
        %v2006 = vpop.f32.mrf.mxu0
        %v2007 = vadd.f32 %v1974, %v2006
        %2008 = vmatmul.bf16.gmra.mxu0 %v1734
        %v2009 = vpop.f32.mrf.mxu0
        %v2010 = vadd.f32 %v1977, %v2009
        %v2011 = vpop.f32.mrf.mxu0
        %2012 = vdwg.mxu0
        %2013 = vmatpush.bf16.msra.mxu0 %v1142
        %2014 = vmatpush.bf16.msra.mxu0 %v1141
        %2015 = vmatpush.bf16.msra.mxu0 %v1140
        %2016 = vmatpush.bf16.msra.mxu0 %v1139
        %2017 = vmatpush.bf16.msra.mxu0 %v1138
        %2018 = vmatpush.bf16.msra.mxu0 %v1137
        %2019 = vmatpush.bf16.msra.mxu0 %v1136
        %2020 = vmatpush.bf16.msra.mxu0 %v1135
        %2021 = vmatmul.bf16.gmra.mxu0 %v1699
        %v2022 = vpop.f32.mrf.mxu0
        %v2023 = vadd.f32 %v1990, %v2022
        %v2024 = vpop.f32.mrf.mxu0
        %v2025 = vadd.f32 %v1992, %v2024
        %2026 = vmatmul.bf16.gmra.mxu0 %v1708
        %v2027 = vpop.f32.mrf.mxu0
        %v2028 = vadd.f32 %v1995, %v2027
        %v2029 = vpop.f32.mrf.mxu0
        %v2030 = vadd.f32 %v1997, %v2029
        %2031 = vmatmul.bf16.gmra.mxu0 %v1717
        %v2032 = vpop.f32.mrf.mxu0
        %v2033 = vadd.f32 %v2000, %v2032
        %v2034 = vpop.f32.mrf.mxu0
        %v2035 = vadd.f32 %v2002, %v2034
        %2036 = vmatmul.bf16.gmra.mxu0 %v1726
        %v2037 = vpop.f32.mrf.mxu0
        %v2038 = vadd.f32 %v2005, %v2037
        %v2039 = vpop.f32.mrf.mxu0
        %v2040 = vadd.f32 %v2007, %v2039
        %2041 = vmatmul.bf16.gmra.mxu0 %v1735
        %v2042 = vpop.f32.mrf.mxu0
        %v2043 = vadd.f32 %v2010, %v2042
        %v2044 = vpop.f32.mrf.mxu0
        %2045 = vdwg.mxu0
        %2046 = vmatpush.bf16.msra.mxu0 %v1150
        %2047 = vmatpush.bf16.msra.mxu0 %v1149
        %2048 = vmatpush.bf16.msra.mxu0 %v1148
        %2049 = vmatpush.bf16.msra.mxu0 %v1147
        %2050 = vmatpush.bf16.msra.mxu0 %v1146
        %2051 = vmatpush.bf16.msra.mxu0 %v1145
        %2052 = vmatpush.bf16.msra.mxu0 %v1144
        %2053 = vmatpush.bf16.msra.mxu0 %v1143
        %2054 = vmatmul.bf16.gmra.mxu0 %v1700
        %v2055 = vpop.f32.mrf.mxu0
        %v2056 = vadd.f32 %v2023, %v2055
        %v2057 = vpop.f32.mrf.mxu0
        %v2058 = vadd.f32 %v2025, %v2057
        %2059 = vmatmul.bf16.gmra.mxu0 %v1709
        %v2060 = vpop.f32.mrf.mxu0
        %v2061 = vadd.f32 %v2028, %v2060
        %v2062 = vpop.f32.mrf.mxu0
        %v2063 = vadd.f32 %v2030, %v2062
        %2064 = vmatmul.bf16.gmra.mxu0 %v1718
        %v2065 = vpop.f32.mrf.mxu0
        %v2066 = vadd.f32 %v2033, %v2065
        %v2067 = vpop.f32.mrf.mxu0
        %v2068 = vadd.f32 %v2035, %v2067
        %2069 = vmatmul.bf16.gmra.mxu0 %v1727
        %v2070 = vpop.f32.mrf.mxu0
        %v2071 = vadd.f32 %v2038, %v2070
        %v2072 = vpop.f32.mrf.mxu0
        %v2073 = vadd.f32 %v2040, %v2072
        %2074 = vmatmul.bf16.gmra.mxu0 %v1736
        %v2075 = vpop.f32.mrf.mxu0
        %v2076 = vadd.f32 %v2043, %v2075
        %v2077 = vpop.f32.mrf.mxu0
        %2078 = vdwg.mxu0
        %v2079 = vmax.f32 %v1497, %v2056
        %v2080 = vmax.f32 %v1499, %v2058
        %v2081 = vmax.f32 %v1502, %v2061
        %v2082 = vmax.f32 %v1504, %v2063
        %v2083 = vmax.f32 %v1507, %v2066
        %v2084 = vmax.f32 %v1509, %v2068
        %v2085 = vmax.f32 %v1512, %v2071
        %v2086 = vmax.f32 %v1514, %v2073
        %v2087 = vmax.f32 %v1517, %v2076
        %v2088 = vmax.f32 %v2079, 0.0
        %v2089 = vmax.f32 %v2080, 0.0
        %v2090 = vmax.f32 %v2081, 0.0
        %v2091 = vmax.f32 %v2082, 0.0
        %v2092 = vmax.f32 %v2083, 0.0
        %v2093 = vmax.f32 %v2084, 0.0
        %v2094 = vmax.f32 %v2085, 0.0
        %v2095 = vmax.f32 %v2086, 0.0
        %v2096 = vmax.f32 %v2087, 0.0
        %2106 = vrot.lane.b32.xlu0 %v2088, 96
        %v2107 = vpop.permute.xlu0 %2106
        %2108 = vrot.lane.b32.xlu0 %v2089, 96
        %v2109 = vpop.permute.xlu0 %2108
        %2110 = vrot.lane.b32.xlu0 %v2090, 96
        %v2111 = vpop.permute.xlu0 %2110
        %2112 = vrot.lane.b32.xlu0 %v2091, 96
        %v2113 = vpop.permute.xlu0 %2112
        %2114 = vrot.lane.b32.xlu0 %v2092, 96
        %v2115 = vpop.permute.xlu0 %2114
        %2116 = vrot.lane.b32.xlu0 %v2093, 96
        %v2117 = vpop.permute.xlu0 %2116
        %2118 = vrot.lane.b32.xlu0 %v2094, 96
        %v2119 = vpop.permute.xlu0 %2118
        %2120 = vrot.lane.b32.xlu0 %v2095, 96
        %v2121 = vpop.permute.xlu0 %2120
        %2122 = vrot.lane.b32.xlu0 %v2096, 96
        %v2123 = vpop.permute.xlu0 %2122
        %v2133 = vmax.f32 %v2088, %v2107
        %v2134 = vmax.f32 %v2089, %v2109
        %v2135 = vmax.f32 %v2090, %v2111
        %v2136 = vmax.f32 %v2091, %v2113
        %v2137 = vmax.f32 %v2092, %v2115
        %v2138 = vmax.f32 %v2093, %v2117
        %v2139 = vmax.f32 %v2094, %v2119
        %v2140 = vmax.f32 %v2095, %v2121
        %v2141 = vmax.f32 %v2096, %v2123
        %2151 = vrot.lane.b32.xlu0 %v2133, 96
        %v2152 = vpop.permute.xlu0 %2151
        %2153 = vrot.lane.b32.xlu0 %v2134, 96
        %v2154 = vpop.permute.xlu0 %2153
        %2155 = vrot.lane.b32.xlu0 %v2135, 96
        %v2156 = vpop.permute.xlu0 %2155
        %2157 = vrot.lane.b32.xlu0 %v2136, 96
        %v2158 = vpop.permute.xlu0 %2157
        %2159 = vrot.lane.b32.xlu0 %v2137, 96
        %v2160 = vpop.permute.xlu0 %2159
        %2161 = vrot.lane.b32.xlu0 %v2138, 96
        %v2162 = vpop.permute.xlu0 %2161
        %2163 = vrot.lane.b32.xlu0 %v2139, 96
        %v2164 = vpop.permute.xlu0 %2163
        %2165 = vrot.lane.b32.xlu0 %v2140, 96
        %v2166 = vpop.permute.xlu0 %2165
        %2167 = vrot.lane.b32.xlu0 %v2141, 96
        %v2168 = vpop.permute.xlu0 %2167
        %vm2178 = vcmask 261120
        %v2179 = vsel %vm2178, %v2133, %v2152
        %v2180 = vsel %vm2178, %v2134, %v2154
        %v2181 = vsel %vm2178, %v2135, %v2156
        %v2182 = vsel %vm2178, %v2136, %v2158
        %v2183 = vsel %vm2178, %v2137, %v2160
        %v2184 = vsel %vm2178, %v2138, %v2162
        %v2185 = vsel %vm2178, %v2139, %v2164
        %v2186 = vsel %vm2178, %v2140, %v2166
        %v2187 = vsel %vm2178, %v2141, %v2168
        %v2188 = vpack.c.bf16 %v2179, %v2179
        %v2189 = vpack.c.bf16 %v2180, %v2180
        %v2190 = vpack.c.bf16 %v2181, %v2181
        %v2191 = vpack.c.bf16 %v2182, %v2182
        %v2192 = vpack.c.bf16 %v2183, %v2183
        %v2193 = vpack.c.bf16 %v2184, %v2184
        %v2194 = vpack.c.bf16 %v2185, %v2185
        %v2195 = vpack.c.bf16 %v2186, %v2186
        %v2196 = vpack.c.bf16 %v2187, %v2187
        %vm2197 = vcmask 519168
        %2198 = vst.msk [vmem:[%s380] sm:$0xf] %vm2197, %v2188
        %2199 = vst.msk [vmem:[%s380 + $0x4] sm:$0xf] %vm2197, %v2189
        %2200 = vst.msk [vmem:[%s380 + $0x8] sm:$0xf] %vm2197, %v2190
        %2201 = vst.msk [vmem:[%s380 + $0xc] sm:$0xf] %vm2197, %v2191
        %2202 = vst.msk [vmem:[%s380 + $0x10] sm:$0xf] %vm2197, %v2192
        %2203 = vst.msk [vmem:[%s380 + $0x14] sm:$0xf] %vm2197, %v2193
        %2204 = vst.msk [vmem:[%s380 + $0x18] sm:$0xf] %vm2197, %v2194
        %2205 = vst.msk [vmem:[%s380 + $0x1c] sm:$0xf] %vm2197, %v2195
        %2206 = vst.msk [vmem:[%s380 + $0x20] sm:$0xf] %vm2197, %v2196
        %s2207 = smul.u32 9, %s14
        %p2208 = scmp.lt.s32.totalorder %s2207, 17
        %s2209 = scalar_select %p2208, %s2207, 17
        %s2210 = smul.addr %s2209, 4
        %s2211 = scalar_lea.vmem %s3, %s2210
        // Predicated region
        $region59: #{cnn_forward.4} parent=53 // pred_check
          %p2212 = pneg %p100
        $region60: #{cnn_forward.4} parent=53 // pred_check_branch
          %2214 = sbr.rel (%p2212) target = $region62
        $region61: #{cnn_forward.4} parent=53 // pred_region
          %s2215 = smul.u32 9, %s14
        $region62: #{cnn_forward.4} parent=53 // pred_fallthru
          _
      $region54: #{cnn_forward.4} parent=5 // pred_fallthru
        _
      %p2216 = scmp.le.s32.totalorder 2, %s9
      // Predicated region
      $region63: #{cnn_forward.4} parent=5 // pred_check
        %p2217 = pneg %p2216
      $region64: #{cnn_forward.4} parent=5 // pred_check_branch
        %2219 = sbr.rel (%p2217) target = $region66
      $region65: #{cnn_forward.4} parent=5 // pred_region
        %s2220 = ssub.s32 %s9, 2
        // Predicated region
        $region67: #{cnn_forward.4} parent=65 // pred_check
          %p2221 = pneg %p106
        $region68: #{cnn_forward.4} parent=65 // pred_check_branch
          %2223 = sbr.rel (%p2221) target = $region70
        $region69: #{cnn_forward.4} parent=65 // pred_region
          %s2224 = smul.u32 9, %s15
          %p2225 = scmp.lt.s32.totalorder %s2224, 17
          %s2226 = scalar_select %p2225, %s2224, 17
          %s2227 = smul.addr %s2226, 4
          %s2228 = scalar_lea.vmem %s3, %s2227
        $region70: #{cnn_forward.4} parent=65 // pred_fallthru
          _
      $region66: #{cnn_forward.4} parent=5 // pred_fallthru
        _
    $region6: #{cnn_forward.4} parent=1 // loop_footer
      %s13 = sadd.s32 1, %s9
    $region7: #{cnn_forward.4} parent=1 // loop_footer_branch
      %8 = sbr.rel target = $region3
    $region8: #{cnn_forward.4} parent=1 // loop_exit
      _

// kernel: cnn_forward.5
$region0: #{cnn_forward.5}
  #allocation0 [shape = 'u32[]', space=smem, size = 0x4, offset = 0x4, fixed_abs, tag = 'smem constant byte address 0x4 - core index']
  #allocation1 [shape = 'u32[72,128]{1,0:T(1,128)}', space=vmem, size = 0x9000, scoped, tag = 'internal scratch']
  %s0 = inlined_call_operand.vmem [shape: bf16[2,2,25,384], index: 0, kind: input, shape index: {}]
  %s1 = inlined_call_operand.vmem [shape: bf16[384,32], index: 1, kind: input, shape index: {}]
  %s2 = inlined_call_operand.vmem [shape: f32[1,32], index: 2, kind: input, shape index: {}]
  %s3 = inlined_call_operand.vmem [shape: bf16[25,16,64], index: 3, kind: input, shape index: {}]
  %s4 = inlined_call_operand.vmem [shape: f32[1,64], index: 4, kind: input, shape index: {}]
  %s5 = inlined_call_operand.vmem [shape: bf16[64,32], index: 5, kind: input, shape index: {}]
  %s6 = inlined_call_operand.vmem [shape: f32[1,32], index: 6, kind: input, shape index: {}]
  %s7 = inlined_call_operand.vmem [shape: bf16[32,10], index: 7, kind: input, shape index: {}]
  %s8 = inlined_call_operand.vmem [shape: f32[1,10], index: 8, kind: input, shape index: {}]
  %s9 = inlined_call_operand.hbm [shape: f32[2,1,10], index: 9, kind: output, shape index: {}]
  %s10 = sld [smem:[#allocation0]]
  $region69: #{cnn_forward.5} parent=0
    _
  %s12 = ssub.s32 1, %s10
  %s13 = scalar_select 0, %s12, %s10
  $region1: #{cnn_forward.5} parent=0
    #allocation2 [shape = 'u8[1024]{0}', space=vmem, size = 0x400, scoped, tag = 'output window, operand 0']
    #allocation3 [shape = 's32[2]{0}', space=sflag, size = 0x8, scoped, tag = 'scoped memory for cnn_forward.5']
    %14 = vsyncpa [#allocation3], 0
    %s15 = scalar_lea.sflag [#allocation3], 1
    %16 = vsyncpa %s15, 0
    loop: start=0, step=1, limit=4
    $region2: #{cnn_forward.5} parent=1 // loop_pre_header
      _
    $region3: #{cnn_forward.5} parent=1 // loop_header
      %s18 = sphi 0, %s22
      %p19 = scmp.ge.s32.totalorder %s18, 4
      %s28 = sphi 0, %s30
      %s31 = sphi 0, %s28
      %s32 = sphi 0, %s31
      %s48 = sphi 0, %s32
      %s52 = sphi 0, %s52
      %s54 = sphi 0, %s52
      %s55 = sphi 0, %s54
      %s69 = sphi 0, %s55
      %s73 = sphi 0, %s73
      %s75 = sphi 0, %s73
      %s76 = sphi 0, %s75
      %s90 = sphi 0, %s76
      %s94 = sphi 0, %s94
      %s96 = sphi 0, %s94
      %s97 = sphi 0, %s96
      %s111 = sphi 0, %s97
      %s115 = sphi 0, %s115
      %s117 = sphi 0, %s115
      %s118 = sphi 0, %s117
      %s132 = sphi 0, %s118
      %s136 = sphi 0, %s136
      %s138 = sphi 0, %s136
      %s139 = sphi 0, %s138
      %s153 = sphi 0, %s139
      %s157 = sphi 0, %s157
      %s159 = sphi 0, %s157
      %s160 = sphi 0, %s159
      %s174 = sphi 0, %s160
      %s178 = sphi 0, %s178
      %s180 = sphi 0, %s178
      %s181 = sphi 0, %s180
      %s195 = sphi 0, %s181
      %s199 = sphi 0, %s199
      %s201 = sphi 0, %s199
      %s202 = sphi 0, %s201
      %s216 = sphi 0, %s202
      %s222 = sphi 0, %s224
      %s225 = sphi 0, %s222
      %s226 = sphi 0, %s225
      %s242 = sphi 0, %s226
    $region4: #{cnn_forward.5} parent=1 // loop_header_branch
      %21 = sbr.rel (%p19) target = $region8
    $region5: #{cnn_forward.5} parent=1 // loop_body
      %s23 = ssub.s32 %s18, 1
      %s24 = ssub.s32 %s18, 2
      %s25 = sadd.s32 %s18, 1
      %s26 = ssub.s32 %s18, %s25
      %p27 = scmp.eq.s32.totalorder %s26, 0
      %s29 = sadd.s32 %s28, 1
      %s30 = scalar_select %p27, %s28, %s29
      %p33 = pneg %p27
      %p34 = scmp.eq.s32.totalorder %s18, 1
      %p35 = por %p33, %p34
      %p36 = scmp.ne.s32.totalorder %s28, %s31
      %p37 = scmp.eq.s32.totalorder %s18, 0
      %p38 = por %p36, %p37
      %p39 = scmp.ne.s32.totalorder %s28, %s31
      %p40 = scmp.eq.s32.totalorder %s23, 1
      %p41 = por %p39, %p40
      %p42 = scmp.ne.s32.totalorder %s31, %s32
      %p43 = scmp.eq.s32.totalorder %s23, 0
      %p44 = por %p42, %p43
      %p45 = scmp.ne.s32.totalorder %s31, %s32
      %p46 = scmp.eq.s32.totalorder %s24, 1
      %p47 = por %p45, %p46
      %p49 = scmp.ne.s32.totalorder %s32, %s48
      %p50 = scmp.eq.s32.totalorder %s24, 0
      %p51 = por %p49, %p50
      %s53 = sadd.s32 %s52, 1
      %p56 = scmp.eq.s32.totalorder %s18, 1
      %p57 = scmp.ne.s32.totalorder %s52, %s54
      %p58 = scmp.eq.s32.totalorder %s18, 0
      %p59 = por %p57, %p58
      %p60 = scmp.ne.s32.totalorder %s52, %s54
      %p61 = scmp.eq.s32.totalorder %s23, 1
      %p62 = por %p60, %p61
      %p63 = scmp.ne.s32.totalorder %s54, %s55
      %p64 = scmp.eq.s32.totalorder %s23, 0
      %p65 = por %p63, %p64
      %p66 = scmp.ne.s32.totalorder %s54, %s55
      %p67 = scmp.eq.s32.totalorder %s24, 1
      %p68 = por %p66, %p67
      %p70 = scmp.ne.s32.totalorder %s55, %s69
      %p71 = scmp.eq.s32.totalorder %s24, 0
      %p72 = por %p70, %p71
      %s74 = sadd.s32 %s73, 1
      %p77 = scmp.eq.s32.totalorder %s18, 1
      %p78 = scmp.ne.s32.totalorder %s73, %s75
      %p79 = scmp.eq.s32.totalorder %s18, 0
      %p80 = por %p78, %p79
      %p81 = scmp.ne.s32.totalorder %s73, %s75
      %p82 = scmp.eq.s32.totalorder %s23, 1
      %p83 = por %p81, %p82
      %p84 = scmp.ne.s32.totalorder %s75, %s76
      %p85 = scmp.eq.s32.totalorder %s23, 0
      %p86 = por %p84, %p85
      %p87 = scmp.ne.s32.totalorder %s75, %s76
      %p88 = scmp.eq.s32.totalorder %s24, 1
      %p89 = por %p87, %p88
      %p91 = scmp.ne.s32.totalorder %s76, %s90
      %p92 = scmp.eq.s32.totalorder %s24, 0
      %p93 = por %p91, %p92
      %s95 = sadd.s32 %s94, 1
      %p98 = scmp.eq.s32.totalorder %s18, 1
      %p99 = scmp.ne.s32.totalorder %s94, %s96
      %p100 = scmp.eq.s32.totalorder %s18, 0
      %p101 = por %p99, %p100
      %p102 = scmp.ne.s32.totalorder %s94, %s96
      %p103 = scmp.eq.s32.totalorder %s23, 1
      %p104 = por %p102, %p103
      %p105 = scmp.ne.s32.totalorder %s96, %s97
      %p106 = scmp.eq.s32.totalorder %s23, 0
      %p107 = por %p105, %p106
      %p108 = scmp.ne.s32.totalorder %s96, %s97
      %p109 = scmp.eq.s32.totalorder %s24, 1
      %p110 = por %p108, %p109
      %p112 = scmp.ne.s32.totalorder %s97, %s111
      %p113 = scmp.eq.s32.totalorder %s24, 0
      %p114 = por %p112, %p113
      %s116 = sadd.s32 %s115, 1
      %p119 = scmp.eq.s32.totalorder %s18, 1
      %p120 = scmp.ne.s32.totalorder %s115, %s117
      %p121 = scmp.eq.s32.totalorder %s18, 0
      %p122 = por %p120, %p121
      %p123 = scmp.ne.s32.totalorder %s115, %s117
      %p124 = scmp.eq.s32.totalorder %s23, 1
      %p125 = por %p123, %p124
      %p126 = scmp.ne.s32.totalorder %s117, %s118
      %p127 = scmp.eq.s32.totalorder %s23, 0
      %p128 = por %p126, %p127
      %p129 = scmp.ne.s32.totalorder %s117, %s118
      %p130 = scmp.eq.s32.totalorder %s24, 1
      %p131 = por %p129, %p130
      %p133 = scmp.ne.s32.totalorder %s118, %s132
      %p134 = scmp.eq.s32.totalorder %s24, 0
      %p135 = por %p133, %p134
      %s137 = sadd.s32 %s136, 1
      %p140 = scmp.eq.s32.totalorder %s18, 1
      %p141 = scmp.ne.s32.totalorder %s136, %s138
      %p142 = scmp.eq.s32.totalorder %s18, 0
      %p143 = por %p141, %p142
      %p144 = scmp.ne.s32.totalorder %s136, %s138
      %p145 = scmp.eq.s32.totalorder %s23, 1
      %p146 = por %p144, %p145
      %p147 = scmp.ne.s32.totalorder %s138, %s139
      %p148 = scmp.eq.s32.totalorder %s23, 0
      %p149 = por %p147, %p148
      %p150 = scmp.ne.s32.totalorder %s138, %s139
      %p151 = scmp.eq.s32.totalorder %s24, 1
      %p152 = por %p150, %p151
      %p154 = scmp.ne.s32.totalorder %s139, %s153
      %p155 = scmp.eq.s32.totalorder %s24, 0
      %p156 = por %p154, %p155
      %s158 = sadd.s32 %s157, 1
      %p161 = scmp.eq.s32.totalorder %s18, 1
      %p162 = scmp.ne.s32.totalorder %s157, %s159
      %p163 = scmp.eq.s32.totalorder %s18, 0
      %p164 = por %p162, %p163
      %p165 = scmp.ne.s32.totalorder %s157, %s159
      %p166 = scmp.eq.s32.totalorder %s23, 1
      %p167 = por %p165, %p166
      %p168 = scmp.ne.s32.totalorder %s159, %s160
      %p169 = scmp.eq.s32.totalorder %s23, 0
      %p170 = por %p168, %p169
      %p171 = scmp.ne.s32.totalorder %s159, %s160
      %p172 = scmp.eq.s32.totalorder %s24, 1
      %p173 = por %p171, %p172
      %p175 = scmp.ne.s32.totalorder %s160, %s174
      %p176 = scmp.eq.s32.totalorder %s24, 0
      %p177 = por %p175, %p176
      %s179 = sadd.s32 %s178, 1
      %p182 = scmp.eq.s32.totalorder %s18, 1
      %p183 = scmp.ne.s32.totalorder %s178, %s180
      %p184 = scmp.eq.s32.totalorder %s18, 0
      %p185 = por %p183, %p184
      %p186 = scmp.ne.s32.totalorder %s178, %s180
      %p187 = scmp.eq.s32.totalorder %s23, 1
      %p188 = por %p186, %p187
      %p189 = scmp.ne.s32.totalorder %s180, %s181
      %p190 = scmp.eq.s32.totalorder %s23, 0
      %p191 = por %p189, %p190
      %p192 = scmp.ne.s32.totalorder %s180, %s181
      %p193 = scmp.eq.s32.totalorder %s24, 1
      %p194 = por %p192, %p193
      %p196 = scmp.ne.s32.totalorder %s181, %s195
      %p197 = scmp.eq.s32.totalorder %s24, 0
      %p198 = por %p196, %p197
      %s200 = sadd.s32 %s199, 1
      %p203 = scmp.eq.s32.totalorder %s18, 1
      %p204 = scmp.ne.s32.totalorder %s199, %s201
      %p205 = scmp.eq.s32.totalorder %s18, 0
      %p206 = por %p204, %p205
      %p207 = scmp.ne.s32.totalorder %s199, %s201
      %p208 = scmp.eq.s32.totalorder %s23, 1
      %p209 = por %p207, %p208
      %p210 = scmp.ne.s32.totalorder %s201, %s202
      %p211 = scmp.eq.s32.totalorder %s23, 0
      %p212 = por %p210, %p211
      %p213 = scmp.ne.s32.totalorder %s201, %s202
      %p214 = scmp.eq.s32.totalorder %s24, 1
      %p215 = por %p213, %p214
      %p217 = scmp.ne.s32.totalorder %s202, %s216
      %p218 = scmp.eq.s32.totalorder %s24, 0
      %p219 = por %p217, %p218
      %s220 = ssub.s32 %s18, %s25
      %p221 = scmp.eq.s32.totalorder %s220, 0
      %s223 = sadd.s32 %s222, 1
      %s224 = scalar_select %p221, %s222, %s223
      %p227 = pneg %p221
      %p228 = scmp.eq.s32.totalorder %s18, 1
      %p229 = por %p227, %p228
      %p230 = scmp.ne.s32.totalorder %s222, %s225
      %p231 = scmp.eq.s32.totalorder %s18, 0
      %p232 = por %p230, %p231
      %p233 = scmp.ne.s32.totalorder %s222, %s225
      %p234 = scmp.eq.s32.totalorder %s23, 1
      %p235 = por %p233, %p234
      %p236 = scmp.ne.s32.totalorder %s225, %s226
      %p237 = scmp.eq.s32.totalorder %s23, 0
      %p238 = por %p236, %p237
      %p239 = scmp.ne.s32.totalorder %s225, %s226
      %p240 = scmp.eq.s32.totalorder %s24, 1
      %p241 = por %p239, %p240
      %p243 = scmp.ne.s32.totalorder %s226, %s242
      %p244 = scmp.eq.s32.totalorder %s24, 0
      %p245 = por %p243, %p244
      %p246 = scmp.le.s32.totalorder 1, %s18
      %p247 = scmp.lt.s32.totalorder %s18, 3
      %p248 = pnand %p246, %p247
      %p249 = pneg %p248
      // Predicated region
      $region9: #{cnn_forward.5} parent=5 // pred_check
        _
      $region10: #{cnn_forward.5} parent=5 // pred_check_branch
        %251 = sbr.rel (%p248) target = $region12
      $region11: #{cnn_forward.5} parent=5 // pred_region
        %s252 = ssub.s32 %s18, 1
        // Predicated region
        $region13: #{cnn_forward.5} parent=11 // pred_check
          %p253 = pneg %p65
        $region14: #{cnn_forward.5} parent=11 // pred_check_branch
          %255 = sbr.rel (%p253) target = $region16
        $region15: #{cnn_forward.5} parent=11 // pred_region
          _
        $region16: #{cnn_forward.5} parent=11 // pred_fallthru
          _
        // Predicated region
        $region17: #{cnn_forward.5} parent=11 // pred_check
          %p256 = pneg %p86
        $region18: #{cnn_forward.5} parent=11 // pred_check_branch
          %258 = sbr.rel (%p256) target = $region20
        $region19: #{cnn_forward.5} parent=11 // pred_region
          _
        $region20: #{cnn_forward.5} parent=11 // pred_fallthru
          _
        // Predicated region
        $region21: #{cnn_forward.5} parent=11 // pred_check
          %p259 = pneg %p107
        $region22: #{cnn_forward.5} parent=11 // pred_check_branch
          %261 = sbr.rel (%p259) target = $region24
        $region23: #{cnn_forward.5} parent=11 // pred_region
          _
        $region24: #{cnn_forward.5} parent=11 // pred_fallthru
          _
        // Predicated region
        $region25: #{cnn_forward.5} parent=11 // pred_check
          %p262 = pneg %p128
        $region26: #{cnn_forward.5} parent=11 // pred_check_branch
          %264 = sbr.rel (%p262) target = $region28
        $region27: #{cnn_forward.5} parent=11 // pred_region
          _
        $region28: #{cnn_forward.5} parent=11 // pred_fallthru
          _
        // Predicated region
        $region29: #{cnn_forward.5} parent=11 // pred_check
          %p265 = pneg %p149
        $region30: #{cnn_forward.5} parent=11 // pred_check_branch
          %267 = sbr.rel (%p265) target = $region32
        $region31: #{cnn_forward.5} parent=11 // pred_region
          _
        $region32: #{cnn_forward.5} parent=11 // pred_fallthru
          _
        // Predicated region
        $region33: #{cnn_forward.5} parent=11 // pred_check
          %p268 = pneg %p170
        $region34: #{cnn_forward.5} parent=11 // pred_check_branch
          %270 = sbr.rel (%p268) target = $region36
        $region35: #{cnn_forward.5} parent=11 // pred_region
          _
        $region36: #{cnn_forward.5} parent=11 // pred_fallthru
          _
        // Predicated region
        $region37: #{cnn_forward.5} parent=11 // pred_check
          %p271 = pneg %p191
        $region38: #{cnn_forward.5} parent=11 // pred_check_branch
          %273 = sbr.rel (%p271) target = $region40
        $region39: #{cnn_forward.5} parent=11 // pred_region
          _
        $region40: #{cnn_forward.5} parent=11 // pred_fallthru
          _
        // Predicated region
        $region41: #{cnn_forward.5} parent=11 // pred_check
          %p274 = pneg %p212
        $region42: #{cnn_forward.5} parent=11 // pred_check_branch
          %276 = sbr.rel (%p274) target = $region44
        $region43: #{cnn_forward.5} parent=11 // pred_region
          _
        $region44: #{cnn_forward.5} parent=11 // pred_fallthru
          _
      $region12: #{cnn_forward.5} parent=5 // pred_fallthru
        _
      %p277 = scmp.lt.s32.totalorder %s18, 2
      // Predicated region
      $region45: #{cnn_forward.5} parent=5 // pred_check
        %p278 = pneg %p277
      $region46: #{cnn_forward.5} parent=5 // pred_check_branch
        %280 = sbr.rel (%p278) target = $region48
      $region47: #{cnn_forward.5} parent=5 // pred_region
        // Predicated region
        $region49: #{cnn_forward.5} parent=47 // pred_check
          %p281 = pneg %p38
        $region50: #{cnn_forward.5} parent=47 // pred_check_branch
          %283 = sbr.rel (%p281) target = $region52
        $region51: #{cnn_forward.5} parent=47 // pred_region
          %p284 = scmp.lt.s32.totalorder %s18, 1
          %s285 = scalar_select %p284, %s18, 1
          %s286 = smul.addr %s285, 24
          %s287 = smul.addr %s286, 4
          %s288 = scalar_lea.vmem %s0, %s287
        $region52: #{cnn_forward.5} parent=47 // pred_fallthru
          _
      $region48: #{cnn_forward.5} parent=5 // pred_fallthru
        _
      %p289 = scmp.le.s32.totalorder 1, %s18
      %p290 = scmp.lt.s32.totalorder %s18, 3
      %p291 = pnand %p289, %p290
      %p292 = pneg %p291
      // Predicated region
      $region53: #{cnn_forward.5} parent=5 // pred_check
        _
      $region54: #{cnn_forward.5} parent=5 // pred_check_branch
        %294 = sbr.rel (%p291) target = $region56
      $region55: #{cnn_forward.5} parent=5 // pred_region
        %s295 = ssub.s32 %s18, 1
        %p296 = scmp.lt.s32.totalorder %s23, 1
        %s297 = scalar_select %p296, %s23, 1
        %s298 = smul.addr %s297, 24
        %s299 = smul.addr %s298, 4
        %s300 = scalar_lea.vmem %s0, %s299
        %p301 = pneg %p44
        %p302 = pneg %p41
        %p303 = pneg %p65
        %p304 = pneg %p62
        %p305 = pneg %p86
        %p306 = pneg %p83
        %p307 = pneg %p107
        %p308 = pneg %p104
        %p309 = pneg %p128
        %p310 = pneg %p125
        %p311 = pneg %p149
        %p312 = pneg %p146
        %p313 = pneg %p170
        %p314 = pneg %p167
        %p315 = pneg %p191
        %p316 = pneg %p188
        %p317 = pneg %p212
        %p318 = pneg %p209
        %p319 = pneg %p238
        %p320 = pneg %p235
        %s321 = sand.u32 %s225, 1
        %s322 = scalar_lea.sflag [#allocation3], %s321
        %s323 = sand.u32 %s225, 1
        %s324 = scalar_lea.vmem [#allocation2], %s323
        %p325 = scmp.lt.s32.totalorder %s23, 1
        %s326 = scalar_select %p325, %s23, 1
        %s327 = smul.addr %s326, 24
        %s328 = smul.addr %s327, 4
        %s329 = scalar_lea.vmem %s0, %s328
        %v331 = vld [vmem:[%s1] sm:$0xf]
        %v332 = vld [vmem:[%s1 + $0x4] sm:$0xf]
        %v333 = vld [vmem:[%s1 + $0x8] sm:$0xf]
        %v334 = vld [vmem:[%s1 + $0xc] sm:$0xf]
        %v335 = vld [vmem:[%s1 + $0x10] sm:$0xf]
        %v336 = vld [vmem:[%s1 + $0x14] sm:$0xf]
        %v337 = vld [vmem:[%s1 + $0x18] sm:$0xf]
        %v338 = vld [vmem:[%s1 + $0x1c] sm:$0xf]
        %v339 = vld [vmem:[%s1 + $0x20] sm:$0xf]
        %v340 = vld [vmem:[%s1 + $0x24] sm:$0xf]
        %v341 = vld [vmem:[%s1 + $0x28] sm:$0xf]
        %v342 = vld [vmem:[%s1 + $0x2c] sm:$0xf]
        %v343 = vld [vmem:[%s1 + $0x30] sm:$0xf]
        %v344 = vld [vmem:[%s1 + $0x34] sm:$0xf]
        %v345 = vld [vmem:[%s1 + $0x38] sm:$0xf]
        %v346 = vld [vmem:[%s1 + $0x3c] sm:$0xf]
        %v347 = vld [vmem:[%s1 + $0x40] sm:$0xf]
        %v348 = vld [vmem:[%s1 + $0x44] sm:$0xf]
        %v349 = vld [vmem:[%s1 + $0x48] sm:$0xf]
        %v350 = vld [vmem:[%s1 + $0x4c] sm:$0xf]
        %v351 = vld [vmem:[%s1 + $0x50] sm:$0xf]
        %v352 = vld [vmem:[%s1 + $0x54] sm:$0xf]
        %v353 = vld [vmem:[%s1 + $0x58] sm:$0xf]
        %v354 = vld [vmem:[%s1 + $0x5c] sm:$0xf]
        %v355 = vld [vmem:[%s1 + $0x60] sm:$0xf]
        %v356 = vld [vmem:[%s1 + $0x64] sm:$0xf]
        %v357 = vld [vmem:[%s1 + $0x68] sm:$0xf]
        %v358 = vld [vmem:[%s1 + $0x6c] sm:$0xf]
        %v359 = vld [vmem:[%s1 + $0x70] sm:$0xf]
        %v360 = vld [vmem:[%s1 + $0x74] sm:$0xf]
        %v361 = vld [vmem:[%s1 + $0x78] sm:$0xf]
        %v362 = vld [vmem:[%s1 + $0x7c] sm:$0xf]
        %v363 = vld [vmem:[%s1 + $0x80] sm:$0xf]
        %v364 = vld [vmem:[%s1 + $0x84] sm:$0xf]
        %v365 = vld [vmem:[%s1 + $0x88] sm:$0xf]
        %v366 = vld [vmem:[%s1 + $0x8c] sm:$0xf]
        %v367 = vld [vmem:[%s1 + $0x90] sm:$0xf]
        %v368 = vld [vmem:[%s1 + $0x94] sm:$0xf]
        %v369 = vld [vmem:[%s1 + $0x98] sm:$0xf]
        %v370 = vld [vmem:[%s1 + $0x9c] sm:$0xf]
        %v371 = vld [vmem:[%s1 + $0xa0] sm:$0xf]
        %v372 = vld [vmem:[%s1 + $0xa4] sm:$0xf]
        %v373 = vld [vmem:[%s1 + $0xa8] sm:$0xf]
        %v374 = vld [vmem:[%s1 + $0xac] sm:$0xf]
        %v375 = vld [vmem:[%s1 + $0xb0] sm:$0xf]
        %v376 = vld [vmem:[%s1 + $0xb4] sm:$0xf]
        %v377 = vld [vmem:[%s1 + $0xb8] sm:$0xf]
        %v378 = vld [vmem:[%s1 + $0xbc] sm:$0xf]
        %v379 = vld [vmem:[%s2] sm:$0x1]
        %v380 = vld [vmem:[%s329] sm:$0xff]
        %v381 = vld [vmem:[%s329 + $0x8] sm:$0xf]
        %v382 = vld [vmem:[%s329 + $0xc] sm:$0xff]
        %v383 = vld [vmem:[%s329 + $0x14] sm:$0xf]
        %v384 = vld [vmem:[%s329 + $0x18] sm:$0xff]
        %v385 = vld [vmem:[%s329 + $0x20] sm:$0xf]
        %v386 = vld [vmem:[%s329 + $0x24] sm:$0x11]
        %v387 = vld [vmem:[%s329 + $0x2c] sm:$0x1]
        %v389 = vperm.slane %v379, 0
        %v399 = vunpack.c.l.b16 %v380
        %v400 = vunpack.c.h.b16 %v380
        %v401 = vunpack.c.l.b16 %v381
        %v402 = vunpack.c.l.b16 %v382
        %v403 = vunpack.c.h.b16 %v382
        %v404 = vunpack.c.l.b16 %v383
        %v405 = vunpack.c.l.b16 %v384
        %v406 = vunpack.c.h.b16 %v384
        %v407 = vunpack.c.l.b16 %v385
        %v408 = vunpack.c.l.b16 %v386
        %v409 = vunpack.c.h.b16 %v386
        %v410 = vunpack.c.l.b16 %v387
        %v411 = vpack.c.b16 %v402, %v399
        %v412 = vpack.c.b16 %v403, %v400
        %v413 = vpack.c.b16 %v404, %v401
        %v414 = vpack.c.b16 %v408, %v405
        %v415 = vpack.c.b16 %v409, %v406
        %v416 = vpack.c.b16 %v410, %v407
        %v471 = vunpack.c.l.b16 %v331
        %v472 = vunpack.c.l.b16 %v332
        %v473 = vunpack.c.l.b16 %v333
        %v474 = vunpack.c.l.b16 %v334
        %v475 = vunpack.c.l.b16 %v335
        %v476 = vunpack.c.l.b16 %v336
        %v477 = vunpack.c.l.b16 %v337
        %v478 = vunpack.c.l.b16 %v338
        %v479 = vunpack.c.l.b16 %v339
        %v480 = vunpack.c.l.b16 %v340
        %v481 = vunpack.c.l.b16 %v341
        %v482 = vunpack.c.l.b16 %v342
        %v483 = vunpack.c.l.b16 %v343
        %v484 = vunpack.c.l.b16 %v344
        %v485 = vunpack.c.l.b16 %v345
        %v486 = vunpack.c.l.b16 %v346
        %v487 = vunpack.c.l.b16 %v347
        %v488 = vunpack.c.l.b16 %v348
        %v489 = vunpack.c.l.b16 %v349
        %v490 = vunpack.c.l.b16 %v350
        %v491 = vunpack.c.l.b16 %v351
        %v492 = vunpack.c.l.b16 %v352
        %v493 = vunpack.c.l.b16 %v353
        %v494 = vunpack.c.l.b16 %v354
        %v495 = vunpack.c.l.b16 %v355
        %v496 = vunpack.c.l.b16 %v356
        %v497 = vunpack.c.l.b16 %v357
        %v498 = vunpack.c.l.b16 %v358
        %v499 = vunpack.c.l.b16 %v359
        %v500 = vunpack.c.l.b16 %v360
        %v501 = vunpack.c.l.b16 %v361
        %v502 = vunpack.c.l.b16 %v362
        %v503 = vunpack.c.l.b16 %v363
        %v504 = vunpack.c.l.b16 %v364
        %v505 = vunpack.c.l.b16 %v365
        %v506 = vunpack.c.l.b16 %v366
        %v507 = vunpack.c.l.b16 %v367
        %v508 = vunpack.c.l.b16 %v368
        %v509 = vunpack.c.l.b16 %v369
        %v510 = vunpack.c.l.b16 %v370
        %v511 = vunpack.c.l.b16 %v371
        %v512 = vunpack.c.l.b16 %v372
        %v513 = vunpack.c.l.b16 %v373
        %v514 = vunpack.c.l.b16 %v374
        %v515 = vunpack.c.l.b16 %v375
        %v516 = vunpack.c.l.b16 %v376
        %v517 = vunpack.c.l.b16 %v377
        %v518 = vunpack.c.l.b16 %v378
        %v519 = vpack.c.b16 %v472, %v471
        %v520 = vpack.c.b16 %v474, %v473
        %v521 = vpack.c.b16 %v476, %v475
        %v522 = vpack.c.b16 %v478, %v477
        %v523 = vpack.c.b16 %v480, %v479
        %v524 = vpack.c.b16 %v482, %v481
        %v525 = vpack.c.b16 %v484, %v483
        %v526 = vpack.c.b16 %v486, %v485
        %v527 = vpack.c.b16 %v488, %v487
        %v528 = vpack.c.b16 %v490, %v489
        %v529 = vpack.c.b16 %v492, %v491
        %v530 = vpack.c.b16 %v494, %v493
        %v531 = vpack.c.b16 %v496, %v495
        %v532 = vpack.c.b16 %v498, %v497
        %v533 = vpack.c.b16 %v500, %v499
        %v534 = vpack.c.b16 %v502, %v501
        %v535 = vpack.c.b16 %v504, %v503
        %v536 = vpack.c.b16 %v506, %v505
        %v537 = vpack.c.b16 %v508, %v507
        %v538 = vpack.c.b16 %v510, %v509
        %v539 = vpack.c.b16 %v512, %v511
        %v540 = vpack.c.b16 %v514, %v513
        %v541 = vpack.c.b16 %v516, %v515
        %v542 = vpack.c.b16 %v518, %v517
        %567 = vmatpush.bf16.msra.mxu0 %v526
        %568 = vmatpush.bf16.msra.mxu0 %v525
        %569 = vmatpush.bf16.msra.mxu0 %v524
        %570 = vmatpush.bf16.msra.mxu0 %v523
        %571 = vmatpush.bf16.msra.mxu0 %v522
        %572 = vmatpush.bf16.msra.mxu0 %v521
        %573 = vmatpush.bf16.msra.mxu0 %v520
        %574 = vmatpush.bf16.msra.mxu0 %v519
        %575 = vmatmul.bf16.gmra.mxu0 %v411
        %v576 = vpop.f32.mrf.mxu0
        %v577 = vadd.f32 %v389, %v576
        %v578 = vpop.f32.mrf.mxu0
        %v579 = vadd.f32 %v389, %v578
        %580 = vmatmul.bf16.gmra.mxu0 %v414
        %v581 = vpop.f32.mrf.mxu0
        %v582 = vadd.f32 %v389, %v581
        %v583 = vpop.f32.mrf.mxu0
        %v584 = vadd.f32 %v389, %v583
        %585 = vdwg.mxu0
        %586 = vmatpush.bf16.msra.mxu0 %v534
        %587 = vmatpush.bf16.msra.mxu0 %v533
        %588 = vmatpush.bf16.msra.mxu0 %v532
        %589 = vmatpush.bf16.msra.mxu0 %v531
        %590 = vmatpush.bf16.msra.mxu0 %v530
        %591 = vmatpush.bf16.msra.mxu0 %v529
        %592 = vmatpush.bf16.msra.mxu0 %v528
        %593 = vmatpush.bf16.msra.mxu0 %v527
        %594 = vmatmul.bf16.gmra.mxu0 %v412
        %v595 = vpop.f32.mrf.mxu0
        %v596 = vadd.f32 %v577, %v595
        %v597 = vpop.f32.mrf.mxu0
        %v598 = vadd.f32 %v579, %v597
        %599 = vmatmul.bf16.gmra.mxu0 %v415
        %v600 = vpop.f32.mrf.mxu0
        %v601 = vadd.f32 %v582, %v600
        %v602 = vpop.f32.mrf.mxu0
        %v603 = vadd.f32 %v584, %v602
        %604 = vdwg.mxu0
        %605 = vmatpush.bf16.msra.mxu0 %v542
        %606 = vmatpush.bf16.msra.mxu0 %v541
        %607 = vmatpush.bf16.msra.mxu0 %v540
        %608 = vmatpush.bf16.msra.mxu0 %v539
        %609 = vmatpush.bf16.msra.mxu0 %v538
        %610 = vmatpush.bf16.msra.mxu0 %v537
        %611 = vmatpush.bf16.msra.mxu0 %v536
        %612 = vmatpush.bf16.msra.mxu0 %v535
        %613 = vmatmul.bf16.gmra.mxu0 %v413
        %v614 = vpop.f32.mrf.mxu0
        %v615 = vadd.f32 %v596, %v614
        %v616 = vpop.f32.mrf.mxu0
        %v617 = vadd.f32 %v598, %v616
        %618 = vmatmul.bf16.gmra.mxu0 %v416
        %v619 = vpop.f32.mrf.mxu0
        %v620 = vadd.f32 %v601, %v619
        %v621 = vpop.f32.mrf.mxu0
        %v622 = vadd.f32 %v603, %v621
        %623 = vdwg.mxu0
        %s624 = scalar_lea.vmem %s329, 48
        %v625 = vld [vmem:[%s624] sm:$0xff]
        %v626 = vld [vmem:[%s624 + $0x8] sm:$0xf]
        %v627 = vld [vmem:[%s624 + $0xc] sm:$0xff]
        %v628 = vld [vmem:[%s624 + $0x14] sm:$0xf]
        %v629 = vld [vmem:[%s624 + $0x18] sm:$0xff]
        %v630 = vld [vmem:[%s624 + $0x20] sm:$0xf]
        %v631 = vld [vmem:[%s624 + $0x24] sm:$0x11]
        %v632 = vld [vmem:[%s624 + $0x2c] sm:$0x1]
        %v641 = vunpack.c.l.b16 %v625
        %v642 = vunpack.c.h.b16 %v625
        %v643 = vunpack.c.l.b16 %v626
        %v644 = vunpack.c.l.b16 %v627
        %v645 = vunpack.c.h.b16 %v627
        %v646 = vunpack.c.l.b16 %v628
        %v647 = vunpack.c.l.b16 %v629
        %v648 = vunpack.c.h.b16 %v629
        %v649 = vunpack.c.l.b16 %v630
        %v650 = vunpack.c.l.b16 %v631
        %v651 = vunpack.c.h.b16 %v631
        %v652 = vunpack.c.l.b16 %v632
        %v653 = vpack.c.b16 %v644, %v641
        %v654 = vpack.c.b16 %v645, %v642
        %v655 = vpack.c.b16 %v646, %v643
        %v656 = vpack.c.b16 %v650, %v647
        %v657 = vpack.c.b16 %v651, %v648
        %v658 = vpack.c.b16 %v652, %v649
        %665 = vmatpush.bf16.msra.mxu0 %v526
        %666 = vmatpush.bf16.msra.mxu0 %v525
        %667 = vmatpush.bf16.msra.mxu0 %v524
        %668 = vmatpush.bf16.msra.mxu0 %v523
        %669 = vmatpush.bf16.msra.mxu0 %v522
        %670 = vmatpush.bf16.msra.mxu0 %v521
        %671 = vmatpush.bf16.msra.mxu0 %v520
        %672 = vmatpush.bf16.msra.mxu0 %v519
        %673 = vmatmul.bf16.gmra.mxu0 %v653
        %v674 = vpop.f32.mrf.mxu0
        %v675 = vadd.f32 %v389, %v674
        %v676 = vpop.f32.mrf.mxu0
        %v677 = vadd.f32 %v389, %v676
        %678 = vmatmul.bf16.gmra.mxu0 %v656
        %v679 = vpop.f32.mrf.mxu0
        %v680 = vadd.f32 %v389, %v679
        %v681 = vpop.f32.mrf.mxu0
        %v682 = vadd.f32 %v389, %v681
        %683 = vdwg.mxu0
        %684 = vmatpush.bf16.msra.mxu0 %v534
        %685 = vmatpush.bf16.msra.mxu0 %v533
        %686 = vmatpush.bf16.msra.mxu0 %v532
        %687 = vmatpush.bf16.msra.mxu0 %v531
        %688 = vmatpush.bf16.msra.mxu0 %v530
        %689 = vmatpush.bf16.msra.mxu0 %v529
        %690 = vmatpush.bf16.msra.mxu0 %v528
        %691 = vmatpush.bf16.msra.mxu0 %v527
        %692 = vmatmul.bf16.gmra.mxu0 %v654
        %v693 = vpop.f32.mrf.mxu0
        %v694 = vadd.f32 %v675, %v693
        %v695 = vpop.f32.mrf.mxu0
        %v696 = vadd.f32 %v677, %v695
        %697 = vmatmul.bf16.gmra.mxu0 %v657
        %v698 = vpop.f32.mrf.mxu0
        %v699 = vadd.f32 %v680, %v698
        %v700 = vpop.f32.mrf.mxu0
        %v701 = vadd.f32 %v682, %v700
        %702 = vdwg.mxu0
        %703 = vmatpush.bf16.msra.mxu0 %v542
        %704 = vmatpush.bf16.msra.mxu0 %v541
        %705 = vmatpush.bf16.msra.mxu0 %v540
        %706 = vmatpush.bf16.msra.mxu0 %v539
        %707 = vmatpush.bf16.msra.mxu0 %v538
        %708 = vmatpush.bf16.msra.mxu0 %v537
        %709 = vmatpush.bf16.msra.mxu0 %v536
        %710 = vmatpush.bf16.msra.mxu0 %v535
        %711 = vmatmul.bf16.gmra.mxu0 %v655
        %v712 = vpop.f32.mrf.mxu0
        %v713 = vadd.f32 %v694, %v712
        %v714 = vpop.f32.mrf.mxu0
        %v715 = vadd.f32 %v696, %v714
        %716 = vmatmul.bf16.gmra.mxu0 %v658
        %v717 = vpop.f32.mrf.mxu0
        %v718 = vadd.f32 %v699, %v717
        %v719 = vpop.f32.mrf.mxu0
        %v720 = vadd.f32 %v701, %v719
        %721 = vdwg.mxu0
        %v722 = vmax.f32 %v615, %v713
        %v723 = vmax.f32 %v617, %v715
        %v724 = vmax.f32 %v620, %v718
        %v725 = vmax.f32 %v622, %v720
        %v726 = vmax.f32 %v722, 0.0
        %v727 = vmax.f32 %v723, 0.0
        %v728 = vmax.f32 %v724, 0.0
        %v729 = vmax.f32 %v725, 0.0
        %734 = vrot.lane.b32.xlu0 %v726, 112
        %v735 = vpop.permute.xlu0 %734
        %736 = vrot.lane.b32.xlu0 %v727, 112
        %v737 = vpop.permute.xlu0 %736
        %738 = vrot.lane.b32.xlu0 %v728, 112
        %v739 = vpop.permute.xlu0 %738
        %740 = vrot.lane.b32.xlu0 %v729, 112
        %v741 = vpop.permute.xlu0 %740
        %v746 = vmax.f32 %v726, %v735
        %v747 = vmax.f32 %v727, %v737
        %v748 = vmax.f32 %v728, %v739
        %v749 = vmax.f32 %v729, %v741
        %v750 = vpack.c.bf16 %v746, %v746
        %v751 = vpack.c.bf16 %v747, %v747
        %v752 = vpack.c.bf16 %v748, %v748
        %v753 = vpack.c.bf16 %v749, %v749
        %v754 = vld [vmem:[%s4] sm:$0x1]
        %v755 = vld [vmem:[%s3] sm:$0xf]
        %v756 = vld [vmem:[%s3 + $0x4] sm:$0xf]
        %v759 = vunpack.c.l.b16 %v755
        %v760 = vunpack.c.l.b16 %v756
        %v761 = vpack.c.b16 %v760, %v759
        %vm763 = vcmask 130048
        %v765 = vsel %vm763, %v750, 0
        %767 = vmatpush.bf16.msra.mxu0 0
        %768 = vmatpush.bf16.msra.mxu0 0
        %769 = vmatpush.bf16.msra.mxu0 0
        %770 = vmatpush.bf16.msra.mxu0 0
        %771 = vmatpush.bf16.msra.mxu0 0
        %772 = vmatpush.bf16.msra.mxu0 0
        %773 = vmatpush.bf16.msra.mxu0 0
        %774 = vmatpush.bf16.msra.mxu0 %v761
        %775 = vmatmul.bf16.gmra.mxu0 %v765
        %v776 = vpop.f32.mrf.mxu0
        %v777 = vadd.f32 0.0, %v776
        %v778 = vpop.f32.mrf.mxu0
        %779 = vdwg.mxu0
        %v780 = vadd.f32 %v754, %v777
        %s781 = scalar_lea.vmem %s3, 8
        %v782 = vld [vmem:[%s781] sm:$0xf]
        %v783 = vld [vmem:[%s781 + $0x4] sm:$0xf]
        %v785 = vunpack.c.l.b16 %v750
        %v786 = vpack.c.b16 %v785, %v785
        %v788 = vshrl.u32 %v786, 16
        %v792 = vunpack.c.l.b16 %v782
        %v793 = vunpack.c.l.b16 %v783
        %v794 = vpack.c.b16 %v793, %v792
        %v797 = vsel %vm763, %v788, 0
        %799 = vmatpush.bf16.msra.mxu0 0
        %800 = vmatpush.bf16.msra.mxu0 0
        %801 = vmatpush.bf16.msra.mxu0 0
        %802 = vmatpush.bf16.msra.mxu0 0
        %803 = vmatpush.bf16.msra.mxu0 0
        %804 = vmatpush.bf16.msra.mxu0 0
        %805 = vmatpush.bf16.msra.mxu0 0
        %806 = vmatpush.bf16.msra.mxu0 %v794
        %807 = vmatmul.bf16.gmra.mxu0 %v797
        %v808 = vpop.f32.mrf.mxu0
        %v809 = vadd.f32 0.0, %v808
        %v810 = vpop.f32.mrf.mxu0
        %811 = vdwg.mxu0
        %v812 = vadd.f32 %v780, %v809
        %s813 = scalar_lea.vmem %s3, 16
        %v814 = vld [vmem:[%s813] sm:$0xf]
        %v815 = vld [vmem:[%s813 + $0x4] sm:$0xf]
        %v816 = vrot.slane %v786, 1
        %v819 = vunpack.c.l.b16 %v814
        %v820 = vunpack.c.l.b16 %v815
        %v821 = vpack.c.b16 %v820, %v819
        %v824 = vsel %vm763, %v816, 0
        %826 = vmatpush.bf16.msra.mxu0 0
        %827 = vmatpush.bf16.msra.mxu0 0
        %828 = vmatpush.bf16.msra.mxu0 0
        %829 = vmatpush.bf16.msra.mxu0 0
        %830 = vmatpush.bf16.msra.mxu0 0
        %831 = vmatpush.bf16.msra.mxu0 0
        %832 = vmatpush.bf16.msra.mxu0 0
        %833 = vmatpush.bf16.msra.mxu0 %v821
        %834 = vmatmul.bf16.gmra.mxu0 %v824
        %v835 = vpop.f32.mrf.mxu0
        %v836 = vadd.f32 0.0, %v835
        %v837 = vpop.f32.mrf.mxu0
        %838 = vdwg.mxu0
        %v839 = vadd.f32 %v812, %v836
        %s840 = scalar_lea.vmem %s3, 24
        %v841 = vld [vmem:[%s840] sm:$0xf]
        %v842 = vld [vmem:[%s840 + $0x4] sm:$0xf]
        %v843 = vrot.slane %v788, 1
        %v846 = vunpack.c.l.b16 %v841
        %v847 = vunpack.c.l.b16 %v842
        %v848 = vpack.c.b16 %v847, %v846
        %v851 = vsel %vm763, %v843, 0
        %853 = vmatpush.bf16.msra.mxu0 0
        %854 = vmatpush.bf16.msra.mxu0 0
        %855 = vmatpush.bf16.msra.mxu0 0
        %856 = vmatpush.bf16.msra.mxu0 0
        %857 = vmatpush.bf16.msra.mxu0 0
        %858 = vmatpush.bf16.msra.mxu0 0
        %859 = vmatpush.bf16.msra.mxu0 0
        %860 = vmatpush.bf16.msra.mxu0 %v848
        %861 = vmatmul.bf16.gmra.mxu0 %v851
        %v862 = vpop.f32.mrf.mxu0
        %v863 = vadd.f32 0.0, %v862
        %v864 = vpop.f32.mrf.mxu0
        %865 = vdwg.mxu0
        %v866 = vadd.f32 %v839, %v863
        %s867 = scalar_lea.vmem %s3, 32
        %v868 = vld [vmem:[%s867] sm:$0xf]
        %v869 = vld [vmem:[%s867 + $0x4] sm:$0xf]
        %v870 = vrot.slane %v786, 2
        %v873 = vunpack.c.l.b16 %v868
        %v874 = vunpack.c.l.b16 %v869
        %v875 = vpack.c.b16 %v874, %v873
        %v878 = vsel %vm763, %v870, 0
        %880 = vmatpush.bf16.msra.mxu0 0
        %881 = vmatpush.bf16.msra.mxu0 0
        %882 = vmatpush.bf16.msra.mxu0 0
        %883 = vmatpush.bf16.msra.mxu0 0
        %884 = vmatpush.bf16.msra.mxu0 0
        %885 = vmatpush.bf16.msra.mxu0 0
        %886 = vmatpush.bf16.msra.mxu0 0
        %887 = vmatpush.bf16.msra.mxu0 %v875
        %888 = vmatmul.bf16.gmra.mxu0 %v878
        %v889 = vpop.f32.mrf.mxu0
        %v890 = vadd.f32 0.0, %v889
        %v891 = vpop.f32.mrf.mxu0
        %892 = vdwg.mxu0
        %v893 = vadd.f32 %v866, %v890
        %s894 = scalar_lea.vmem %s3, 40
        %v895 = vld [vmem:[%s894] sm:$0xf]
        %v896 = vld [vmem:[%s894 + $0x4] sm:$0xf]
        %v897 = vrot.slane %v788, 2
        %v900 = vunpack.c.l.b16 %v895
        %v901 = vunpack.c.l.b16 %v896
        %v902 = vpack.c.b16 %v901, %v900
        %v905 = vsel %vm763, %v897, 0
        %907 = vmatpush.bf16.msra.mxu0 0
        %908 = vmatpush.bf16.msra.mxu0 0
        %909 = vmatpush.bf16.msra.mxu0 0
        %910 = vmatpush.bf16.msra.mxu0 0
        %911 = vmatpush.bf16.msra.mxu0 0
        %912 = vmatpush.bf16.msra.mxu0 0
        %913 = vmatpush.bf16.msra.mxu0 0
        %914 = vmatpush.bf16.msra.mxu0 %v902
        %915 = vmatmul.bf16.gmra.mxu0 %v905
        %v916 = vpop.f32.mrf.mxu0
        %v917 = vadd.f32 0.0, %v916
        %v918 = vpop.f32.mrf.mxu0
        %919 = vdwg.mxu0
        %v920 = vadd.f32 %v893, %v917
        %s921 = scalar_lea.vmem %s3, 48
        %v922 = vld [vmem:[%s921] sm:$0xf]
        %v923 = vld [vmem:[%s921 + $0x4] sm:$0xf]
        %v924 = vrot.slane %v786, 3
        %v927 = vunpack.c.l.b16 %v922
        %v928 = vunpack.c.l.b16 %v923
        %v929 = vpack.c.b16 %v928, %v927
        %v932 = vsel %vm763, %v924, 0
        %934 = vmatpush.bf16.msra.mxu0 0
        %935 = vmatpush.bf16.msra.mxu0 0
        %936 = vmatpush.bf16.msra.mxu0 0
        %937 = vmatpush.bf16.msra.mxu0 0
        %938 = vmatpush.bf16.msra.mxu0 0
        %939 = vmatpush.bf16.msra.mxu0 0
        %940 = vmatpush.bf16.msra.mxu0 0
        %941 = vmatpush.bf16.msra.mxu0 %v929
        %942 = vmatmul.bf16.gmra.mxu0 %v932
        %v943 = vpop.f32.mrf.mxu0
        %v944 = vadd.f32 0.0, %v943
        %v945 = vpop.f32.mrf.mxu0
        %946 = vdwg.mxu0
        %v947 = vadd.f32 %v920, %v944
        %s948 = scalar_lea.vmem %s3, 56
        %v949 = vld [vmem:[%s948] sm:$0xf]
        %v950 = vld [vmem:[%s948 + $0x4] sm:$0xf]
        %v951 = vrot.slane %v788, 3
        %v954 = vunpack.c.l.b16 %v949
        %v955 = vunpack.c.l.b16 %v950
        %v956 = vpack.c.b16 %v955, %v954
        %v959 = vsel %vm763, %v951, 0
        %961 = vmatpush.bf16.msra.mxu0 0
        %962 = vmatpush.bf16.msra.mxu0 0
        %963 = vmatpush.bf16.msra.mxu0 0
        %964 = vmatpush.bf16.msra.mxu0 0
        %965 = vmatpush.bf16.msra.mxu0 0
        %966 = vmatpush.bf16.msra.mxu0 0
        %967 = vmatpush.bf16.msra.mxu0 0
        %968 = vmatpush.bf16.msra.mxu0 %v956
        %969 = vmatmul.bf16.gmra.mxu0 %v959
        %v970 = vpop.f32.mrf.mxu0
        %v971 = vadd.f32 0.0, %v970
        %v972 = vpop.f32.mrf.mxu0
        %973 = vdwg.mxu0
        %v974 = vadd.f32 %v947, %v971
        %s975 = scalar_lea.vmem %s3, 64
        %v976 = vld [vmem:[%s975] sm:$0xf]
        %v977 = vld [vmem:[%s975 + $0x4] sm:$0xf]
        %v980 = vunpack.c.l.b16 %v976
        %v981 = vunpack.c.l.b16 %v977
        %v982 = vpack.c.b16 %v981, %v980
        %v985 = vsel %vm763, %v751, 0
        %987 = vmatpush.bf16.msra.mxu0 0
        %988 = vmatpush.bf16.msra.mxu0 0
        %989 = vmatpush.bf16.msra.mxu0 0
        %990 = vmatpush.bf16.msra.mxu0 0
        %991 = vmatpush.bf16.msra.mxu0 0
        %992 = vmatpush.bf16.msra.mxu0 0
        %993 = vmatpush.bf16.msra.mxu0 0
        %994 = vmatpush.bf16.msra.mxu0 %v982
        %995 = vmatmul.bf16.gmra.mxu0 %v985
        %v996 = vpop.f32.mrf.mxu0
        %v997 = vadd.f32 0.0, %v996
        %v998 = vpop.f32.mrf.mxu0
        %999 = vdwg.mxu0
        %v1000 = vadd.f32 %v974, %v997
        %s1001 = scalar_lea.vmem %s3, 72
        %v1002 = vld [vmem:[%s1001] sm:$0xf]
        %v1003 = vld [vmem:[%s1001 + $0x4] sm:$0xf]
        %v1005 = vunpack.c.l.b16 %v751
        %v1006 = vpack.c.b16 %v1005, %v1005
        %v1008 = vshrl.u32 %v1006, 16
        %v1012 = vunpack.c.l.b16 %v1002
        %v1013 = vunpack.c.l.b16 %v1003
        %v1014 = vpack.c.b16 %v1013, %v1012
        %v1017 = vsel %vm763, %v1008, 0
        %1019 = vmatpush.bf16.msra.mxu0 0
        %1020 = vmatpush.bf16.msra.mxu0 0
        %1021 = vmatpush.bf16.msra.mxu0 0
        %1022 = vmatpush.bf16.msra.mxu0 0
        %1023 = vmatpush.bf16.msra.mxu0 0
        %1024 = vmatpush.bf16.msra.mxu0 0
        %1025 = vmatpush.bf16.msra.mxu0 0
        %1026 = vmatpush.bf16.msra.mxu0 %v1014
        %1027 = vmatmul.bf16.gmra.mxu0 %v1017
        %v1028 = vpop.f32.mrf.mxu0
        %v1029 = vadd.f32 0.0, %v1028
        %v1030 = vpop.f32.mrf.mxu0
        %1031 = vdwg.mxu0
        %v1032 = vadd.f32 %v1000, %v1029
        %s1033 = scalar_lea.vmem %s3, 80
        %v1034 = vld [vmem:[%s1033] sm:$0xf]
        %v1035 = vld [vmem:[%s1033 + $0x4] sm:$0xf]
        %v1036 = vrot.slane %v1006, 1
        %v1039 = vunpack.c.l.b16 %v1034
        %v1040 = vunpack.c.l.b16 %v1035
        %v1041 = vpack.c.b16 %v1040, %v1039
        %v1044 = vsel %vm763, %v1036, 0
        %1046 = vmatpush.bf16.msra.mxu0 0
        %1047 = vmatpush.bf16.msra.mxu0 0
        %1048 = vmatpush.bf16.msra.mxu0 0
        %1049 = vmatpush.bf16.msra.mxu0 0
        %1050 = vmatpush.bf16.msra.mxu0 0
        %1051 = vmatpush.bf16.msra.mxu0 0
        %1052 = vmatpush.bf16.msra.mxu0 0
        %1053 = vmatpush.bf16.msra.mxu0 %v1041
        %1054 = vmatmul.bf16.gmra.mxu0 %v1044
        %v1055 = vpop.f32.mrf.mxu0
        %v1056 = vadd.f32 0.0, %v1055
        %v1057 = vpop.f32.mrf.mxu0
        %1058 = vdwg.mxu0
        %v1059 = vadd.f32 %v1032, %v1056
        %s1060 = scalar_lea.vmem %s3, 88
        %v1061 = vld [vmem:[%s1060] sm:$0xf]
        %v1062 = vld [vmem:[%s1060 + $0x4] sm:$0xf]
        %v1063 = vrot.slane %v1008, 1
        %v1066 = vunpack.c.l.b16 %v1061
        %v1067 = vunpack.c.l.b16 %v1062
        %v1068 = vpack.c.b16 %v1067, %v1066
        %v1071 = vsel %vm763, %v1063, 0
        %1073 = vmatpush.bf16.msra.mxu0 0
        %1074 = vmatpush.bf16.msra.mxu0 0
        %1075 = vmatpush.bf16.msra.mxu0 0
        %1076 = vmatpush.bf16.msra.mxu0 0
        %1077 = vmatpush.bf16.msra.mxu0 0
        %1078 = vmatpush.bf16.msra.mxu0 0
        %1079 = vmatpush.bf16.msra.mxu0 0
        %1080 = vmatpush.bf16.msra.mxu0 %v1068
        %1081 = vmatmul.bf16.gmra.mxu0 %v1071
        %v1082 = vpop.f32.mrf.mxu0
        %v1083 = vadd.f32 0.0, %v1082
        %v1084 = vpop.f32.mrf.mxu0
        %1085 = vdwg.mxu0
        %v1086 = vadd.f32 %v1059, %v1083
        %s1087 = scalar_lea.vmem %s3, 96
        %v1088 = vld [vmem:[%s1087] sm:$0xf]
        %v1089 = vld [vmem:[%s1087 + $0x4] sm:$0xf]
        %v1090 = vrot.slane %v1006, 2
        %v1093 = vunpack.c.l.b16 %v1088
        %v1094 = vunpack.c.l.b16 %v1089
        %v1095 = vpack.c.b16 %v1094, %v1093
        %v1098 = vsel %vm763, %v1090, 0
        %1100 = vmatpush.bf16.msra.mxu0 0
        %1101 = vmatpush.bf16.msra.mxu0 0
        %1102 = vmatpush.bf16.msra.mxu0 0
        %1103 = vmatpush.bf16.msra.mxu0 0
        %1104 = vmatpush.bf16.msra.mxu0 0
        %1105 = vmatpush.bf16.msra.mxu0 0
        %1106 = vmatpush.bf16.msra.mxu0 0
        %1107 = vmatpush.bf16.msra.mxu0 %v1095
        %1108 = vmatmul.bf16.gmra.mxu0 %v1098
        %v1109 = vpop.f32.mrf.mxu0
        %v1110 = vadd.f32 0.0, %v1109
        %v1111 = vpop.f32.mrf.mxu0
        %1112 = vdwg.mxu0
        %v1113 = vadd.f32 %v1086, %v1110
        %s1114 = scalar_lea.vmem %s3, 104
        %v1115 = vld [vmem:[%s1114] sm:$0xf]
        %v1116 = vld [vmem:[%s1114 + $0x4] sm:$0xf]
        %v1117 = vrot.slane %v1008, 2
        %v1120 = vunpack.c.l.b16 %v1115
        %v1121 = vunpack.c.l.b16 %v1116
        %v1122 = vpack.c.b16 %v1121, %v1120
        %v1125 = vsel %vm763, %v1117, 0
        %1127 = vmatpush.bf16.msra.mxu0 0
        %1128 = vmatpush.bf16.msra.mxu0 0
        %1129 = vmatpush.bf16.msra.mxu0 0
        %1130 = vmatpush.bf16.msra.mxu0 0
        %1131 = vmatpush.bf16.msra.mxu0 0
        %1132 = vmatpush.bf16.msra.mxu0 0
        %1133 = vmatpush.bf16.msra.mxu0 0
        %1134 = vmatpush.bf16.msra.mxu0 %v1122
        %1135 = vmatmul.bf16.gmra.mxu0 %v1125
        %v1136 = vpop.f32.mrf.mxu0
        %v1137 = vadd.f32 0.0, %v1136
        %v1138 = vpop.f32.mrf.mxu0
        %1139 = vdwg.mxu0
        %v1140 = vadd.f32 %v1113, %v1137
        %s1141 = scalar_lea.vmem %s3, 112
        %v1142 = vld [vmem:[%s1141] sm:$0xf]
        %v1143 = vld [vmem:[%s1141 + $0x4] sm:$0xf]
        %v1144 = vrot.slane %v1006, 3
        %v1147 = vunpack.c.l.b16 %v1142
        %v1148 = vunpack.c.l.b16 %v1143
        %v1149 = vpack.c.b16 %v1148, %v1147
        %v1152 = vsel %vm763, %v1144, 0
        %1154 = vmatpush.bf16.msra.mxu0 0
        %1155 = vmatpush.bf16.msra.mxu0 0
        %1156 = vmatpush.bf16.msra.mxu0 0
        %1157 = vmatpush.bf16.msra.mxu0 0
        %1158 = vmatpush.bf16.msra.mxu0 0
        %1159 = vmatpush.bf16.msra.mxu0 0
        %1160 = vmatpush.bf16.msra.mxu0 0
        %1161 = vmatpush.bf16.msra.mxu0 %v1149
        %1162 = vmatmul.bf16.gmra.mxu0 %v1152
        %v1163 = vpop.f32.mrf.mxu0
        %v1164 = vadd.f32 0.0, %v1163
        %v1165 = vpop.f32.mrf.mxu0
        %1166 = vdwg.mxu0
        %v1167 = vadd.f32 %v1140, %v1164
        %s1168 = scalar_lea.vmem %s3, 120
        %v1169 = vld [vmem:[%s1168] sm:$0xf]
        %v1170 = vld [vmem:[%s1168 + $0x4] sm:$0xf]
        %v1171 = vrot.slane %v1008, 3
        %v1174 = vunpack.c.l.b16 %v1169
        %v1175 = vunpack.c.l.b16 %v1170
        %v1176 = vpack.c.b16 %v1175, %v1174
        %v1179 = vsel %vm763, %v1171, 0
        %1181 = vmatpush.bf16.msra.mxu0 0
        %1182 = vmatpush.bf16.msra.mxu0 0
        %1183 = vmatpush.bf16.msra.mxu0 0
        %1184 = vmatpush.bf16.msra.mxu0 0
        %1185 = vmatpush.bf16.msra.mxu0 0
        %1186 = vmatpush.bf16.msra.mxu0 0
        %1187 = vmatpush.bf16.msra.mxu0 0
        %1188 = vmatpush.bf16.msra.mxu0 %v1176
        %1189 = vmatmul.bf16.gmra.mxu0 %v1179
        %v1190 = vpop.f32.mrf.mxu0
        %v1191 = vadd.f32 0.0, %v1190
        %v1192 = vpop.f32.mrf.mxu0
        %1193 = vdwg.mxu0
        %v1194 = vadd.f32 %v1167, %v1191
        %s1195 = scalar_lea.vmem %s3, 128
        %v1196 = vld [vmem:[%s1195] sm:$0xf]
        %v1197 = vld [vmem:[%s1195 + $0x4] sm:$0xf]
        %v1200 = vunpack.c.l.b16 %v1196
        %v1201 = vunpack.c.l.b16 %v1197
        %v1202 = vpack.c.b16 %v1201, %v1200
        %v1205 = vsel %vm763, %v752, 0
        %1207 = vmatpush.bf16.msra.mxu0 0
        %1208 = vmatpush.bf16.msra.mxu0 0
        %1209 = vmatpush.bf16.msra.mxu0 0
        %1210 = vmatpush.bf16.msra.mxu0 0
        %1211 = vmatpush.bf16.msra.mxu0 0
        %1212 = vmatpush.bf16.msra.mxu0 0
        %1213 = vmatpush.bf16.msra.mxu0 0
        %1214 = vmatpush.bf16.msra.mxu0 %v1202
        %1215 = vmatmul.bf16.gmra.mxu0 %v1205
        %v1216 = vpop.f32.mrf.mxu0
        %v1217 = vadd.f32 0.0, %v1216
        %v1218 = vpop.f32.mrf.mxu0
        %1219 = vdwg.mxu0
        %v1220 = vadd.f32 %v1194, %v1217
        %s1221 = scalar_lea.vmem %s3, 136
        %v1222 = vld [vmem:[%s1221] sm:$0xf]
        %v1223 = vld [vmem:[%s1221 + $0x4] sm:$0xf]
        %v1225 = vunpack.c.l.b16 %v752
        %v1226 = vpack.c.b16 %v1225, %v1225
        %v1228 = vshrl.u32 %v1226, 16
        %v1232 = vunpack.c.l.b16 %v1222
        %v1233 = vunpack.c.l.b16 %v1223
        %v1234 = vpack.c.b16 %v1233, %v1232
        %v1237 = vsel %vm763, %v1228, 0
        %1239 = vmatpush.bf16.msra.mxu0 0
        %1240 = vmatpush.bf16.msra.mxu0 0
        %1241 = vmatpush.bf16.msra.mxu0 0
        %1242 = vmatpush.bf16.msra.mxu0 0
        %1243 = vmatpush.bf16.msra.mxu0 0
        %1244 = vmatpush.bf16.msra.mxu0 0
        %1245 = vmatpush.bf16.msra.mxu0 0
        %1246 = vmatpush.bf16.msra.mxu0 %v1234
        %1247 = vmatmul.bf16.gmra.mxu0 %v1237
        %v1248 = vpop.f32.mrf.mxu0
        %v1249 = vadd.f32 0.0, %v1248
        %v1250 = vpop.f32.mrf.mxu0
        %1251 = vdwg.mxu0
        %v1252 = vadd.f32 %v1220, %v1249
        %s1253 = scalar_lea.vmem %s3, 144
        %v1254 = vld [vmem:[%s1253] sm:$0xf]
        %v1255 = vld [vmem:[%s1253 + $0x4] sm:$0xf]
        %v1256 = vrot.slane %v1226, 1
        %v1259 = vunpack.c.l.b16 %v1254
        %v1260 = vunpack.c.l.b16 %v1255
        %v1261 = vpack.c.b16 %v1260, %v1259
        %v1264 = vsel %vm763, %v1256, 0
        %1266 = vmatpush.bf16.msra.mxu0 0
        %1267 = vmatpush.bf16.msra.mxu0 0
        %1268 = vmatpush.bf16.msra.mxu0 0
        %1269 = vmatpush.bf16.msra.mxu0 0
        %1270 = vmatpush.bf16.msra.mxu0 0
        %1271 = vmatpush.bf16.msra.mxu0 0
        %1272 = vmatpush.bf16.msra.mxu0 0
        %1273 = vmatpush.bf16.msra.mxu0 %v1261
        %1274 = vmatmul.bf16.gmra.mxu0 %v1264
        %v1275 = vpop.f32.mrf.mxu0
        %v1276 = vadd.f32 0.0, %v1275
        %v1277 = vpop.f32.mrf.mxu0
        %1278 = vdwg.mxu0
        %v1279 = vadd.f32 %v1252, %v1276
        %s1280 = scalar_lea.vmem %s3, 152
        %v1281 = vld [vmem:[%s1280] sm:$0xf]
        %v1282 = vld [vmem:[%s1280 + $0x4] sm:$0xf]
        %v1283 = vrot.slane %v1228, 1
        %v1286 = vunpack.c.l.b16 %v1281
        %v1287 = vunpack.c.l.b16 %v1282
        %v1288 = vpack.c.b16 %v1287, %v1286
        %v1291 = vsel %vm763, %v1283, 0
        %1293 = vmatpush.bf16.msra.mxu0 0
        %1294 = vmatpush.bf16.msra.mxu0 0
        %1295 = vmatpush.bf16.msra.mxu0 0
        %1296 = vmatpush.bf16.msra.mxu0 0
        %1297 = vmatpush.bf16.msra.mxu0 0
        %1298 = vmatpush.bf16.msra.mxu0 0
        %1299 = vmatpush.bf16.msra.mxu0 0
        %1300 = vmatpush.bf16.msra.mxu0 %v1288
        %1301 = vmatmul.bf16.gmra.mxu0 %v1291
        %v1302 = vpop.f32.mrf.mxu0
        %v1303 = vadd.f32 0.0, %v1302
        %v1304 = vpop.f32.mrf.mxu0
        %1305 = vdwg.mxu0
        %v1306 = vadd.f32 %v1279, %v1303
        %s1307 = scalar_lea.vmem %s3, 160
        %v1308 = vld [vmem:[%s1307] sm:$0xf]
        %v1309 = vld [vmem:[%s1307 + $0x4] sm:$0xf]
        %v1310 = vrot.slane %v1226, 2
        %v1313 = vunpack.c.l.b16 %v1308
        %v1314 = vunpack.c.l.b16 %v1309
        %v1315 = vpack.c.b16 %v1314, %v1313
        %v1318 = vsel %vm763, %v1310, 0
        %1320 = vmatpush.bf16.msra.mxu0 0
        %1321 = vmatpush.bf16.msra.mxu0 0
        %1322 = vmatpush.bf16.msra.mxu0 0
        %1323 = vmatpush.bf16.msra.mxu0 0
        %1324 = vmatpush.bf16.msra.mxu0 0
        %1325 = vmatpush.bf16.msra.mxu0 0
        %1326 = vmatpush.bf16.msra.mxu0 0
        %1327 = vmatpush.bf16.msra.mxu0 %v1315
        %1328 = vmatmul.bf16.gmra.mxu0 %v1318
        %v1329 = vpop.f32.mrf.mxu0
        %v1330 = vadd.f32 0.0, %v1329
        %v1331 = vpop.f32.mrf.mxu0
        %1332 = vdwg.mxu0
        %v1333 = vadd.f32 %v1306, %v1330
        %s1334 = scalar_lea.vmem %s3, 168
        %v1335 = vld [vmem:[%s1334] sm:$0xf]
        %v1336 = vld [vmem:[%s1334 + $0x4] sm:$0xf]
        %v1337 = vrot.slane %v1228, 2
        %v1340 = vunpack.c.l.b16 %v1335
        %v1341 = vunpack.c.l.b16 %v1336
        %v1342 = vpack.c.b16 %v1341, %v1340
        %v1345 = vsel %vm763, %v1337, 0
        %1347 = vmatpush.bf16.msra.mxu0 0
        %1348 = vmatpush.bf16.msra.mxu0 0
        %1349 = vmatpush.bf16.msra.mxu0 0
        %1350 = vmatpush.bf16.msra.mxu0 0
        %1351 = vmatpush.bf16.msra.mxu0 0
        %1352 = vmatpush.bf16.msra.mxu0 0
        %1353 = vmatpush.bf16.msra.mxu0 0
        %1354 = vmatpush.bf16.msra.mxu0 %v1342
        %1355 = vmatmul.bf16.gmra.mxu0 %v1345
        %v1356 = vpop.f32.mrf.mxu0
        %v1357 = vadd.f32 0.0, %v1356
        %v1358 = vpop.f32.mrf.mxu0
        %1359 = vdwg.mxu0
        %v1360 = vadd.f32 %v1333, %v1357
        %s1361 = scalar_lea.vmem %s3, 176
        %v1362 = vld [vmem:[%s1361] sm:$0xf]
        %v1363 = vld [vmem:[%s1361 + $0x4] sm:$0xf]
        %v1364 = vrot.slane %v1226, 3
        %v1367 = vunpack.c.l.b16 %v1362
        %v1368 = vunpack.c.l.b16 %v1363
        %v1369 = vpack.c.b16 %v1368, %v1367
        %v1372 = vsel %vm763, %v1364, 0
        %1374 = vmatpush.bf16.msra.mxu0 0
        %1375 = vmatpush.bf16.msra.mxu0 0
        %1376 = vmatpush.bf16.msra.mxu0 0
        %1377 = vmatpush.bf16.msra.mxu0 0
        %1378 = vmatpush.bf16.msra.mxu0 0
        %1379 = vmatpush.bf16.msra.mxu0 0
        %1380 = vmatpush.bf16.msra.mxu0 0
        %1381 = vmatpush.bf16.msra.mxu0 %v1369
        %1382 = vmatmul.bf16.gmra.mxu0 %v1372
        %v1383 = vpop.f32.mrf.mxu0
        %v1384 = vadd.f32 0.0, %v1383
        %v1385 = vpop.f32.mrf.mxu0
        %1386 = vdwg.mxu0
        %v1387 = vadd.f32 %v1360, %v1384
        %s1388 = scalar_lea.vmem %s3, 184
        %v1389 = vld [vmem:[%s1388] sm:$0xf]
        %v1390 = vld [vmem:[%s1388 + $0x4] sm:$0xf]
        %v1391 = vrot.slane %v1228, 3
        %v1394 = vunpack.c.l.b16 %v1389
        %v1395 = vunpack.c.l.b16 %v1390
        %v1396 = vpack.c.b16 %v1395, %v1394
        %v1399 = vsel %vm763, %v1391, 0
        %1401 = vmatpush.bf16.msra.mxu0 0
        %1402 = vmatpush.bf16.msra.mxu0 0
        %1403 = vmatpush.bf16.msra.mxu0 0
        %1404 = vmatpush.bf16.msra.mxu0 0
        %1405 = vmatpush.bf16.msra.mxu0 0
        %1406 = vmatpush.bf16.msra.mxu0 0
        %1407 = vmatpush.bf16.msra.mxu0 0
        %1408 = vmatpush.bf16.msra.mxu0 %v1396
        %1409 = vmatmul.bf16.gmra.mxu0 %v1399
        %v1410 = vpop.f32.mrf.mxu0
        %v1411 = vadd.f32 0.0, %v1410
        %v1412 = vpop.f32.mrf.mxu0
        %1413 = vdwg.mxu0
        %v1414 = vadd.f32 %v1387, %v1411
        %s1415 = scalar_lea.vmem %s3, 192
        %v1416 = vld [vmem:[%s1415] sm:$0xf]
        %v1417 = vld [vmem:[%s1415 + $0x4] sm:$0xf]
        %v1420 = vunpack.c.l.b16 %v1416
        %v1421 = vunpack.c.l.b16 %v1417
        %v1422 = vpack.c.b16 %v1421, %v1420
        %v1425 = vsel %vm763, %v753, 0
        %1427 = vmatpush.bf16.msra.mxu0 0
        %1428 = vmatpush.bf16.msra.mxu0 0
        %1429 = vmatpush.bf16.msra.mxu0 0
        %1430 = vmatpush.bf16.msra.mxu0 0
        %1431 = vmatpush.bf16.msra.mxu0 0
        %1432 = vmatpush.bf16.msra.mxu0 0
        %1433 = vmatpush.bf16.msra.mxu0 0
        %1434 = vmatpush.bf16.msra.mxu0 %v1422
        %1435 = vmatmul.bf16.gmra.mxu0 %v1425
        %v1436 = vpop.f32.mrf.mxu0
        %v1437 = vadd.f32 0.0, %v1436
        %v1438 = vpop.f32.mrf.mxu0
        %1439 = vdwg.mxu0
        %v1440 = vadd.f32 %v1414, %v1437
        %v1441 = vmax.f32 %v1440, 0.0
        %v1442 = vpack.c.bf16 %v1441, %v1441
        %v1443 = vld [vmem:[%s5] sm:$0xf]
        %v1444 = vld [vmem:[%s5 + $0x4] sm:$0xf]
        %v1445 = vld [vmem:[%s5 + $0x8] sm:$0xf]
        %v1446 = vld [vmem:[%s5 + $0xc] sm:$0xf]
        %v1447 = vld [vmem:[%s5 + $0x10] sm:$0xf]
        %v1448 = vld [vmem:[%s5 + $0x14] sm:$0xf]
        %v1449 = vld [vmem:[%s5 + $0x18] sm:$0xf]
        %v1450 = vld [vmem:[%s5 + $0x1c] sm:$0xf]
        %v1451 = vld [vmem:[%s6] sm:$0x1]
        %v1460 = vunpack.c.l.b16 %v1443
        %v1461 = vunpack.c.l.b16 %v1444
        %v1462 = vunpack.c.l.b16 %v1445
        %v1463 = vunpack.c.l.b16 %v1446
        %v1464 = vunpack.c.l.b16 %v1447
        %v1465 = vunpack.c.l.b16 %v1448
        %v1466 = vunpack.c.l.b16 %v1449
        %v1467 = vunpack.c.l.b16 %v1450
        %v1468 = vpack.c.b16 %v1461, %v1460
        %v1469 = vpack.c.b16 %v1463, %v1462
        %v1470 = vpack.c.b16 %v1465, %v1464
        %v1471 = vpack.c.b16 %v1467, %v1466
        %vm1476 = vcmask 523264
        %v1478 = vsel %vm1476, %v1442, 0
        %1480 = vmatpush.bf16.msra.mxu0 0
        %1481 = vmatpush.bf16.msra.mxu0 0
        %1482 = vmatpush.bf16.msra.mxu0 0
        %1483 = vmatpush.bf16.msra.mxu0 0
        %1484 = vmatpush.bf16.msra.mxu0 %v1471
        %1485 = vmatpush.bf16.msra.mxu0 %v1470
        %1486 = vmatpush.bf16.msra.mxu0 %v1469
        %1487 = vmatpush.bf16.msra.mxu0 %v1468
        %1488 = vmatmul.bf16.gmra.mxu0 %v1478
        %v1489 = vpop.f32.mrf.mxu0
        %v1490 = vadd.f32 %v1451, %v1489
        %v1491 = vpop.f32.mrf.mxu0
        %1492 = vdwg.mxu0
        %v1493 = vmax.f32 %v1490, 0.0
        %v1494 = vpack.c.bf16 %v1493, %v1493
        %v1495 = vld [vmem:[%s7] sm:$0xf]
        %v1496 = vld [vmem:[%s7 + $0x4] sm:$0xf]
        %v1497 = vld [vmem:[%s7 + $0x8] sm:$0xf]
        %v1498 = vld [vmem:[%s7 + $0xc] sm:$0xf]
        %v1499 = vld [vmem:[%s8] sm:$0x1]
        %v1504 = vunpack.c.l.b16 %v1495
        %v1505 = vunpack.c.l.b16 %v1496
        %v1506 = vunpack.c.l.b16 %v1497
        %v1507 = vunpack.c.l.b16 %v1498
        %v1508 = vpack.c.b16 %v1505, %v1504
        %v1509 = vpack.c.b16 %v1507, %v1506
        %vm1512 = vcmask 261120
        %v1514 = vsel %vm1512, %v1494, 0
        %1516 = vmatpush.bf16.msra.mxu0 0
        %1517 = vmatpush.bf16.msra.mxu0 0
        %1518 = vmatpush.bf16.msra.mxu0 0
        %1519 = vmatpush.bf16.msra.mxu0 0
        %1520 = vmatpush.bf16.msra.mxu0 0
        %1521 = vmatpush.bf16.msra.mxu0 0
        %1522 = vmatpush.bf16.msra.mxu0 %v1509
        %1523 = vmatpush.bf16.msra.mxu0 %v1508
        %1524 = vmatmul.bf16.gmra.mxu0 %v1514
        %v1525 = vpop.f32.mrf.mxu0
        %v1526 = vadd.f32 %v1499, %v1525
        %v1527 = vpop.f32.mrf.mxu0
        %1528 = vdwg.mxu0
        %vm1529 = vcmask 73728
        %1530 = vst.msk [vmem:[%s324] sm:$0x1] %vm1529, %v1526
        %s1531 = sand.u32 %s225, 1
        %s1532 = scalar_lea.sflag [#allocation3], %s1531
        %s1533 = sand.u32 %s225, 1
        %s1534 = scalar_lea.vmem [#allocation2], %s1533
        // Predicated region
        $region57: #{cnn_forward.5} parent=55 // pred_check
          %p1535 = pneg %p235
        $region58: #{cnn_forward.5} parent=55 // pred_check_branch
          %1537 = sbr.rel (%p1535) target = $region60
        $region59: #{cnn_forward.5} parent=55 // pred_region
          %1539 = vsyncadd %s1532, 0
          %s1540 = scalar_lea.hbm %s9, %s23
          %s1542 = sshll.u32 %s1534, 4
          %s1543 = int_to_ptr.vmem [resolvable:$true] %s1542
          %s1544 = sshll.u32 %s1540, 4
          %s1545 = int_to_ptr.hbm [resolvable:$true] %s1544
          %1547 = dma.vmem_to_hbm [thread:$0]  %s1543, 16, %s1545, %s1532
        $region60: #{cnn_forward.5} parent=55 // pred_fallthru
          _
      $region56: #{cnn_forward.5} parent=5 // pred_fallthru
        _
      %p1548 = scmp.le.s32.totalorder 2, %s18
      // Predicated region
      $region61: #{cnn_forward.5} parent=5 // pred_check
        %p1549 = pneg %p1548
      $region62: #{cnn_forward.5} parent=5 // pred_check_branch
        %1551 = sbr.rel (%p1549) target = $region64
      $region63: #{cnn_forward.5} parent=5 // pred_region
        %s1552 = ssub.s32 %s18, 2
        // Predicated region
        $region65: #{cnn_forward.5} parent=63 // pred_check
          %p1553 = pneg %p241
        $region66: #{cnn_forward.5} parent=63 // pred_check_branch
          %1555 = sbr.rel (%p1553) target = $region68
        $region67: #{cnn_forward.5} parent=63 // pred_region
          %s1556 = sand.u32 %s226, 1
          %s1557 = scalar_lea.sflag [#allocation3], %s1556
          %s1558 = sand.u32 %s226, 1
          %s1559 = scalar_lea.vmem [#allocation2], %s1558
          %1561 = dma.done %s1557, 16
        $region68: #{cnn_forward.5} parent=63 // pred_fallthru
          _
      $region64: #{cnn_forward.5} parent=5 // pred_fallthru
        _
    $region6: #{cnn_forward.5} parent=1 // loop_footer
      %s22 = sadd.s32 1, %s18
    $region7: #{cnn_forward.5} parent=1 // loop_footer_branch
      %17 = sbr.rel target = $region3
    $region8: #{cnn_forward.5} parent=1 // loop_exit
      _
    %1562 = vsyncpa [#allocation3], 1
    %s1563 = scalar_lea.sflag [#allocation3], 1
    %1564 = vsyncpa %s1563, 1

</llo_original>
